<compile_context>
chip_gen: v7x
topology: tpu7x:2x2x1
jax: 0.10.0
libtpu: 0.0.40
codegen_flags: <defaults>
</compile_context>

<pallas_src>
import functools

import jax
import jax.numpy as jnp
from jax.experimental import pallas as pl
from jax.experimental.pallas import tpu as pltpu


def _round_up(x, m):
    return (x + m - 1) // m * m


@functools.lru_cache(maxsize=1)
def _device_profile():
    """Per-generation VMEM budget / tile cap / elementwise dtype."""
    kind = jax.devices()[0].device_kind.lower()
    if "v5" in kind:
        # v5e/v5p: 128 MiB VMEM; no bf16 VPU/EUP path -> keep activations in f32.
        return dict(vmem_limit_bytes=96 * 1024 * 1024, tile_cap=4096, bf16_act=False)
    if "v6" in kind:
        # v6e: 128 MiB VMEM; bf16 VPU/EUP available.
        return dict(vmem_limit_bytes=96 * 1024 * 1024, tile_cap=4096, bf16_act=True)
    if "v7" in kind or "7x" in kind:
        # v7x: 64 MiB VMEM per TC, 2 TCs -> smaller tiles, leave headroom.
        return dict(vmem_limit_bytes=48 * 1024 * 1024, tile_cap=2048, bf16_act=True)
    # Unknown generation: conservative defaults.
    return dict(vmem_limit_bytes=48 * 1024 * 1024, tile_cap=2048, bf16_act=False)


def _choose_tile_n(n, cap):
    """Row-tile size: multiple of 256, >= 2 grid steps when possible, <= cap."""
    if n <= 256:
        return 256
    half = _round_up((n + 1) // 2, 256)
    return min(cap, half)


def pack_attn_gated_params(wa, ba, wb, bb, wc, bc, mxu_dtype=jnp.bfloat16):
    """One-time weight repacking (hoisted off the per-call critical path).

    wa/wb: (L, D); ba/bb: (1, D) or (D,); wc: (D, C); bc: (1, C) or (C,).
    D is zero-padded to a multiple of 128 so the in-kernel h[:, :D]/h[:, D:]
    slices stay lane-aligned (padded cols contribute exactly 0 to the output).
    L should ideally be a multiple of 128 for best layout (not required).
    """
    L, D = wa.shape
    C = wc.shape[1]
    d_pad = _round_up(D, 128)
    c_pad = _round_up(C, 8)

    wab = jnp.zeros((L, 2 * d_pad), mxu_dtype)
    wab = wab.at[:, :D].set(wa.astype(mxu_dtype))
    wab = wab.at[:, d_pad:d_pad + D].set(wb.astype(mxu_dtype))

    bab = jnp.zeros((1, 2 * d_pad), jnp.float32)
    bab = bab.at[:, :D].set(ba.reshape(1, -1).astype(jnp.float32))
    bab = bab.at[:, d_pad:d_pad + D].set(bb.reshape(1, -1).astype(jnp.float32))

    wc_t = jnp.zeros((c_pad, d_pad), mxu_dtype).at[:C, :D].set(wc.T.astype(mxu_dtype))
    bc_t = jnp.zeros((c_pad, 1), jnp.float32).at[:C].set(
        bc.reshape(-1, 1).astype(jnp.float32))

    return dict(wab=wab, bab=bab, wc_t=wc_t, bc_t=bc_t, n_classes=C)


def gated_attn_kernel(x_ref, wab_ref, bab_ref, wc_ref, bc_ref, at_ref, *,
                      d_pad, n_rows, act_dtype):
    """One (tile_n, L) row tile of the gated-attention forward pass."""
    # In-kernel cast to the MXU dtype (x stays in native dtype in HBM).
    x = x_ref[...].astype(wab_ref.dtype)                        # (tn, L) bf16

    # Fused first layer: single MXU pass for [Wa | Wb] -> (tn, 2*d_pad), f32 acc.
    h = jnp.dot(x, wab_ref[...], preferred_element_type=jnp.float32)
    h = (h + bab_ref[...]).astype(act_dtype)                    # bias in f32, then act dtype

    # Activations & gating (f32 on v5e; bf16 on v6e/v7x).
    a = jnp.tanh(h[:, :d_pad])
    b = jax.nn.sigmoid(h[:, d_pad:])
    gated = (a * b).astype(wc_ref.dtype)                        # bf16 MXU operand

    # Final projection, transposed & lane-dense:
    #   (c_pad, D) . (tn, D)^T -> (c_pad, tn)
    A_t = jax.lax.dot_general(
        wc_ref[...], gated,
        dimension_numbers=(((1,), (1,)), ((), ())),
        preferred_element_type=jnp.float32)
    A_t = A_t + bc_ref[...]

    # Tail masking: rows >= n_rows in the last tile were read OOB (garbage).
    # Their output columns are discarded by Pallas anyway; zero them so no
    # garbage/NaN is ever materialized in the output buffer.
    tile_n = at_ref.shape[1]
    col = jax.lax.broadcasted_iota(jnp.int32, (1, tile_n), 1) + pl.program_id(0) * tile_n
    A_t = jnp.where(col < n_rows, A_t, 0.0)

    at_ref[...] = A_t.astype(at_ref.dtype)


@functools.partial(
    jax.jit,
    static_argnames=("tile_n", "n_classes", "vmem_limit_bytes", "bf16_act",
                     "single_buffer_weights"))
def _attn_gated_call(x, wab, bab, wc_t, bc_t, *, tile_n, n_classes,
                     vmem_limit_bytes, bf16_act, single_buffer_weights):
    N, L = x.shape
    two_d = wab.shape[1]
    d_pad = two_d // 2
    c_pad = wc_t.shape[0]
    act_dtype = jnp.bfloat16 if bf16_act else jnp.float32

    grid = (pl.cdiv(N, tile_n),)

    cost = pl.CostEstimate(
        flops=2 * N * L * two_d + 2 * N * d_pad * c_pad,
        transcendentals=2 * N * d_pad,
        bytes_accessed=(x.size * x.dtype.itemsize
                        + wab.size * wab.dtype.itemsize
                        + wc_t.size * wc_t.dtype.itemsize
                        + bab.size * 4 + bc_t.size * 4 + c_pad * N * 4),
    )

    kernel = functools.partial(
        gated_attn_kernel, d_pad=d_pad, n_rows=N, act_dtype=act_dtype)

    # Grid-invariant operands don't need double buffering.
    resident = dict(pipeline_mode=pl.Buffered(1)) if single_buffer_weights else {}

    A_t = pl.pallas_call(
        kernel,
        out_shape=jax.ShapeDtypeStruct((c_pad, N), jnp.float32),
        grid_spec=pltpu.PrefetchScalarGridSpec(
            num_scalar_prefetch=0,
            grid=grid,
            in_specs=[
                pl.BlockSpec((tile_n, L), lambda i: (i, 0)),                # x row tile
                pl.BlockSpec((L, two_d), lambda i: (0, 0), **resident),     # [Wa | Wb]
                pl.BlockSpec((1, two_d), lambda i: (0, 0), **resident),     # [ba | bb]
                pl.BlockSpec((c_pad, d_pad), lambda i: (0, 0), **resident), # Wc^T
                pl.BlockSpec((c_pad, 1), lambda i: (0, 0), **resident),     # bc
            ],
            out_specs=pl.BlockSpec((c_pad, tile_n), lambda i: (0, i)),
        ),
        compiler_params=pltpu.CompilerParams(
            dimension_semantics=("parallel",),
            vmem_limit_bytes=vmem_limit_bytes,
        ),
        cost_estimate=cost,
    )(x, wab, bab, wc_t, bc_t)

    # Layout plumbing back to module semantics: (C_pad, N) -> (N, C).
    A = A_t[:n_classes, :].T.astype(x.dtype)
    return A


_SINGLE_BUFFER_WEIGHTS_OK = None  # memoized probe for pipeline_mode support


def attn_net_gated_forward(x, packed, *, tile_n=None):
    """x: (N, L); packed: output of pack_attn_gated_params. Returns (A, x)."""
    global _SINGLE_BUFFER_WEIGHTS_OK
    prof = _device_profile()
    if tile_n is None:
        tile_n = _choose_tile_n(x.shape[0], prof["tile_cap"])

    kwargs = dict(tile_n=tile_n, n_classes=packed["n_classes"],
                  vmem_limit_bytes=prof["vmem_limit_bytes"],
                  bf16_act=prof["bf16_act"])
    args = (x, packed["wab"], packed["bab"], packed["wc_t"], packed["bc_t"])

    if _SINGLE_BUFFER_WEIGHTS_OK is None:
        try:
            A = _attn_gated_call(*args, single_buffer_weights=True, **kwargs)
            _SINGLE_BUFFER_WEIGHTS_OK = True
        except Exception:
            # Fallback for jax versions without pipeline_mode=pl.Buffered support.
            _SINGLE_BUFFER_WEIGHTS_OK = False
            A = _attn_gated_call(*args, single_buffer_weights=False, **kwargs)
    else:
        A = _attn_gated_call(*args, single_buffer_weights=_SINGLE_BUFFER_WEIGHTS_OK,
                             **kwargs)
    return A, x


def init_linear(key, fan_in, fan_out, dtype=jnp.float32):
    """PyTorch-style Linear init: U(-1/sqrt(fan_in), 1/sqrt(fan_in))."""
    kw, kb = jax.random.split(key)
    bound = 1.0 / (fan_in ** 0.5)
    w = jax.random.uniform(kw, (fan_in, fan_out), dtype, -bound, bound)
    b = jax.random.uniform(kb, (1, fan_out), dtype, -bound, bound)
    return w, b


def reference_forward(x, wa, ba, wb, bb, wc, bc):
    a = jnp.tanh(x @ wa + ba)
    b = jax.nn.sigmoid(x @ wb + bb)
    A = (a * b) @ wc + bc
    return A, x


def reference_forward_matched(x, wa, ba, wb, bb, wc, bc, bf16_act):
    """Reference replicating the kernel's bf16 MXU operands (and optional bf16 activations)."""
    bf = jnp.bfloat16
    act = bf if bf16_act else jnp.float32
    D = wa.shape[1]
    wab = jnp.concatenate([wa, wb], axis=1).astype(bf)
    bab = jnp.concatenate([ba.reshape(1, -1), bb.reshape(1, -1)], axis=1).astype(jnp.float32)
    h = jnp.dot(x.astype(bf), wab, preferred_element_type=jnp.float32) + bab
    h = h.astype(act)
    a = jnp.tanh(h[:, :D])
    b = jax.nn.sigmoid(h[:, D:])
    gated = (a * b).astype(bf)
    return jnp.dot(gated, wc.astype(bf), preferred_element_type=jnp.float32) \
        + bc.astype(jnp.float32)


if __name__ == "__main__":
    # Small shapes consistent with the module (L input feat, D hidden, n_classes).
    # N is deliberately not a multiple of the tile so the cdiv-grid tail path runs.
    N, L, D, n_classes = 300, 256, 128, 1

    key = jax.random.PRNGKey(0)
    kx, ka, kb, kc = jax.random.split(key, 4)

    x = jax.random.normal(kx, (N, L), jnp.float32)
    wa, ba = init_linear(ka, L, D)          # attention_a Linear(L, D)
    wb, bb = init_linear(kb, L, D)          # attention_b Linear(L, D)
    wc, bc = init_linear(kc, D, n_classes)  # attention_c Linear(D, n_classes)
    # TODO(synk): dropout=False path only; training-mode Dropout(0.25) not implemented.

    packed = pack_attn_gated_params(wa, ba, wb, bb, wc, bc)   # one-time repack

    A, x_out = attn_net_gated_forward(x, packed)
    jax.block_until_ready((A, x_out))

    prof = _device_profile()
    A_ref_f32, _ = reference_forward(x, wa, ba, wb, bb, wc, bc)
    A_ref_matched = reference_forward_matched(x, wa, ba, wb, bb, wc, bc, prof["bf16_act"])

    assert A.shape == (N, n_classes)
    assert x_out.shape == (N, L)
    assert jnp.array_equal(x_out, x)
    assert bool(jnp.all(jnp.isfinite(A)))
    # Tight check vs. a reference using the same reduced-precision operands.
    assert jnp.allclose(A, A_ref_matched, atol=3e-3, rtol=2e-2), \
        float(jnp.max(jnp.abs(A - A_ref_matched)))
    # Loose check vs. the pure-f32 reference (bf16 rounding of MXU operands only).
    assert jnp.allclose(A, A_ref_f32, atol=5e-2, rtol=5e-2), \
        float(jnp.max(jnp.abs(A - A_ref_f32)))

    print("KERNEL_OK")
</pallas_src>

<mosaic_0001>
module attributes {stable_mosaic.version = 11 : i64} {
  func.func @gated_attn_kernel(%arg0: i32, %arg1: memref<256x256xf32, #tpu.memory_space<vmem>>, %arg2: memref<256x256xbf16, #tpu.memory_space<vmem>>, %arg3: memref<1x256xf32, #tpu.memory_space<vmem>>, %arg4: memref<8x128xbf16, #tpu.memory_space<vmem>>, %arg5: memref<8x1xf32, #tpu.memory_space<vmem>>, %arg6: memref<8x256xf32, #tpu.memory_space<vmem>>) attributes {dimension_semantics = [#tpu.dimension_semantics<parallel>], iteration_bounds = array<i64: 2>, scalar_prefetch = 0 : i64, scratch_operands = 0 : i64, tpu.core_type = #tpu.core_type<tc>, window_params = [{transform_indices = @transform_0, window_bounds = array<i64: 256, 256>}, {pipeline_mode = #tpu.pipeline_mode<synchronous>, transform_indices = @transform_1, window_bounds = array<i64: 256, 256>}, {pipeline_mode = #tpu.pipeline_mode<synchronous>, transform_indices = @transform_2, window_bounds = array<i64: 1, 256>}, {pipeline_mode = #tpu.pipeline_mode<synchronous>, transform_indices = @transform_3, window_bounds = array<i64: 8, 128>}, {pipeline_mode = #tpu.pipeline_mode<synchronous>, transform_indices = @transform_4, window_bounds = array<i64: 8, 1>}, {transform_indices = @transform_5, window_bounds = array<i64: 8, 256>}]} {
    %c0 = arith.constant 0 : index
    %c0_0 = arith.constant 0 : index
    %0 = vector.load %arg1[%c0, %c0_0] : memref<256x256xf32, #tpu.memory_space<vmem>>, vector<256x256xf32>
    %1 = arith.truncf %0 : vector<256x256xf32> to vector<256x256xbf16>
    %c0_1 = arith.constant 0 : index
    %c0_2 = arith.constant 0 : index
    %2 = vector.load %arg2[%c0_1, %c0_2] : memref<256x256xbf16, #tpu.memory_space<vmem>>, vector<256x256xbf16>
    %cst = arith.constant dense<0.000000e+00> : vector<256x256xf32>
    %3 = tpu.matmul %1, %2, %cst {dimension_numbers = #tpu.dot_dimension_numbers<[1], [0], [0], [1], [0, 0, 1, 1], [], []>} : vector<256x256xbf16>, vector<256x256xbf16>, vector<256x256xf32> -> vector<256x256xf32>
    %c0_3 = arith.constant 0 : index
    %c0_4 = arith.constant 0 : index
    %4 = vector.load %arg3[%c0_3, %c0_4] : memref<1x256xf32, #tpu.memory_space<vmem>>, vector<1x256xf32>
    %5 = vector.broadcast %4 : vector<1x256xf32> to vector<256x256xf32>
    %6 = arith.addf %3, %5 : vector<256x256xf32>
    %7 = vector.extract_strided_slice %6 {offsets = [0, 0], sizes = [256, 128], strides = [1, 1]} : vector<256x256xf32> to vector<256x128xf32>
    %8 = math.tanh %7 : vector<256x128xf32>
    %9 = vector.extract_strided_slice %6 {offsets = [0, 128], sizes = [256, 128], strides = [1, 1]} : vector<256x256xf32> to vector<256x128xf32>
    %10 = arith.negf %9 : vector<256x128xf32>
    %11 = math.exp %10 : vector<256x128xf32>
    %cst_5 = arith.constant 1.000000e+00 : f32
    %12 = vector.broadcast %cst_5 : f32 to vector<256x128xf32>
    %13 = arith.addf %12, %11 : vector<256x128xf32>
    %14 = arith.divf %12, %13 : vector<256x128xf32>
    %15 = arith.mulf %8, %14 : vector<256x128xf32>
    %16 = arith.truncf %15 : vector<256x128xf32> to vector<256x128xbf16>
    %c0_6 = arith.constant 0 : index
    %c0_7 = arith.constant 0 : index
    %17 = vector.load %arg4[%c0_6, %c0_7] : memref<8x128xbf16, #tpu.memory_space<vmem>>, vector<8x128xbf16>
    %cst_8 = arith.constant dense<0.000000e+00> : vector<8x256xf32>
    %18 = tpu.matmul %17, %16, %cst_8 {dimension_numbers = #tpu.dot_dimension_numbers<[1], [1], [0], [0], [0, 0, 1, 0], [], []>} : vector<8x128xbf16>, vector<256x128xbf16>, vector<8x256xf32> -> vector<8x256xf32>
    %c0_9 = arith.constant 0 : index
    %c0_10 = arith.constant 0 : index
    %19 = vector.load %arg5[%c0_9, %c0_10] : memref<8x1xf32, #tpu.memory_space<vmem>>, vector<8x1xf32>
    %20 = vector.broadcast %19 : vector<8x1xf32> to vector<8x256xf32>
    %21 = arith.addf %18, %20 : vector<8x256xf32>
    %22 = tpu.iota {dimensions = array<i32: 1>} : vector<1x256xi32>
    %c256_i32 = arith.constant 256 : i32
    %23 = arith.muli %arg0, %c256_i32 : i32
    %24 = vector.broadcast %23 : i32 to vector<1x256xi32>
    %25 = arith.addi %22, %24 : vector<1x256xi32>
    %c300_i32 = arith.constant 300 : i32
    %26 = vector.broadcast %c300_i32 : i32 to vector<1x256xi32>
    %27 = arith.cmpi slt, %25, %26 : vector<1x256xi32>
    %cst_11 = arith.constant 0.000000e+00 : f32
    %28 = vector.shape_cast %27 : vector<1x256xi1> to vector<1x256xi1>
    %29 = vector.broadcast %28 : vector<1x256xi1> to vector<8x256xi1>
    %30 = vector.broadcast %cst_11 : f32 to vector<8x256xf32>
    %31 = arith.select %29, %21, %30 : vector<8x256xi1>, vector<8x256xf32>
    %c0_12 = arith.constant 0 : index
    %c0_13 = arith.constant 0 : index
    %32 = vector.load %arg6[%c0_12, %c0_13] : memref<8x256xf32, #tpu.memory_space<vmem>>, vector<8x256xf32>
    tpu.vector_store %arg6[%c0_12, %c0_13], %31 {strides = array<i32>} : memref<8x256xf32, #tpu.memory_space<vmem>>, vector<8x256xf32>,
    return
  }
  func.func @transform_0(%arg0: i32) -> (i32, i32) {
    %c0_i32 = arith.constant 0 : i32
    %c0_i32_0 = arith.constant 0 : i32
    return %arg0, %c0_i32 : i32, i32
  }
  func.func @transform_1(%arg0: i32) -> (i32, i32) {
    %c0_i32 = arith.constant 0 : i32
    %c0_i32_0 = arith.constant 0 : i32
    %c0_i32_1 = arith.constant 0 : i32
    return %c0_i32, %c0_i32_0 : i32, i32
  }
  func.func @transform_2(%arg0: i32) -> (i32, i32) {
    %c0_i32 = arith.constant 0 : i32
    %c0_i32_0 = arith.constant 0 : i32
    %c0_i32_1 = arith.constant 0 : i32
    return %c0_i32, %c0_i32_0 : i32, i32
  }
  func.func @transform_3(%arg0: i32) -> (i32, i32) {
    %c0_i32 = arith.constant 0 : i32
    %c0_i32_0 = arith.constant 0 : i32
    %c0_i32_1 = arith.constant 0 : i32
    return %c0_i32, %c0_i32_0 : i32, i32
  }
  func.func @transform_4(%arg0: i32) -> (i32, i32) {
    %c0_i32 = arith.constant 0 : i32
    %c0_i32_0 = arith.constant 0 : i32
    %c0_i32_1 = arith.constant 0 : i32
    return %c0_i32, %c0_i32_0 : i32, i32
  }
  func.func @transform_5(%arg0: i32) -> (i32, i32) {
    %c0_i32 = arith.constant 0 : i32
    %c0_i32_0 = arith.constant 0 : i32
    return %c0_i32, %arg0 : i32, i32
  }
}

module attributes {stable_mosaic.version = 11 : i64} {
  func.func @gated_attn_kernel(%arg0: i32, %arg1: memref<256x256xf32, #tpu.memory_space<vmem>>, %arg2: memref<256x256xbf16, #tpu.memory_space<vmem>>, %arg3: memref<1x256xf32, #tpu.memory_space<vmem>>, %arg4: memref<8x128xbf16, #tpu.memory_space<vmem>>, %arg5: memref<8x1xf32, #tpu.memory_space<vmem>>, %arg6: memref<8x256xf32, #tpu.memory_space<vmem>>) attributes {dimension_semantics = [#tpu.dimension_semantics<parallel>], iteration_bounds = array<i64: 2>, scalar_prefetch = 0 : i64, scratch_operands = 0 : i64, tpu.core_type = #tpu.core_type<tc>, window_params = [{transform_indices = @transform_0, window_bounds = array<i64: 256, 256>}, {pipeline_mode = #tpu.pipeline_mode<synchronous>, transform_indices = @transform_1, window_bounds = array<i64: 256, 256>}, {pipeline_mode = #tpu.pipeline_mode<synchronous>, transform_indices = @transform_2, window_bounds = array<i64: 1, 256>}, {pipeline_mode = #tpu.pipeline_mode<synchronous>, transform_indices = @transform_3, window_bounds = array<i64: 8, 128>}, {pipeline_mode = #tpu.pipeline_mode<synchronous>, transform_indices = @transform_4, window_bounds = array<i64: 8, 1>}, {transform_indices = @transform_5, window_bounds = array<i64: 8, 256>}]} {
    %c0 = arith.constant 0 : index
    %c0_0 = arith.constant 0 : index
    %0 = vector.load %arg1[%c0, %c0_0] : memref<256x256xf32, #tpu.memory_space<vmem>>, vector<256x256xf32>
    %1 = arith.truncf %0 : vector<256x256xf32> to vector<256x256xbf16>
    %c0_1 = arith.constant 0 : index
    %c0_2 = arith.constant 0 : index
    %2 = vector.load %arg2[%c0_1, %c0_2] : memref<256x256xbf16, #tpu.memory_space<vmem>>, vector<256x256xbf16>
    %cst = arith.constant dense<0.000000e+00> : vector<256x256xf32>
    %3 = tpu.matmul %1, %2, %cst {dimension_numbers = #tpu.dot_dimension_numbers<[1], [0], [0], [1], [0, 0, 1, 1], [], []>} : vector<256x256xbf16>, vector<256x256xbf16>, vector<256x256xf32> -> vector<256x256xf32>
    %c0_3 = arith.constant 0 : index
    %c0_4 = arith.constant 0 : index
    %4 = vector.load %arg3[%c0_3, %c0_4] : memref<1x256xf32, #tpu.memory_space<vmem>>, vector<1x256xf32>
    %5 = vector.broadcast %4 : vector<1x256xf32> to vector<256x256xf32>
    %6 = arith.addf %3, %5 : vector<256x256xf32>
    %7 = vector.extract_strided_slice %6 {offsets = [0, 0], sizes = [256, 128], strides = [1, 1]} : vector<256x256xf32> to vector<256x128xf32>
    %8 = math.tanh %7 : vector<256x128xf32>
    %9 = vector.extract_strided_slice %6 {offsets = [0, 128], sizes = [256, 128], strides = [1, 1]} : vector<256x256xf32> to vector<256x128xf32>
    %10 = arith.negf %9 : vector<256x128xf32>
    %11 = math.exp %10 : vector<256x128xf32>
    %cst_5 = arith.constant 1.000000e+00 : f32
    %12 = vector.broadcast %cst_5 : f32 to vector<256x128xf32>
    %13 = arith.addf %12, %11 : vector<256x128xf32>
    %14 = arith.divf %12, %13 : vector<256x128xf32>
    %15 = arith.mulf %8, %14 : vector<256x128xf32>
    %16 = arith.truncf %15 : vector<256x128xf32> to vector<256x128xbf16>
    %c0_6 = arith.constant 0 : index
    %c0_7 = arith.constant 0 : index
    %17 = vector.load %arg4[%c0_6, %c0_7] : memref<8x128xbf16, #tpu.memory_space<vmem>>, vector<8x128xbf16>
    %cst_8 = arith.constant dense<0.000000e+00> : vector<8x256xf32>
    %18 = tpu.matmul %17, %16, %cst_8 {dimension_numbers = #tpu.dot_dimension_numbers<[1], [1], [0], [0], [0, 0, 1, 0], [], []>} : vector<8x128xbf16>, vector<256x128xbf16>, vector<8x256xf32> -> vector<8x256xf32>
    %c0_9 = arith.constant 0 : index
    %c0_10 = arith.constant 0 : index
    %19 = vector.load %arg5[%c0_9, %c0_10] : memref<8x1xf32, #tpu.memory_space<vmem>>, vector<8x1xf32>
    %20 = vector.broadcast %19 : vector<8x1xf32> to vector<8x256xf32>
    %21 = arith.addf %18, %20 : vector<8x256xf32>
    %22 = tpu.iota {dimensions = array<i32: 1>} : vector<1x256xi32>
    %c256_i32 = arith.constant 256 : i32
    %23 = arith.muli %arg0, %c256_i32 : i32
    %24 = vector.broadcast %23 : i32 to vector<1x256xi32>
    %25 = arith.addi %22, %24 : vector<1x256xi32>
    %c300_i32 = arith.constant 300 : i32
    %26 = vector.broadcast %c300_i32 : i32 to vector<1x256xi32>
    %27 = arith.cmpi slt, %25, %26 : vector<1x256xi32>
    %cst_11 = arith.constant 0.000000e+00 : f32
    %28 = vector.shape_cast %27 : vector<1x256xi1> to vector<1x256xi1>
    %29 = vector.broadcast %28 : vector<1x256xi1> to vector<8x256xi1>
    %30 = vector.broadcast %cst_11 : f32 to vector<8x256xf32>
    %31 = arith.select %29, %21, %30 : vector<8x256xi1>, vector<8x256xf32>
    %c0_12 = arith.constant 0 : index
    %c0_13 = arith.constant 0 : index
    %32 = vector.load %arg6[%c0_12, %c0_13] : memref<8x256xf32, #tpu.memory_space<vmem>>, vector<8x256xf32>
    tpu.vector_store %arg6[%c0_12, %c0_13], %31 {strides = array<i32>} : memref<8x256xf32, #tpu.memory_space<vmem>>, vector<8x256xf32>,
    return
  }
  func.func @transform_0(%arg0: i32) -> (i32, i32) {
    %c0_i32 = arith.constant 0 : i32
    %c0_i32_0 = arith.constant 0 : i32
    return %arg0, %c0_i32 : i32, i32
  }
  func.func @transform_1(%arg0: i32) -> (i32, i32) {
    %c0_i32 = arith.constant 0 : i32
    %c0_i32_0 = arith.constant 0 : i32
    %c0_i32_1 = arith.constant 0 : i32
    return %c0_i32, %c0_i32_0 : i32, i32
  }
  func.func @transform_2(%arg0: i32) -> (i32, i32) {
    %c0_i32 = arith.constant 0 : i32
    %c0_i32_0 = arith.constant 0 : i32
    %c0_i32_1 = arith.constant 0 : i32
    return %c0_i32, %c0_i32_0 : i32, i32
  }
  func.func @transform_3(%arg0: i32) -> (i32, i32) {
    %c0_i32 = arith.constant 0 : i32
    %c0_i32_0 = arith.constant 0 : i32
    %c0_i32_1 = arith.constant 0 : i32
    return %c0_i32, %c0_i32_0 : i32, i32
  }
  func.func @transform_4(%arg0: i32) -> (i32, i32) {
    %c0_i32 = arith.constant 0 : i32
    %c0_i32_0 = arith.constant 0 : i32
    %c0_i32_1 = arith.constant 0 : i32
    return %c0_i32, %c0_i32_0 : i32, i32
  }
  func.func @transform_5(%arg0: i32) -> (i32, i32) {
    %c0_i32 = arith.constant 0 : i32
    %c0_i32_0 = arith.constant 0 : i32
    return %c0_i32, %arg0 : i32, i32
  }
}

</mosaic_0001>

<llo_original>
// kernel: _attn_gated_call.1
$region0: #{_attn_gated_call.1}
  #allocation0 [shape = 'u32[]', space=smem, size = 0x4, offset = 0x4, fixed_abs, tag = 'smem constant byte address 0x4 - core index']
  #allocation1 [shape = 'u32[144,128]{1,0:T(1,128)}', space=vmem, size = 0x12000, scoped, tag = 'internal scratch']
  %s0 = inlined_call_operand.hbm [shape: f32[300,256], index: 0, kind: input, shape index: {}]
  %s1 = inlined_call_operand.hbm [shape: bf16[256,256], index: 1, kind: input, shape index: {}]
  %s2 = inlined_call_operand.vmem [shape: f32[1,256], index: 2, kind: input, shape index: {}]
  %s3 = inlined_call_operand.vmem [shape: bf16[8,128], index: 3, kind: input, shape index: {}]
  %s4 = inlined_call_operand.vmem [shape: f32[8,1], index: 4, kind: input, shape index: {}]
  %s5 = inlined_call_operand.vmem [shape: f32[8,300], index: 5, kind: output, shape index: {}]
  %s6 = sld [smem:[#allocation0]]
  $region123: #{_attn_gated_call.1} parent=0
    _
  %s8 = ssub.s32 1, %s6
  %s9 = scalar_select 0, %s8, %s6
  $region1: #{_attn_gated_call.1} parent=0
    #allocation2 [shape = 'u8[524288]{0}', space=vmem, size = 0x80000, scoped, tag = 'input window, operand 0']
    #allocation3 [shape = 's32[2]{0}', space=sflag, size = 0x8, scoped, tag = 'scoped memory for _attn_gated_call.1']
    #allocation4 [shape = 'u8[131072]{0}', space=vmem, size = 0x20000, scoped, tag = 'input window, operand 1, single buffered']
    #allocation5 [shape = 's32[1]{0}', space=sflag, size = 0x4, scoped, tag = 'scoped memory for _attn_gated_call.1']
    #allocation6 [shape = 'u8[16384]{0}', space=vmem, size = 0x4000, scoped, tag = 'output window, operand 0']
    %10 = vsyncpa [#allocation3], 0
    %s11 = scalar_lea.sflag [#allocation3], 1
    %12 = vsyncpa %s11, 0
    %13 = vsyncpa [#allocation5], 0
    loop: start=0, step=1, limit=4
    $region2: #{_attn_gated_call.1} parent=1 // loop_pre_header
      _
    $region3: #{_attn_gated_call.1} parent=1 // loop_header
      %s15 = sphi 0, %s19
      %p16 = scmp.ge.s32.totalorder %s15, 4
      %s25 = sphi 0, %s27
      %s28 = sphi 0, %s25
      %s29 = sphi 0, %s28
      %s45 = sphi 0, %s29
      %s49 = sphi 0, %s49
      %s51 = sphi 0, %s49
      %s52 = sphi 0, %s51
      %s66 = sphi 0, %s52
      %s70 = sphi 0, %s70
      %s72 = sphi 0, %s70
      %s73 = sphi 0, %s72
      %s87 = sphi 0, %s73
      %s91 = sphi 0, %s91
      %s93 = sphi 0, %s91
      %s94 = sphi 0, %s93
      %s108 = sphi 0, %s94
      %s112 = sphi 0, %s112
      %s114 = sphi 0, %s112
      %s115 = sphi 0, %s114
      %s129 = sphi 0, %s115
      %s135 = sphi 0, %s137
      %s138 = sphi 0, %s135
      %s139 = sphi 0, %s138
      %s155 = sphi 0, %s139
    $region4: #{_attn_gated_call.1} parent=1 // loop_header_branch
      %18 = sbr.rel (%p16) target = $region8
    $region5: #{_attn_gated_call.1} parent=1 // loop_body
      %s20 = ssub.s32 %s15, 1
      %s21 = ssub.s32 %s15, 2
      %s22 = sadd.s32 %s15, 1
      %s23 = ssub.s32 %s15, %s22
      %p24 = scmp.eq.s32.totalorder %s23, 0
      %s26 = sadd.s32 %s25, 1
      %s27 = scalar_select %p24, %s25, %s26
      %p30 = pneg %p24
      %p31 = scmp.eq.s32.totalorder %s15, 1
      %p32 = por %p30, %p31
      %p33 = scmp.ne.s32.totalorder %s25, %s28
      %p34 = scmp.eq.s32.totalorder %s15, 0
      %p35 = por %p33, %p34
      %p36 = scmp.ne.s32.totalorder %s25, %s28
      %p37 = scmp.eq.s32.totalorder %s20, 1
      %p38 = por %p36, %p37
      %p39 = scmp.ne.s32.totalorder %s28, %s29
      %p40 = scmp.eq.s32.totalorder %s20, 0
      %p41 = por %p39, %p40
      %p42 = scmp.ne.s32.totalorder %s28, %s29
      %p43 = scmp.eq.s32.totalorder %s21, 1
      %p44 = por %p42, %p43
      %p46 = scmp.ne.s32.totalorder %s29, %s45
      %p47 = scmp.eq.s32.totalorder %s21, 0
      %p48 = por %p46, %p47
      %s50 = sadd.s32 %s49, 1
      %p53 = scmp.eq.s32.totalorder %s15, 1
      %p54 = scmp.ne.s32.totalorder %s49, %s51
      %p55 = scmp.eq.s32.totalorder %s15, 0
      %p56 = por %p54, %p55
      %p57 = scmp.ne.s32.totalorder %s49, %s51
      %p58 = scmp.eq.s32.totalorder %s20, 1
      %p59 = por %p57, %p58
      %p60 = scmp.ne.s32.totalorder %s51, %s52
      %p61 = scmp.eq.s32.totalorder %s20, 0
      %p62 = por %p60, %p61
      %p63 = scmp.ne.s32.totalorder %s51, %s52
      %p64 = scmp.eq.s32.totalorder %s21, 1
      %p65 = por %p63, %p64
      %p67 = scmp.ne.s32.totalorder %s52, %s66
      %p68 = scmp.eq.s32.totalorder %s21, 0
      %p69 = por %p67, %p68
      %s71 = sadd.s32 %s70, 1
      %p74 = scmp.eq.s32.totalorder %s15, 1
      %p75 = scmp.ne.s32.totalorder %s70, %s72
      %p76 = scmp.eq.s32.totalorder %s15, 0
      %p77 = por %p75, %p76
      %p78 = scmp.ne.s32.totalorder %s70, %s72
      %p79 = scmp.eq.s32.totalorder %s20, 1
      %p80 = por %p78, %p79
      %p81 = scmp.ne.s32.totalorder %s72, %s73
      %p82 = scmp.eq.s32.totalorder %s20, 0
      %p83 = por %p81, %p82
      %p84 = scmp.ne.s32.totalorder %s72, %s73
      %p85 = scmp.eq.s32.totalorder %s21, 1
      %p86 = por %p84, %p85
      %p88 = scmp.ne.s32.totalorder %s73, %s87
      %p89 = scmp.eq.s32.totalorder %s21, 0
      %p90 = por %p88, %p89
      %s92 = sadd.s32 %s91, 1
      %p95 = scmp.eq.s32.totalorder %s15, 1
      %p96 = scmp.ne.s32.totalorder %s91, %s93
      %p97 = scmp.eq.s32.totalorder %s15, 0
      %p98 = por %p96, %p97
      %p99 = scmp.ne.s32.totalorder %s91, %s93
      %p100 = scmp.eq.s32.totalorder %s20, 1
      %p101 = por %p99, %p100
      %p102 = scmp.ne.s32.totalorder %s93, %s94
      %p103 = scmp.eq.s32.totalorder %s20, 0
      %p104 = por %p102, %p103
      %p105 = scmp.ne.s32.totalorder %s93, %s94
      %p106 = scmp.eq.s32.totalorder %s21, 1
      %p107 = por %p105, %p106
      %p109 = scmp.ne.s32.totalorder %s94, %s108
      %p110 = scmp.eq.s32.totalorder %s21, 0
      %p111 = por %p109, %p110
      %s113 = sadd.s32 %s112, 1
      %p116 = scmp.eq.s32.totalorder %s15, 1
      %p117 = scmp.ne.s32.totalorder %s112, %s114
      %p118 = scmp.eq.s32.totalorder %s15, 0
      %p119 = por %p117, %p118
      %p120 = scmp.ne.s32.totalorder %s112, %s114
      %p121 = scmp.eq.s32.totalorder %s20, 1
      %p122 = por %p120, %p121
      %p123 = scmp.ne.s32.totalorder %s114, %s115
      %p124 = scmp.eq.s32.totalorder %s20, 0
      %p125 = por %p123, %p124
      %p126 = scmp.ne.s32.totalorder %s114, %s115
      %p127 = scmp.eq.s32.totalorder %s21, 1
      %p128 = por %p126, %p127
      %p130 = scmp.ne.s32.totalorder %s115, %s129
      %p131 = scmp.eq.s32.totalorder %s21, 0
      %p132 = por %p130, %p131
      %s133 = ssub.s32 %s15, %s22
      %p134 = scmp.eq.s32.totalorder %s133, 0
      %s136 = sadd.s32 %s135, 1
      %s137 = scalar_select %p134, %s135, %s136
      %p140 = pneg %p134
      %p141 = scmp.eq.s32.totalorder %s15, 1
      %p142 = por %p140, %p141
      %p143 = scmp.ne.s32.totalorder %s135, %s138
      %p144 = scmp.eq.s32.totalorder %s15, 0
      %p145 = por %p143, %p144
      %p146 = scmp.ne.s32.totalorder %s135, %s138
      %p147 = scmp.eq.s32.totalorder %s20, 1
      %p148 = por %p146, %p147
      %p149 = scmp.ne.s32.totalorder %s138, %s139
      %p150 = scmp.eq.s32.totalorder %s20, 0
      %p151 = por %p149, %p150
      %p152 = scmp.ne.s32.totalorder %s138, %s139
      %p153 = scmp.eq.s32.totalorder %s21, 1
      %p154 = por %p152, %p153
      %p156 = scmp.ne.s32.totalorder %s139, %s155
      %p157 = scmp.eq.s32.totalorder %s21, 0
      %p158 = por %p156, %p157
      %p159 = scmp.le.s32.totalorder 1, %s15
      %p160 = scmp.lt.s32.totalorder %s15, 3
      %p161 = pnand %p159, %p160
      %p162 = pneg %p161
      // Predicated region
      $region9: #{_attn_gated_call.1} parent=5 // pred_check
        _
      $region10: #{_attn_gated_call.1} parent=5 // pred_check_branch
        %164 = sbr.rel (%p161) target = $region12
      $region11: #{_attn_gated_call.1} parent=5 // pred_region
        %s165 = ssub.s32 %s15, 1
        // Predicated region
        $region13: #{_attn_gated_call.1} parent=11 // pred_check
          %p166 = pneg %p62
        $region14: #{_attn_gated_call.1} parent=11 // pred_check_branch
          %168 = sbr.rel (%p166) target = $region16
        $region15: #{_attn_gated_call.1} parent=11 // pred_region
          %s170 = ssub.s32 4096, 4096
          %171 = vsyncadd [#allocation5], %s170
          %s172 = sshll.u32 [#allocation4], 4
          %s173 = int_to_ptr.vmem [resolvable:$true] %s172
          %178 = dma.hbm_to_vmem [thread:$0]  %s1, 4096, %s173, [#allocation5], 128, 128, 8
        $region16: #{_attn_gated_call.1} parent=11 // pred_fallthru
          _
        // Predicated region
        $region17: #{_attn_gated_call.1} parent=11 // pred_check
          %p179 = pneg %p83
        $region18: #{_attn_gated_call.1} parent=11 // pred_check_branch
          %181 = sbr.rel (%p179) target = $region20
        $region19: #{_attn_gated_call.1} parent=11 // pred_region
          _
        $region20: #{_attn_gated_call.1} parent=11 // pred_fallthru
          _
        // Predicated region
        $region21: #{_attn_gated_call.1} parent=11 // pred_check
          %p182 = pneg %p104
        $region22: #{_attn_gated_call.1} parent=11 // pred_check_branch
          %184 = sbr.rel (%p182) target = $region24
        $region23: #{_attn_gated_call.1} parent=11 // pred_region
          _
        $region24: #{_attn_gated_call.1} parent=11 // pred_fallthru
          _
        // Predicated region
        $region25: #{_attn_gated_call.1} parent=11 // pred_check
          %p185 = pneg %p125
        $region26: #{_attn_gated_call.1} parent=11 // pred_check_branch
          %187 = sbr.rel (%p185) target = $region28
        $region27: #{_attn_gated_call.1} parent=11 // pred_region
          _
        $region28: #{_attn_gated_call.1} parent=11 // pred_fallthru
          _
      $region12: #{_attn_gated_call.1} parent=5 // pred_fallthru
        _
      %p188 = scmp.lt.s32.totalorder %s15, 2
      // Predicated region
      $region29: #{_attn_gated_call.1} parent=5 // pred_check
        %p189 = pneg %p188
      $region30: #{_attn_gated_call.1} parent=5 // pred_check_branch
        %191 = sbr.rel (%p189) target = $region32
      $region31: #{_attn_gated_call.1} parent=5 // pred_region
        // Predicated region
        $region33: #{_attn_gated_call.1} parent=31 // pred_check
          %p192 = pneg %p35
        $region34: #{_attn_gated_call.1} parent=31 // pred_check_branch
          %194 = sbr.rel (%p192) target = $region36
        $region35: #{_attn_gated_call.1} parent=31 // pred_region
          %s195 = sand.u32 %s25, 1
          %s196 = scalar_lea.sflag [#allocation3], %s195
          %s197 = sand.u32 %s25, 1
          %s198 = smul.addr %s197, 512
          %s199 = scalar_lea.vmem [#allocation2], %s198
          %s200 = smul.u32 32, %s15
          %s201 = ssub.s32 38, %s200
          %p202 = scmp.lt.s32.totalorder %s201, 32
          %s203 = scalar_select %p202, %s201, 32
          %s204 = smul.u32 128, %s203
          %s205 = smul.u32 %s204, 2
          %s207 = ssub.s32 8192, %s205
          %208 = vsyncadd %s196, %s207
          %p209 = scmp.ne.s32.totalorder 0, %s205
          %s210 = smul.addr %s200, 2
          %s211 = smul.addr %s210, 128
          %s212 = scalar_lea.hbm %s0, %s211
          %s213 = smul.u32 16, %s203
          %s214 = sshll.u32 %s199, 4
          %s215 = int_to_ptr.vmem [resolvable:$true] %s214
          %s216 = sshll.u32 %s213, 4
          %220 = dma.hbm_to_vmem [thread:$0]  (%p209), %s212, %s216, %s215, %s196, 256, 256, 16
        $region36: #{_attn_gated_call.1} parent=31 // pred_fallthru
          _
      $region32: #{_attn_gated_call.1} parent=5 // pred_fallthru
        _
      %p221 = scmp.le.s32.totalorder 1, %s15
      %p222 = scmp.lt.s32.totalorder %s15, 3
      %p223 = pnand %p221, %p222
      %p224 = pneg %p223
      // Predicated region
      $region37: #{_attn_gated_call.1} parent=5 // pred_check
        _
      $region38: #{_attn_gated_call.1} parent=5 // pred_check_branch
        %226 = sbr.rel (%p223) target = $region40
      $region39: #{_attn_gated_call.1} parent=5 // pred_region
        %s227 = ssub.s32 %s15, 1
        %s228 = sand.u32 %s28, 1
        %s229 = scalar_lea.sflag [#allocation3], %s228
        %s230 = sand.u32 %s28, 1
        %s231 = smul.addr %s230, 512
        %s232 = scalar_lea.vmem [#allocation2], %s231
        // Predicated region
        $region41: #{_attn_gated_call.1} parent=39 // pred_check
          %p233 = pneg %p41
        $region42: #{_attn_gated_call.1} parent=39 // pred_check_branch
          %235 = sbr.rel (%p233) target = $region44
        $region43: #{_attn_gated_call.1} parent=39 // pred_region
          %236 = dma.done %s229, 8192
        $region44: #{_attn_gated_call.1} parent=39 // pred_fallthru
          _
        // Predicated region
        $region45: #{_attn_gated_call.1} parent=39 // pred_check
          %p237 = pneg %p62
        $region46: #{_attn_gated_call.1} parent=39 // pred_check_branch
          %239 = sbr.rel (%p237) target = $region48
        $region47: #{_attn_gated_call.1} parent=39 // pred_region
          %240 = dma.done [#allocation5], 4096
        $region48: #{_attn_gated_call.1} parent=39 // pred_fallthru
          _
        %s241 = sand.u32 %s28, 1
        %s242 = scalar_lea.sflag [#allocation3], %s241
        %s243 = sand.u32 %s28, 1
        %s244 = smul.addr %s243, 512
        %s245 = scalar_lea.vmem [#allocation2], %s244
        %p246 = pneg %p41
        %p247 = pneg %p38
        %p248 = pneg %p62
        %p249 = pneg %p59
        %p250 = pneg %p83
        %p251 = pneg %p80
        %p252 = pneg %p104
        %p253 = pneg %p101
        %p254 = pneg %p125
        %p255 = pneg %p122
        %p256 = pneg %p151
        %p257 = pneg %p148
        %s258 = sand.u32 %s138, 1
        %s259 = sand.u32 %s138, 1
        %s260 = smul.addr %s259, 16
        %s261 = scalar_lea.vmem [#allocation6], %s260
        %s262 = smul.u32 32, %s20
        %s263 = ssub.s32 38, %s262
        %p264 = scmp.lt.s32.totalorder %s263, 32
        %s265 = scalar_select %p264, %s263, 32
        %s266 = smul.u32 128, %s265
        %s267 = smul.u32 %s266, 2
        %s268 = smul.u32 2, %s20
        %s269 = ssub.s32 3, %s268
        %p270 = scmp.lt.s32.totalorder %s269, 2
        %s271 = scalar_select %p270, %s269, 2
        %s272 = smul.u32 128, %s271
        %v274 = vld [vmem:[%s232] sm:$0xff]
        %v275 = vld [vmem:[%s232 + $0x8] sm:$0xff]
        %v276 = vld [vmem:[%s232 + $0x10] sm:$0xff]
        %v277 = vld [vmem:[%s232 + $0x18] sm:$0xff]
        %v278 = vld [vmem:[%s232 + $0x20] sm:$0xff]
        %v279 = vld [vmem:[%s232 + $0x28] sm:$0xff]
        %v280 = vld [vmem:[%s232 + $0x30] sm:$0xff]
        %v281 = vld [vmem:[%s232 + $0x38] sm:$0xff]
        %v282 = vld [vmem:[%s232 + $0x40] sm:$0xff]
        %v283 = vld [vmem:[%s232 + $0x48] sm:$0xff]
        %v284 = vld [vmem:[%s232 + $0x50] sm:$0xff]
        %v285 = vld [vmem:[%s232 + $0x58] sm:$0xff]
        %v286 = vld [vmem:[%s232 + $0x60] sm:$0xff]
        %v287 = vld [vmem:[%s232 + $0x68] sm:$0xff]
        %v288 = vld [vmem:[%s232 + $0x70] sm:$0xff]
        %v289 = vld [vmem:[%s232 + $0x78] sm:$0xff]
        %v290 = vld [vmem:[%s232 + $0x80] sm:$0xff]
        %v291 = vld [vmem:[%s232 + $0x88] sm:$0xff]
        %v292 = vld [vmem:[%s232 + $0x90] sm:$0xff]
        %v293 = vld [vmem:[%s232 + $0x98] sm:$0xff]
        %v294 = vld [vmem:[%s232 + $0xa0] sm:$0xff]
        %v295 = vld [vmem:[%s232 + $0xa8] sm:$0xff]
        %v296 = vld [vmem:[%s232 + $0xb0] sm:$0xff]
        %v297 = vld [vmem:[%s232 + $0xb8] sm:$0xff]
        %v298 = vld [vmem:[%s232 + $0xc0] sm:$0xff]
        %v299 = vld [vmem:[%s232 + $0xc8] sm:$0xff]
        %v300 = vld [vmem:[%s232 + $0xd0] sm:$0xff]
        %v301 = vld [vmem:[%s232 + $0xd8] sm:$0xff]
        %v302 = vld [vmem:[%s232 + $0xe0] sm:$0xff]
        %v303 = vld [vmem:[%s232 + $0xe8] sm:$0xff]
        %v304 = vld [vmem:[%s232 + $0xf0] sm:$0xff]
        %v305 = vld [vmem:[%s232 + $0xf8] sm:$0xff]
        %v306 = vld [vmem:[%s232 + $0x100] sm:$0xff]
        %v307 = vld [vmem:[%s232 + $0x108] sm:$0xff]
        %v308 = vld [vmem:[%s232 + $0x110] sm:$0xff]
        %v309 = vld [vmem:[%s232 + $0x118] sm:$0xff]
        %v310 = vld [vmem:[%s232 + $0x120] sm:$0xff]
        %v311 = vld [vmem:[%s232 + $0x128] sm:$0xff]
        %v312 = vld [vmem:[%s232 + $0x130] sm:$0xff]
        %v313 = vld [vmem:[%s232 + $0x138] sm:$0xff]
        %v314 = vld [vmem:[%s232 + $0x140] sm:$0xff]
        %v315 = vld [vmem:[%s232 + $0x148] sm:$0xff]
        %v316 = vld [vmem:[%s232 + $0x150] sm:$0xff]
        %v317 = vld [vmem:[%s232 + $0x158] sm:$0xff]
        %v318 = vld [vmem:[%s232 + $0x160] sm:$0xff]
        %v319 = vld [vmem:[%s232 + $0x168] sm:$0xff]
        %v320 = vld [vmem:[%s232 + $0x170] sm:$0xff]
        %v321 = vld [vmem:[%s232 + $0x178] sm:$0xff]
        %v322 = vld [vmem:[%s232 + $0x180] sm:$0xff]
        %v323 = vld [vmem:[%s232 + $0x188] sm:$0xff]
        %v324 = vld [vmem:[%s232 + $0x190] sm:$0xff]
        %v325 = vld [vmem:[%s232 + $0x198] sm:$0xff]
        %v326 = vld [vmem:[%s232 + $0x1a0] sm:$0xff]
        %v327 = vld [vmem:[%s232 + $0x1a8] sm:$0xff]
        %v328 = vld [vmem:[%s232 + $0x1b0] sm:$0xff]
        %v329 = vld [vmem:[%s232 + $0x1b8] sm:$0xff]
        %v330 = vld [vmem:[%s232 + $0x1c0] sm:$0xff]
        %v331 = vld [vmem:[%s232 + $0x1c8] sm:$0xff]
        %v332 = vld [vmem:[%s232 + $0x1d0] sm:$0xff]
        %v333 = vld [vmem:[%s232 + $0x1d8] sm:$0xff]
        %v334 = vld [vmem:[%s232 + $0x1e0] sm:$0xff]
        %v335 = vld [vmem:[%s232 + $0x1e8] sm:$0xff]
        %v336 = vld [vmem:[%s232 + $0x1f0] sm:$0xff]
        %v337 = vld [vmem:[%s232 + $0x1f8] sm:$0xff]
        %v338 = vpack.c.bf16 %v276, %v274
        %v339 = vpack.c.bf16 %v277, %v275
        %v340 = vpack.c.bf16 %v280, %v278
        %v341 = vpack.c.bf16 %v281, %v279
        %v342 = vpack.c.bf16 %v284, %v282
        %v343 = vpack.c.bf16 %v285, %v283
        %v344 = vpack.c.bf16 %v288, %v286
        %v345 = vpack.c.bf16 %v289, %v287
        %v346 = vpack.c.bf16 %v292, %v290
        %v347 = vpack.c.bf16 %v293, %v291
        %v348 = vpack.c.bf16 %v296, %v294
        %v349 = vpack.c.bf16 %v297, %v295
        %v350 = vpack.c.bf16 %v300, %v298
        %v351 = vpack.c.bf16 %v301, %v299
        %v352 = vpack.c.bf16 %v304, %v302
        %v353 = vpack.c.bf16 %v305, %v303
        %v354 = vpack.c.bf16 %v308, %v306
        %v355 = vpack.c.bf16 %v309, %v307
        %v356 = vpack.c.bf16 %v312, %v310
        %v357 = vpack.c.bf16 %v313, %v311
        %v358 = vpack.c.bf16 %v316, %v314
        %v359 = vpack.c.bf16 %v317, %v315
        %v360 = vpack.c.bf16 %v320, %v318
        %v361 = vpack.c.bf16 %v321, %v319
        %v362 = vpack.c.bf16 %v324, %v322
        %v363 = vpack.c.bf16 %v325, %v323
        %v364 = vpack.c.bf16 %v328, %v326
        %v365 = vpack.c.bf16 %v329, %v327
        %v366 = vpack.c.bf16 %v332, %v330
        %v367 = vpack.c.bf16 %v333, %v331
        %v368 = vpack.c.bf16 %v336, %v334
        %v369 = vpack.c.bf16 %v337, %v335
        %v370 = vld [vmem:[#allocation4] sm:$0xff]
        %v371 = vld [vmem:[#allocation4 + $0x8] sm:$0xff]
        %v372 = vld [vmem:[#allocation4 + $0x10] sm:$0xff]
        %v373 = vld [vmem:[#allocation4 + $0x18] sm:$0xff]
        %v374 = vld [vmem:[#allocation4 + $0x20] sm:$0xff]
        %v375 = vld [vmem:[#allocation4 + $0x28] sm:$0xff]
        %v376 = vld [vmem:[#allocation4 + $0x30] sm:$0xff]
        %v377 = vld [vmem:[#allocation4 + $0x38] sm:$0xff]
        %v378 = vld [vmem:[#allocation4 + $0x40] sm:$0xff]
        %v379 = vld [vmem:[#allocation4 + $0x48] sm:$0xff]
        %v380 = vld [vmem:[#allocation4 + $0x50] sm:$0xff]
        %v381 = vld [vmem:[#allocation4 + $0x58] sm:$0xff]
        %v382 = vld [vmem:[#allocation4 + $0x60] sm:$0xff]
        %v383 = vld [vmem:[#allocation4 + $0x68] sm:$0xff]
        %v384 = vld [vmem:[#allocation4 + $0x70] sm:$0xff]
        %v385 = vld [vmem:[#allocation4 + $0x78] sm:$0xff]
        %v386 = vld [vmem:[#allocation4 + $0x80] sm:$0xff]
        %v387 = vld [vmem:[#allocation4 + $0x88] sm:$0xff]
        %v388 = vld [vmem:[#allocation4 + $0x90] sm:$0xff]
        %v389 = vld [vmem:[#allocation4 + $0x98] sm:$0xff]
        %v390 = vld [vmem:[#allocation4 + $0xa0] sm:$0xff]
        %v391 = vld [vmem:[#allocation4 + $0xa8] sm:$0xff]
        %v392 = vld [vmem:[#allocation4 + $0xb0] sm:$0xff]
        %v393 = vld [vmem:[#allocation4 + $0xb8] sm:$0xff]
        %v394 = vld [vmem:[#allocation4 + $0xc0] sm:$0xff]
        %v395 = vld [vmem:[#allocation4 + $0xc8] sm:$0xff]
        %v396 = vld [vmem:[#allocation4 + $0xd0] sm:$0xff]
        %v397 = vld [vmem:[#allocation4 + $0xd8] sm:$0xff]
        %v398 = vld [vmem:[#allocation4 + $0xe0] sm:$0xff]
        %v399 = vld [vmem:[#allocation4 + $0xe8] sm:$0xff]
        %v400 = vld [vmem:[#allocation4 + $0xf0] sm:$0xff]
        %v401 = vld [vmem:[#allocation4 + $0xf8] sm:$0xff]
        %v402 = vld [vmem:[%s2] sm:$0x3]
        %v404 = vlaneseq
        %v405 = vshrl.u32 %v404, 7
        %v406 = vsub.s32 0, %v405
        %v407 = vrot.slane %v402, %v406
        %v408 = vlaneseq
        %v409 = vshrl.u32 %v408, 7
        %v410 = vsub.s32 1, %v409
        %v411 = vrot.slane %v402, %v410
        %v446 = vunpack.c.l.b16 %v370
        %v447 = vunpack.c.h.b16 %v370
        %v448 = vunpack.c.l.b16 %v371
        %v449 = vunpack.c.h.b16 %v371
        %v450 = vunpack.c.l.b16 %v372
        %v451 = vunpack.c.h.b16 %v372
        %v452 = vunpack.c.l.b16 %v373
        %v453 = vunpack.c.h.b16 %v373
        %v454 = vunpack.c.l.b16 %v374
        %v455 = vunpack.c.h.b16 %v374
        %v456 = vunpack.c.l.b16 %v375
        %v457 = vunpack.c.h.b16 %v375
        %v458 = vunpack.c.l.b16 %v376
        %v459 = vunpack.c.h.b16 %v376
        %v460 = vunpack.c.l.b16 %v377
        %v461 = vunpack.c.h.b16 %v377
        %v462 = vunpack.c.l.b16 %v378
        %v463 = vunpack.c.h.b16 %v378
        %v464 = vunpack.c.l.b16 %v379
        %v465 = vunpack.c.h.b16 %v379
        %v466 = vunpack.c.l.b16 %v380
        %v467 = vunpack.c.h.b16 %v380
        %v468 = vunpack.c.l.b16 %v381
        %v469 = vunpack.c.h.b16 %v381
        %v470 = vunpack.c.l.b16 %v382
        %v471 = vunpack.c.h.b16 %v382
        %v472 = vunpack.c.l.b16 %v383
        %v473 = vunpack.c.h.b16 %v383
        %v474 = vunpack.c.l.b16 %v384
        %v475 = vunpack.c.h.b16 %v384
        %v476 = vunpack.c.l.b16 %v385
        %v477 = vunpack.c.h.b16 %v385
        %v478 = vunpack.c.l.b16 %v386
        %v479 = vunpack.c.h.b16 %v386
        %v480 = vunpack.c.l.b16 %v387
        %v481 = vunpack.c.h.b16 %v387
        %v482 = vunpack.c.l.b16 %v388
        %v483 = vunpack.c.h.b16 %v388
        %v484 = vunpack.c.l.b16 %v389
        %v485 = vunpack.c.h.b16 %v389
        %v486 = vunpack.c.l.b16 %v390
        %v487 = vunpack.c.h.b16 %v390
        %v488 = vunpack.c.l.b16 %v391
        %v489 = vunpack.c.h.b16 %v391
        %v490 = vunpack.c.l.b16 %v392
        %v491 = vunpack.c.h.b16 %v392
        %v492 = vunpack.c.l.b16 %v393
        %v493 = vunpack.c.h.b16 %v393
        %v494 = vunpack.c.l.b16 %v394
        %v495 = vunpack.c.h.b16 %v394
        %v496 = vunpack.c.l.b16 %v395
        %v497 = vunpack.c.h.b16 %v395
        %v498 = vunpack.c.l.b16 %v396
        %v499 = vunpack.c.h.b16 %v396
        %v500 = vunpack.c.l.b16 %v397
        %v501 = vunpack.c.h.b16 %v397
        %v502 = vunpack.c.l.b16 %v398
        %v503 = vunpack.c.h.b16 %v398
        %v504 = vunpack.c.l.b16 %v399
        %v505 = vunpack.c.h.b16 %v399
        %v506 = vunpack.c.l.b16 %v400
        %v507 = vunpack.c.h.b16 %v400
        %v508 = vunpack.c.l.b16 %v401
        %v509 = vunpack.c.h.b16 %v401
        %v510 = vpack.c.b16 %v448, %v446
        %v511 = vpack.c.b16 %v449, %v447
        %v512 = vpack.c.b16 %v452, %v450
        %v513 = vpack.c.b16 %v453, %v451
        %v514 = vpack.c.b16 %v456, %v454
        %v515 = vpack.c.b16 %v457, %v455
        %v516 = vpack.c.b16 %v460, %v458
        %v517 = vpack.c.b16 %v461, %v459
        %v518 = vpack.c.b16 %v464, %v462
        %v519 = vpack.c.b16 %v465, %v463
        %v520 = vpack.c.b16 %v468, %v466
        %v521 = vpack.c.b16 %v469, %v467
        %v522 = vpack.c.b16 %v472, %v470
        %v523 = vpack.c.b16 %v473, %v471
        %v524 = vpack.c.b16 %v476, %v474
        %v525 = vpack.c.b16 %v477, %v475
        %v526 = vpack.c.b16 %v480, %v478
        %v527 = vpack.c.b16 %v481, %v479
        %v528 = vpack.c.b16 %v484, %v482
        %v529 = vpack.c.b16 %v485, %v483
        %v530 = vpack.c.b16 %v488, %v486
        %v531 = vpack.c.b16 %v489, %v487
        %v532 = vpack.c.b16 %v492, %v490
        %v533 = vpack.c.b16 %v493, %v491
        %v534 = vpack.c.b16 %v496, %v494
        %v535 = vpack.c.b16 %v497, %v495
        %v536 = vpack.c.b16 %v500, %v498
        %v537 = vpack.c.b16 %v501, %v499
        %v538 = vpack.c.b16 %v504, %v502
        %v539 = vpack.c.b16 %v505, %v503
        %v540 = vpack.c.b16 %v508, %v506
        %v541 = vpack.c.b16 %v509, %v507
        %574 = vmatprep.subr.bf16.mxu0 %v511
        %575 = vmatpush1.bf16.msra.mxu0 %v510
        %576 = vmatprep.subr.bf16.mxu0 %v513
        %577 = vmatpush1.bf16.msra.mxu0 %v512
        %578 = vmatprep.subr.bf16.mxu0 %v515
        %579 = vmatpush1.bf16.msra.mxu0 %v514
        %580 = vmatprep.subr.bf16.mxu0 %v517
        %581 = vmatpush1.bf16.msra.mxu0 %v516
        %582 = vmatprep.subr.bf16.mxu0 %v519
        %583 = vmatpush1.bf16.msra.mxu0 %v518
        %584 = vmatprep.subr.bf16.mxu0 %v521
        %585 = vmatpush1.bf16.msra.mxu0 %v520
        %586 = vmatprep.subr.bf16.mxu0 %v523
        %587 = vmatpush1.bf16.msra.mxu0 %v522
        %588 = vmatprep.subr.bf16.mxu0 %v525
        %589 = vmatpush1.bf16.msra.mxu0 %v524
        %590 = vmatprep.subr.bf16.mxu0 %v527
        %591 = vmatpush1.bf16.msra.mxu0 %v526
        %592 = vmatprep.subr.bf16.mxu0 %v529
        %593 = vmatpush1.bf16.msra.mxu0 %v528
        %594 = vmatprep.subr.bf16.mxu0 %v531
        %595 = vmatpush1.bf16.msra.mxu0 %v530
        %596 = vmatprep.subr.bf16.mxu0 %v533
        %597 = vmatpush1.bf16.msra.mxu0 %v532
        %598 = vmatprep.subr.bf16.mxu0 %v535
        %599 = vmatpush1.bf16.msra.mxu0 %v534
        %600 = vmatprep.subr.bf16.mxu0 %v537
        %601 = vmatpush1.bf16.msra.mxu0 %v536
        %602 = vmatprep.subr.bf16.mxu0 %v539
        %603 = vmatpush1.bf16.msra.mxu0 %v538
        %604 = vmatprep.subr.bf16.mxu0 %v541
        %605 = vmatpush1.bf16.msra.mxu0 %v540
        %606 = vmatprep.mubr.bf16.mxu0 %v339
        %607 = vmatmul.mubr.bf16.gmra.mrb[0].mxu0 %v338
        %v608 = vpop.f32.mrb[0].mxu0
        %v609 = vadd.f32 %v407, %v608
        %v610 = vpop.f32.mrb[0].mxu0
        %v611 = vadd.f32 %v411, %v610
        %v612 = vpop.f32.mrb[0].mxu0
        %v613 = vadd.f32 %v407, %v612
        %v614 = vpop.f32.mrb[0].mxu0
        %v615 = vadd.f32 %v411, %v614
        %616 = vmatprep.mubr.bf16.mxu0 %v341
        %617 = vmatmul.mubr.bf16.gmra.mrb[0].mxu0 %v340
        %v618 = vpop.f32.mrb[0].mxu0
        %v619 = vadd.f32 %v407, %v618
        %v620 = vpop.f32.mrb[0].mxu0
        %v621 = vadd.f32 %v411, %v620
        %v622 = vpop.f32.mrb[0].mxu0
        %v623 = vadd.f32 %v407, %v622
        %v624 = vpop.f32.mrb[0].mxu0
        %v625 = vadd.f32 %v411, %v624
        %626 = vmatprep.mubr.bf16.mxu0 %v343
        %627 = vmatmul.mubr.bf16.gmra.mrb[0].mxu0 %v342
        %v628 = vpop.f32.mrb[0].mxu0
        %v629 = vadd.f32 %v407, %v628
        %v630 = vpop.f32.mrb[0].mxu0
        %v631 = vadd.f32 %v411, %v630
        %v632 = vpop.f32.mrb[0].mxu0
        %v633 = vadd.f32 %v407, %v632
        %v634 = vpop.f32.mrb[0].mxu0
        %v635 = vadd.f32 %v411, %v634
        %636 = vmatprep.mubr.bf16.mxu0 %v345
        %637 = vmatmul.mubr.bf16.gmra.mrb[0].mxu0 %v344
        %v638 = vpop.f32.mrb[0].mxu0
        %v639 = vadd.f32 %v407, %v638
        %v640 = vpop.f32.mrb[0].mxu0
        %v641 = vadd.f32 %v411, %v640
        %v642 = vpop.f32.mrb[0].mxu0
        %v643 = vadd.f32 %v407, %v642
        %v644 = vpop.f32.mrb[0].mxu0
        %v645 = vadd.f32 %v411, %v644
        %646 = vmatprep.mubr.bf16.mxu0 %v347
        %647 = vmatmul.mubr.bf16.gmra.mrb[0].mxu0 %v346
        %v648 = vpop.f32.mrb[0].mxu0
        %v649 = vadd.f32 %v407, %v648
        %v650 = vpop.f32.mrb[0].mxu0
        %v651 = vadd.f32 %v411, %v650
        %v652 = vpop.f32.mrb[0].mxu0
        %v653 = vadd.f32 %v407, %v652
        %v654 = vpop.f32.mrb[0].mxu0
        %v655 = vadd.f32 %v411, %v654
        %656 = vmatprep.mubr.bf16.mxu0 %v349
        %657 = vmatmul.mubr.bf16.gmra.mrb[0].mxu0 %v348
        %v658 = vpop.f32.mrb[0].mxu0
        %v659 = vadd.f32 %v407, %v658
        %v660 = vpop.f32.mrb[0].mxu0
        %v661 = vadd.f32 %v411, %v660
        %v662 = vpop.f32.mrb[0].mxu0
        %v663 = vadd.f32 %v407, %v662
        %v664 = vpop.f32.mrb[0].mxu0
        %v665 = vadd.f32 %v411, %v664
        %666 = vmatprep.mubr.bf16.mxu0 %v351
        %667 = vmatmul.mubr.bf16.gmra.mrb[0].mxu0 %v350
        %v668 = vpop.f32.mrb[0].mxu0
        %v669 = vadd.f32 %v407, %v668
        %v670 = vpop.f32.mrb[0].mxu0
        %v671 = vadd.f32 %v411, %v670
        %v672 = vpop.f32.mrb[0].mxu0
        %v673 = vadd.f32 %v407, %v672
        %v674 = vpop.f32.mrb[0].mxu0
        %v675 = vadd.f32 %v411, %v674
        %676 = vmatprep.mubr.bf16.mxu0 %v353
        %677 = vmatmul.mubr.bf16.gmra.mrb[0].mxu0 %v352
        %v678 = vpop.f32.mrb[0].mxu0
        %v679 = vadd.f32 %v407, %v678
        %v680 = vpop.f32.mrb[0].mxu0
        %v681 = vadd.f32 %v411, %v680
        %v682 = vpop.f32.mrb[0].mxu0
        %v683 = vadd.f32 %v407, %v682
        %v684 = vpop.f32.mrb[0].mxu0
        %v685 = vadd.f32 %v411, %v684
        %686 = vmatprep.mubr.bf16.mxu0 %v355
        %687 = vmatmul.mubr.bf16.gmra.mrb[0].mxu0 %v354
        %v688 = vpop.f32.mrb[0].mxu0
        %v689 = vadd.f32 %v407, %v688
        %v690 = vpop.f32.mrb[0].mxu0
        %v691 = vadd.f32 %v411, %v690
        %v692 = vpop.f32.mrb[0].mxu0
        %v693 = vadd.f32 %v407, %v692
        %v694 = vpop.f32.mrb[0].mxu0
        %v695 = vadd.f32 %v411, %v694
        %696 = vmatprep.mubr.bf16.mxu0 %v357
        %697 = vmatmul.mubr.bf16.gmra.mrb[0].mxu0 %v356
        %v698 = vpop.f32.mrb[0].mxu0
        %v699 = vadd.f32 %v407, %v698
        %v700 = vpop.f32.mrb[0].mxu0
        %v701 = vadd.f32 %v411, %v700
        %v702 = vpop.f32.mrb[0].mxu0
        %v703 = vadd.f32 %v407, %v702
        %v704 = vpop.f32.mrb[0].mxu0
        %v705 = vadd.f32 %v411, %v704
        %706 = vmatprep.mubr.bf16.mxu0 %v359
        %707 = vmatmul.mubr.bf16.gmra.mrb[0].mxu0 %v358
        %v708 = vpop.f32.mrb[0].mxu0
        %v709 = vadd.f32 %v407, %v708
        %v710 = vpop.f32.mrb[0].mxu0
        %v711 = vadd.f32 %v411, %v710
        %v712 = vpop.f32.mrb[0].mxu0
        %v713 = vadd.f32 %v407, %v712
        %v714 = vpop.f32.mrb[0].mxu0
        %v715 = vadd.f32 %v411, %v714
        %716 = vmatprep.mubr.bf16.mxu0 %v361
        %717 = vmatmul.mubr.bf16.gmra.mrb[0].mxu0 %v360
        %v718 = vpop.f32.mrb[0].mxu0
        %v719 = vadd.f32 %v407, %v718
        %v720 = vpop.f32.mrb[0].mxu0
        %v721 = vadd.f32 %v411, %v720
        %v722 = vpop.f32.mrb[0].mxu0
        %v723 = vadd.f32 %v407, %v722
        %v724 = vpop.f32.mrb[0].mxu0
        %v725 = vadd.f32 %v411, %v724
        %726 = vmatprep.mubr.bf16.mxu0 %v363
        %727 = vmatmul.mubr.bf16.gmra.mrb[0].mxu0 %v362
        %v728 = vpop.f32.mrb[0].mxu0
        %v729 = vadd.f32 %v407, %v728
        %v730 = vpop.f32.mrb[0].mxu0
        %v731 = vadd.f32 %v411, %v730
        %v732 = vpop.f32.mrb[0].mxu0
        %v733 = vadd.f32 %v407, %v732
        %v734 = vpop.f32.mrb[0].mxu0
        %v735 = vadd.f32 %v411, %v734
        %736 = vmatprep.mubr.bf16.mxu0 %v365
        %737 = vmatmul.mubr.bf16.gmra.mrb[0].mxu0 %v364
        %v738 = vpop.f32.mrb[0].mxu0
        %v739 = vadd.f32 %v407, %v738
        %v740 = vpop.f32.mrb[0].mxu0
        %v741 = vadd.f32 %v411, %v740
        %v742 = vpop.f32.mrb[0].mxu0
        %v743 = vadd.f32 %v407, %v742
        %v744 = vpop.f32.mrb[0].mxu0
        %v745 = vadd.f32 %v411, %v744
        %746 = vmatprep.mubr.bf16.mxu0 %v367
        %747 = vmatmul.mubr.bf16.gmra.mrb[0].mxu0 %v366
        %v748 = vpop.f32.mrb[0].mxu0
        %v749 = vadd.f32 %v407, %v748
        %v750 = vpop.f32.mrb[0].mxu0
        %v751 = vadd.f32 %v411, %v750
        %v752 = vpop.f32.mrb[0].mxu0
        %v753 = vadd.f32 %v407, %v752
        %v754 = vpop.f32.mrb[0].mxu0
        %v755 = vadd.f32 %v411, %v754
        %756 = vmatprep.mubr.bf16.mxu0 %v369
        %757 = vmatmul.mubr.bf16.gmra.mrb[0].mxu0 %v368
        %v758 = vpop.f32.mrb[0].mxu0
        %v759 = vadd.f32 %v407, %v758
        %v760 = vpop.f32.mrb[0].mxu0
        %v761 = vadd.f32 %v411, %v760
        %v762 = vpop.f32.mrb[0].mxu0
        %v763 = vadd.f32 %v407, %v762
        %v764 = vpop.f32.mrb[0].mxu0
        %v765 = vadd.f32 %v411, %v764
        %766 = vdwg.mxu0
        %v767 = vtanh.pop %v609
        %v768 = vtanh.pop %v613
        %v769 = vtanh.pop %v619
        %v770 = vtanh.pop %v623
        %v771 = vtanh.pop %v629
        %v772 = vtanh.pop %v633
        %v773 = vtanh.pop %v639
        %v774 = vtanh.pop %v643
        %v775 = vtanh.pop %v649
        %v776 = vtanh.pop %v653
        %v777 = vtanh.pop %v659
        %v778 = vtanh.pop %v663
        %v779 = vtanh.pop %v669
        %v780 = vtanh.pop %v673
        %v781 = vtanh.pop %v679
        %v782 = vtanh.pop %v683
        %v783 = vtanh.pop %v689
        %v784 = vtanh.pop %v693
        %v785 = vtanh.pop %v699
        %v786 = vtanh.pop %v703
        %v787 = vtanh.pop %v709
        %v788 = vtanh.pop %v713
        %v789 = vtanh.pop %v719
        %v790 = vtanh.pop %v723
        %v791 = vtanh.pop %v729
        %v792 = vtanh.pop %v733
        %v793 = vtanh.pop %v739
        %v794 = vtanh.pop %v743
        %v795 = vtanh.pop %v749
        %v796 = vtanh.pop %v753
        %v797 = vtanh.pop %v759
        %v798 = vtanh.pop %v763
        %v799 = vxor.u32 %v611, 2147483648
        %v800 = vxor.u32 %v615, 2147483648
        %v801 = vxor.u32 %v621, 2147483648
        %v802 = vxor.u32 %v625, 2147483648
        %v803 = vxor.u32 %v631, 2147483648
        %v804 = vxor.u32 %v635, 2147483648
        %v805 = vxor.u32 %v641, 2147483648
        %v806 = vxor.u32 %v645, 2147483648
        %v807 = vxor.u32 %v651, 2147483648
        %v808 = vxor.u32 %v655, 2147483648
        %v809 = vxor.u32 %v661, 2147483648
        %v810 = vxor.u32 %v665, 2147483648
        %v811 = vxor.u32 %v671, 2147483648
        %v812 = vxor.u32 %v675, 2147483648
        %v813 = vxor.u32 %v681, 2147483648
        %v814 = vxor.u32 %v685, 2147483648
        %v815 = vxor.u32 %v691, 2147483648
        %v816 = vxor.u32 %v695, 2147483648
        %v817 = vxor.u32 %v701, 2147483648
        %v818 = vxor.u32 %v705, 2147483648
        %v819 = vxor.u32 %v711, 2147483648
        %v820 = vxor.u32 %v715, 2147483648
        %v821 = vxor.u32 %v721, 2147483648
        %v822 = vxor.u32 %v725, 2147483648
        %v823 = vxor.u32 %v731, 2147483648
        %v824 = vxor.u32 %v735, 2147483648
        %v825 = vxor.u32 %v741, 2147483648
        %v826 = vxor.u32 %v745, 2147483648
        %v827 = vxor.u32 %v751, 2147483648
        %v828 = vxor.u32 %v755, 2147483648
        %v829 = vxor.u32 %v761, 2147483648
        %v830 = vxor.u32 %v765, 2147483648
        %v831 = vmul.f32 %v799, 1.442695
        %v832 = vpow.pop %v831
        %v833 = vmul.f32 %v800, 1.442695
        %v834 = vpow.pop %v833
        %v835 = vmul.f32 %v801, 1.442695
        %v836 = vpow.pop %v835
        %v837 = vmul.f32 %v802, 1.442695
        %v838 = vpow.pop %v837
        %v839 = vmul.f32 %v803, 1.442695
        %v840 = vpow.pop %v839
        %v841 = vmul.f32 %v804, 1.442695
        %v842 = vpow.pop %v841
        %v843 = vmul.f32 %v805, 1.442695
        %v844 = vpow.pop %v843
        %v845 = vmul.f32 %v806, 1.442695
        %v846 = vpow.pop %v845
        %v847 = vmul.f32 %v807, 1.442695
        %v848 = vpow.pop %v847
        %v849 = vmul.f32 %v808, 1.442695
        %v850 = vpow.pop %v849
        %v851 = vmul.f32 %v809, 1.442695
        %v852 = vpow.pop %v851
        %v853 = vmul.f32 %v810, 1.442695
        %v854 = vpow.pop %v853
        %v855 = vmul.f32 %v811, 1.442695
        %v856 = vpow.pop %v855
        %v857 = vmul.f32 %v812, 1.442695
        %v858 = vpow.pop %v857
        %v859 = vmul.f32 %v813, 1.442695
        %v860 = vpow.pop %v859
        %v861 = vmul.f32 %v814, 1.442695
        %v862 = vpow.pop %v861
        %v863 = vmul.f32 %v815, 1.442695
        %v864 = vpow.pop %v863
        %v865 = vmul.f32 %v816, 1.442695
        %v866 = vpow.pop %v865
        %v867 = vmul.f32 %v817, 1.442695
        %v868 = vpow.pop %v867
        %v869 = vmul.f32 %v818, 1.442695
        %v870 = vpow.pop %v869
        %v871 = vmul.f32 %v819, 1.442695
        %v872 = vpow.pop %v871
        %v873 = vmul.f32 %v820, 1.442695
        %v874 = vpow.pop %v873
        %v875 = vmul.f32 %v821, 1.442695
        %v876 = vpow.pop %v875
        %v877 = vmul.f32 %v822, 1.442695
        %v878 = vpow.pop %v877
        %v879 = vmul.f32 %v823, 1.442695
        %v880 = vpow.pop %v879
        %v881 = vmul.f32 %v824, 1.442695
        %v882 = vpow.pop %v881
        %v883 = vmul.f32 %v825, 1.442695
        %v884 = vpow.pop %v883
        %v885 = vmul.f32 %v826, 1.442695
        %v886 = vpow.pop %v885
        %v887 = vmul.f32 %v827, 1.442695
        %v888 = vpow.pop %v887
        %v889 = vmul.f32 %v828, 1.442695
        %v890 = vpow.pop %v889
        %v891 = vmul.f32 %v829, 1.442695
        %v892 = vpow.pop %v891
        %v893 = vmul.f32 %v830, 1.442695
        %v894 = vpow.pop %v893
        %v895 = vadd.f32 %v832, 1.0
        %v896 = vadd.f32 %v834, 1.0
        %v897 = vadd.f32 %v836, 1.0
        %v898 = vadd.f32 %v838, 1.0
        %v899 = vadd.f32 %v840, 1.0
        %v900 = vadd.f32 %v842, 1.0
        %v901 = vadd.f32 %v844, 1.0
        %v902 = vadd.f32 %v846, 1.0
        %v903 = vadd.f32 %v848, 1.0
        %v904 = vadd.f32 %v850, 1.0
        %v905 = vadd.f32 %v852, 1.0
        %v906 = vadd.f32 %v854, 1.0
        %v907 = vadd.f32 %v856, 1.0
        %v908 = vadd.f32 %v858, 1.0
        %v909 = vadd.f32 %v860, 1.0
        %v910 = vadd.f32 %v862, 1.0
        %v911 = vadd.f32 %v864, 1.0
        %v912 = vadd.f32 %v866, 1.0
        %v913 = vadd.f32 %v868, 1.0
        %v914 = vadd.f32 %v870, 1.0
        %v915 = vadd.f32 %v872, 1.0
        %v916 = vadd.f32 %v874, 1.0
        %v917 = vadd.f32 %v876, 1.0
        %v918 = vadd.f32 %v878, 1.0
        %v919 = vadd.f32 %v880, 1.0
        %v920 = vadd.f32 %v882, 1.0
        %v921 = vadd.f32 %v884, 1.0
        %v922 = vadd.f32 %v886, 1.0
        %v923 = vadd.f32 %v888, 1.0
        %v924 = vadd.f32 %v890, 1.0
        %v925 = vadd.f32 %v892, 1.0
        %v926 = vadd.f32 %v894, 1.0
        %v927 = vrcp.pop %v895
        %v928 = vmul.f32 1.0, %v927
        %v929 = vrcp.pop %v896
        %v930 = vmul.f32 1.0, %v929
        %v931 = vrcp.pop %v897
        %v932 = vmul.f32 1.0, %v931
        %v933 = vrcp.pop %v898
        %v934 = vmul.f32 1.0, %v933
        %v935 = vrcp.pop %v899
        %v936 = vmul.f32 1.0, %v935
        %v937 = vrcp.pop %v900
        %v938 = vmul.f32 1.0, %v937
        %v939 = vrcp.pop %v901
        %v940 = vmul.f32 1.0, %v939
        %v941 = vrcp.pop %v902
        %v942 = vmul.f32 1.0, %v941
        %v943 = vrcp.pop %v903
        %v944 = vmul.f32 1.0, %v943
        %v945 = vrcp.pop %v904
        %v946 = vmul.f32 1.0, %v945
        %v947 = vrcp.pop %v905
        %v948 = vmul.f32 1.0, %v947
        %v949 = vrcp.pop %v906
        %v950 = vmul.f32 1.0, %v949
        %v951 = vrcp.pop %v907
        %v952 = vmul.f32 1.0, %v951
        %v953 = vrcp.pop %v908
        %v954 = vmul.f32 1.0, %v953
        %v955 = vrcp.pop %v909
        %v956 = vmul.f32 1.0, %v955
        %v957 = vrcp.pop %v910
        %v958 = vmul.f32 1.0, %v957
        %v959 = vrcp.pop %v911
        %v960 = vmul.f32 1.0, %v959
        %v961 = vrcp.pop %v912
        %v962 = vmul.f32 1.0, %v961
        %v963 = vrcp.pop %v913
        %v964 = vmul.f32 1.0, %v963
        %v965 = vrcp.pop %v914
        %v966 = vmul.f32 1.0, %v965
        %v967 = vrcp.pop %v915
        %v968 = vmul.f32 1.0, %v967
        %v969 = vrcp.pop %v916
        %v970 = vmul.f32 1.0, %v969
        %v971 = vrcp.pop %v917
        %v972 = vmul.f32 1.0, %v971
        %v973 = vrcp.pop %v918
        %v974 = vmul.f32 1.0, %v973
        %v975 = vrcp.pop %v919
        %v976 = vmul.f32 1.0, %v975
        %v977 = vrcp.pop %v920
        %v978 = vmul.f32 1.0, %v977
        %v979 = vrcp.pop %v921
        %v980 = vmul.f32 1.0, %v979
        %v981 = vrcp.pop %v922
        %v982 = vmul.f32 1.0, %v981
        %v983 = vrcp.pop %v923
        %v984 = vmul.f32 1.0, %v983
        %v985 = vrcp.pop %v924
        %v986 = vmul.f32 1.0, %v985
        %v987 = vrcp.pop %v925
        %v988 = vmul.f32 1.0, %v987
        %v989 = vrcp.pop %v926
        %v990 = vmul.f32 1.0, %v989
        %v991 = vmul.f32 %v767, %v928
        %v992 = vmul.f32 %v768, %v930
        %v993 = vmul.f32 %v769, %v932
        %v994 = vmul.f32 %v770, %v934
        %v995 = vmul.f32 %v771, %v936
        %v996 = vmul.f32 %v772, %v938
        %v997 = vmul.f32 %v773, %v940
        %v998 = vmul.f32 %v774, %v942
        %v999 = vmul.f32 %v775, %v944
        %v1000 = vmul.f32 %v776, %v946
        %v1001 = vmul.f32 %v777, %v948
        %v1002 = vmul.f32 %v778, %v950
        %v1003 = vmul.f32 %v779, %v952
        %v1004 = vmul.f32 %v780, %v954
        %v1005 = vmul.f32 %v781, %v956
        %v1006 = vmul.f32 %v782, %v958
        %v1007 = vmul.f32 %v783, %v960
        %v1008 = vmul.f32 %v784, %v962
        %v1009 = vmul.f32 %v785, %v964
        %v1010 = vmul.f32 %v786, %v966
        %v1011 = vmul.f32 %v787, %v968
        %v1012 = vmul.f32 %v788, %v970
        %v1013 = vmul.f32 %v789, %v972
        %v1014 = vmul.f32 %v790, %v974
        %v1015 = vmul.f32 %v791, %v976
        %v1016 = vmul.f32 %v792, %v978
        %v1017 = vmul.f32 %v793, %v980
        %v1018 = vmul.f32 %v794, %v982
        %v1019 = vmul.f32 %v795, %v984
        %v1020 = vmul.f32 %v796, %v986
        %v1021 = vmul.f32 %v797, %v988
        %v1022 = vmul.f32 %v798, %v990
        %v1023 = vpack.c.bf16 %v992, %v991
        %v1024 = vpack.c.bf16 %v994, %v993
        %v1025 = vpack.c.bf16 %v996, %v995
        %v1026 = vpack.c.bf16 %v998, %v997
        %v1027 = vpack.c.bf16 %v1000, %v999
        %v1028 = vpack.c.bf16 %v1002, %v1001
        %v1029 = vpack.c.bf16 %v1004, %v1003
        %v1030 = vpack.c.bf16 %v1006, %v1005
        %v1031 = vpack.c.bf16 %v1008, %v1007
        %v1032 = vpack.c.bf16 %v1010, %v1009
        %v1033 = vpack.c.bf16 %v1012, %v1011
        %v1034 = vpack.c.bf16 %v1014, %v1013
        %v1035 = vpack.c.bf16 %v1016, %v1015
        %v1036 = vpack.c.bf16 %v1018, %v1017
        %v1037 = vpack.c.bf16 %v1020, %v1019
        %v1038 = vpack.c.bf16 %v1022, %v1021
        %v1039 = vld [vmem:[%s3] sm:$0xf]
        %v1040 = vld [vmem:[%s4] sm:$0xff]
        %1042 = vset.pattern.permute.xlu0 0
        %1043 = vperm.xlu0 %1042, %v1040
        %v1044 = vpop.permute.xlu0 %1043
        %1046 = vmatprep.subr.bf16.mxu0 0
        %1047 = vmatpush1.bf16.xpose.msra.mxu0 %v1023
        %1048 = vmatprep.subr.bf16.mxu0 0
        %1049 = vmatpush1.bf16.xpose.msra.mxu0 %v1024
        %1050 = vmatprep.subr.bf16.mxu0 0
        %1051 = vmatpush1.bf16.xpose.msra.mxu0 %v1025
        %1052 = vmatprep.subr.bf16.mxu0 0
        %1053 = vmatpush1.bf16.xpose.msra.mxu0 %v1026
        %1054 = vmatprep.subr.bf16.mxu0 0
        %1055 = vmatpush1.bf16.xpose.msra.mxu0 %v1027
        %1056 = vmatprep.subr.bf16.mxu0 0
        %1057 = vmatpush1.bf16.xpose.msra.mxu0 %v1028
        %1058 = vmatprep.subr.bf16.mxu0 0
        %1059 = vmatpush1.bf16.xpose.msra.mxu0 %v1029
        %1060 = vmatprep.subr.bf16.mxu0 0
        %1061 = vmatpush1.bf16.xpose.msra.mxu0 %v1030
        %1062 = vmatprep.subr.bf16.mxu0 0
        %1063 = vmatpush1.bf16.xpose.msra.mxu0 %v1031
        %1064 = vmatprep.subr.bf16.mxu0 0
        %1065 = vmatpush1.bf16.xpose.msra.mxu0 %v1032
        %1066 = vmatprep.subr.bf16.mxu0 0
        %1067 = vmatpush1.bf16.xpose.msra.mxu0 %v1033
        %1068 = vmatprep.subr.bf16.mxu0 0
        %1069 = vmatpush1.bf16.xpose.msra.mxu0 %v1034
        %1070 = vmatprep.subr.bf16.mxu0 0
        %1071 = vmatpush1.bf16.xpose.msra.mxu0 %v1035
        %1072 = vmatprep.subr.bf16.mxu0 0
        %1073 = vmatpush1.bf16.xpose.msra.mxu0 %v1036
        %1074 = vmatprep.subr.bf16.mxu0 0
        %1075 = vmatpush1.bf16.xpose.msra.mxu0 %v1037
        %1076 = vmatprep.subr.bf16.mxu0 0
        %1077 = vmatpush1.bf16.xpose.msra.mxu0 %v1038
        %1078 = vmatprep.mubr.bf16.mxu0 0
        %1079 = vmatmul.mubr.bf16.gmra.mrb[0].mxu0 %v1039
        %v1080 = vpop.f32.mrb[0].mxu0
        %v1081 = vadd.f32 %v1044, %v1080
        %v1082 = vpop.f32.mrb[0].mxu0
        %v1083 = vadd.f32 %v1044, %v1082
        %v1084 = vpop.f32.mrb[0].mxu0
        %v1085 = vpop.f32.mrb[0].mxu0
        %1086 = vdwg.mxu0
        %v1087 = vlaneseq
        %v1088 = vand.u32 %v1087, 127
        %v1089 = vadd.s32 %v1088, 128
        %s1090 = smul.u32 %s20, 256
        %v1091 = vstv %s1090
        %v1092 = vadd.s32 %v1088, %v1091
        %v1093 = vadd.s32 %v1089, %v1091
        %vm1094 = vcmp.lt.s32.totalorder %v1092, 300
        %vm1095 = vcmp.lt.s32.totalorder %v1093, 300
        %v1096 = vsel %vm1094, 1, 0
        %v1097 = vsel %vm1095, 1, 0
        %vm1098 = vcmp.eq.s32.totalorder %v1096, 1
        %vm1099 = vcmp.eq.s32.totalorder %v1097, 1
        %v1100 = vsel %vm1098, %v1081, 0.0
        %v1101 = vsel %vm1099, %v1083, 0.0
        %1102 = vst [vmem:[%s261] sm:$0xff] %v1100
        %1103 = vst [vmem:[%s261 + $0x8] sm:$0xff] %v1101
        %s1104 = sand.u32 %s138, 1
        %s1105 = sand.u32 %s138, 1
        %s1106 = smul.addr %s1105, 16
        %s1107 = scalar_lea.vmem [#allocation6], %s1106
        // Predicated region
        $region49: #{_attn_gated_call.1} parent=39 // pred_check
          %p1108 = pneg %p148
        $region50: #{_attn_gated_call.1} parent=39 // pred_check_branch
          %1110 = sbr.rel (%p1108) target = $region52
        $region51: #{_attn_gated_call.1} parent=39 // pred_region
          %s1111 = smul.u32 2, %s20
          %s1112 = ssub.s32 3, %s1111
          %p1113 = scmp.lt.s32.totalorder %s1112, 2
          %s1114 = scalar_select %p1113, %s1112, 2
          %s1115 = smul.u32 128, %s1114
          %p1116 = scmp.ne.s32.totalorder 0, %s1115
          %s1117 = smul.addr %s1111, 8
          %s1118 = scalar_lea.vmem %s5, %s1117
          %s1119 = smul.u32 %s1114, 8
          // Predicated region
          $region53: #{_attn_gated_call.1} parent=51 // pred_check
            %p1120 = pneg %p1116
          $region54: #{_attn_gated_call.1} parent=51 // pred_check_branch
            %1122 = sbr.rel (%p1120) target = $region56
          $region55: #{_attn_gated_call.1} parent=51 // pred_region
            %p1123 = scmp.lt.u32.totalorder %s1119, 8
            %p1124 = pneg %p1123
            // Predicated region
            $region57: #{_attn_gated_call.1} parent=55 // pred_check
              _
            $region58: #{_attn_gated_call.1} parent=55 // pred_check_branch
              %1126 = sbr.rel (%p1123) target = $region60
            $region59: #{_attn_gated_call.1} parent=55 // pred_region
              %s1141 = sand.u32 %s1119, 7
              %p1142 = scmp.eq.s32.totalorder %s1141, 0
              // Predicated region
              $region72: #{_attn_gated_call.1} parent=59 // pred_check
                %p1143 = pneg %p1142
              $region73: #{_attn_gated_call.1} parent=59 // pred_check_branch
                %1145 = sbr.rel (%p1143) target = $region75
              $region74: #{_attn_gated_call.1} parent=59 // pred_region
                %s1146 = sshrl.u32 %s1119, 3
                %s1147 = sshrl.u32 %s1146, 6
                // While loop
                $region76: #{_attn_gated_call.1} parent=74 // loop_pre_header
                  _
                $region77: #{_attn_gated_call.1} parent=74 // loop_header
                  %s1151 = sphi 0, %s1153
                  %p1152 = scmp.ge.s32.totalorder %s1151, %s1147
                  %s1156 = sphi 0, %s1289
                  %s1157 = sphi %s1107, %s1292
                  %s1158 = sphi %s1118, %s1293
                $region78: #{_attn_gated_call.1} parent=74 // loop_header_branch
                  %1155 = sbr.rel (%p1152) target = $region82
                $region79: #{_attn_gated_call.1} parent=74 // loop_body
                  %v1159 = vld [vmem:[%s1157] sm:$0xff]
                  %1160 = vst [vmem:[%s1158] sm:$0xff] %v1159
                  %v1161 = vld [vmem:[%s1157 + $0x8] sm:$0xff]
                  %1162 = vst [vmem:[%s1158 + $0x8] sm:$0xff] %v1161
                  %v1163 = vld [vmem:[%s1157 + $0x10] sm:$0xff]
                  %1164 = vst [vmem:[%s1158 + $0x10] sm:$0xff] %v1163
                  %v1165 = vld [vmem:[%s1157 + $0x18] sm:$0xff]
                  %1166 = vst [vmem:[%s1158 + $0x18] sm:$0xff] %v1165
                  %v1167 = vld [vmem:[%s1157 + $0x20] sm:$0xff]
                  %1168 = vst [vmem:[%s1158 + $0x20] sm:$0xff] %v1167
                  %v1169 = vld [vmem:[%s1157 + $0x28] sm:$0xff]
                  %1170 = vst [vmem:[%s1158 + $0x28] sm:$0xff] %v1169
                  %v1171 = vld [vmem:[%s1157 + $0x30] sm:$0xff]
                  %1172 = vst [vmem:[%s1158 + $0x30] sm:$0xff] %v1171
                  %v1173 = vld [vmem:[%s1157 + $0x38] sm:$0xff]
                  %1174 = vst [vmem:[%s1158 + $0x38] sm:$0xff] %v1173
                  %v1175 = vld [vmem:[%s1157 + $0x40] sm:$0xff]
                  %1176 = vst [vmem:[%s1158 + $0x40] sm:$0xff] %v1175
                  %v1177 = vld [vmem:[%s1157 + $0x48] sm:$0xff]
                  %1178 = vst [vmem:[%s1158 + $0x48] sm:$0xff] %v1177
                  %v1179 = vld [vmem:[%s1157 + $0x50] sm:$0xff]
                  %1180 = vst [vmem:[%s1158 + $0x50] sm:$0xff] %v1179
                  %v1181 = vld [vmem:[%s1157 + $0x58] sm:$0xff]
                  %1182 = vst [vmem:[%s1158 + $0x58] sm:$0xff] %v1181
                  %v1183 = vld [vmem:[%s1157 + $0x60] sm:$0xff]
                  %1184 = vst [vmem:[%s1158 + $0x60] sm:$0xff] %v1183
                  %v1185 = vld [vmem:[%s1157 + $0x68] sm:$0xff]
                  %1186 = vst [vmem:[%s1158 + $0x68] sm:$0xff] %v1185
                  %v1187 = vld [vmem:[%s1157 + $0x70] sm:$0xff]
                  %1188 = vst [vmem:[%s1158 + $0x70] sm:$0xff] %v1187
                  %v1189 = vld [vmem:[%s1157 + $0x78] sm:$0xff]
                  %1190 = vst [vmem:[%s1158 + $0x78] sm:$0xff] %v1189
                  %v1191 = vld [vmem:[%s1157 + $0x80] sm:$0xff]
                  %1192 = vst [vmem:[%s1158 + $0x80] sm:$0xff] %v1191
                  %v1193 = vld [vmem:[%s1157 + $0x88] sm:$0xff]
                  %1194 = vst [vmem:[%s1158 + $0x88] sm:$0xff] %v1193
                  %v1195 = vld [vmem:[%s1157 + $0x90] sm:$0xff]
                  %1196 = vst [vmem:[%s1158 + $0x90] sm:$0xff] %v1195
                  %v1197 = vld [vmem:[%s1157 + $0x98] sm:$0xff]
                  %1198 = vst [vmem:[%s1158 + $0x98] sm:$0xff] %v1197
                  %v1199 = vld [vmem:[%s1157 + $0xa0] sm:$0xff]
                  %1200 = vst [vmem:[%s1158 + $0xa0] sm:$0xff] %v1199
                  %v1201 = vld [vmem:[%s1157 + $0xa8] sm:$0xff]
                  %1202 = vst [vmem:[%s1158 + $0xa8] sm:$0xff] %v1201
                  %v1203 = vld [vmem:[%s1157 + $0xb0] sm:$0xff]
                  %1204 = vst [vmem:[%s1158 + $0xb0] sm:$0xff] %v1203
                  %v1205 = vld [vmem:[%s1157 + $0xb8] sm:$0xff]
                  %1206 = vst [vmem:[%s1158 + $0xb8] sm:$0xff] %v1205
                  %v1207 = vld [vmem:[%s1157 + $0xc0] sm:$0xff]
                  %1208 = vst [vmem:[%s1158 + $0xc0] sm:$0xff] %v1207
                  %v1209 = vld [vmem:[%s1157 + $0xc8] sm:$0xff]
                  %1210 = vst [vmem:[%s1158 + $0xc8] sm:$0xff] %v1209
                  %v1211 = vld [vmem:[%s1157 + $0xd0] sm:$0xff]
                  %1212 = vst [vmem:[%s1158 + $0xd0] sm:$0xff] %v1211
                  %v1213 = vld [vmem:[%s1157 + $0xd8] sm:$0xff]
                  %1214 = vst [vmem:[%s1158 + $0xd8] sm:$0xff] %v1213
                  %v1215 = vld [vmem:[%s1157 + $0xe0] sm:$0xff]
                  %1216 = vst [vmem:[%s1158 + $0xe0] sm:$0xff] %v1215
                  %v1217 = vld [vmem:[%s1157 + $0xe8] sm:$0xff]
                  %1218 = vst [vmem:[%s1158 + $0xe8] sm:$0xff] %v1217
                  %v1219 = vld [vmem:[%s1157 + $0xf0] sm:$0xff]
                  %1220 = vst [vmem:[%s1158 + $0xf0] sm:$0xff] %v1219
                  %v1221 = vld [vmem:[%s1157 + $0xf8] sm:$0xff]
                  %1222 = vst [vmem:[%s1158 + $0xf8] sm:$0xff] %v1221
                  %v1223 = vld [vmem:[%s1157 + $0x100] sm:$0xff]
                  %1224 = vst [vmem:[%s1158 + $0x100] sm:$0xff] %v1223
                  %v1225 = vld [vmem:[%s1157 + $0x108] sm:$0xff]
                  %1226 = vst [vmem:[%s1158 + $0x108] sm:$0xff] %v1225
                  %v1227 = vld [vmem:[%s1157 + $0x110] sm:$0xff]
                  %1228 = vst [vmem:[%s1158 + $0x110] sm:$0xff] %v1227
                  %v1229 = vld [vmem:[%s1157 + $0x118] sm:$0xff]
                  %1230 = vst [vmem:[%s1158 + $0x118] sm:$0xff] %v1229
                  %v1231 = vld [vmem:[%s1157 + $0x120] sm:$0xff]
                  %1232 = vst [vmem:[%s1158 + $0x120] sm:$0xff] %v1231
                  %v1233 = vld [vmem:[%s1157 + $0x128] sm:$0xff]
                  %1234 = vst [vmem:[%s1158 + $0x128] sm:$0xff] %v1233
                  %v1235 = vld [vmem:[%s1157 + $0x130] sm:$0xff]
                  %1236 = vst [vmem:[%s1158 + $0x130] sm:$0xff] %v1235
                  %v1237 = vld [vmem:[%s1157 + $0x138] sm:$0xff]
                  %1238 = vst [vmem:[%s1158 + $0x138] sm:$0xff] %v1237
                  %v1239 = vld [vmem:[%s1157 + $0x140] sm:$0xff]
                  %1240 = vst [vmem:[%s1158 + $0x140] sm:$0xff] %v1239
                  %v1241 = vld [vmem:[%s1157 + $0x148] sm:$0xff]
                  %1242 = vst [vmem:[%s1158 + $0x148] sm:$0xff] %v1241
                  %v1243 = vld [vmem:[%s1157 + $0x150] sm:$0xff]
                  %1244 = vst [vmem:[%s1158 + $0x150] sm:$0xff] %v1243
                  %v1245 = vld [vmem:[%s1157 + $0x158] sm:$0xff]
                  %1246 = vst [vmem:[%s1158 + $0x158] sm:$0xff] %v1245
                  %v1247 = vld [vmem:[%s1157 + $0x160] sm:$0xff]
                  %1248 = vst [vmem:[%s1158 + $0x160] sm:$0xff] %v1247
                  %v1249 = vld [vmem:[%s1157 + $0x168] sm:$0xff]
                  %1250 = vst [vmem:[%s1158 + $0x168] sm:$0xff] %v1249
                  %v1251 = vld [vmem:[%s1157 + $0x170] sm:$0xff]
                  %1252 = vst [vmem:[%s1158 + $0x170] sm:$0xff] %v1251
                  %v1253 = vld [vmem:[%s1157 + $0x178] sm:$0xff]
                  %1254 = vst [vmem:[%s1158 + $0x178] sm:$0xff] %v1253
                  %v1255 = vld [vmem:[%s1157 + $0x180] sm:$0xff]
                  %1256 = vst [vmem:[%s1158 + $0x180] sm:$0xff] %v1255
                  %v1257 = vld [vmem:[%s1157 + $0x188] sm:$0xff]
                  %1258 = vst [vmem:[%s1158 + $0x188] sm:$0xff] %v1257
                  %v1259 = vld [vmem:[%s1157 + $0x190] sm:$0xff]
                  %1260 = vst [vmem:[%s1158 + $0x190] sm:$0xff] %v1259
                  %v1261 = vld [vmem:[%s1157 + $0x198] sm:$0xff]
                  %1262 = vst [vmem:[%s1158 + $0x198] sm:$0xff] %v1261
                  %v1263 = vld [vmem:[%s1157 + $0x1a0] sm:$0xff]
                  %1264 = vst [vmem:[%s1158 + $0x1a0] sm:$0xff] %v1263
                  %v1265 = vld [vmem:[%s1157 + $0x1a8] sm:$0xff]
                  %1266 = vst [vmem:[%s1158 + $0x1a8] sm:$0xff] %v1265
                  %v1267 = vld [vmem:[%s1157 + $0x1b0] sm:$0xff]
                  %1268 = vst [vmem:[%s1158 + $0x1b0] sm:$0xff] %v1267
                  %v1269 = vld [vmem:[%s1157 + $0x1b8] sm:$0xff]
                  %1270 = vst [vmem:[%s1158 + $0x1b8] sm:$0xff] %v1269
                  %v1271 = vld [vmem:[%s1157 + $0x1c0] sm:$0xff]
                  %1272 = vst [vmem:[%s1158 + $0x1c0] sm:$0xff] %v1271
                  %v1273 = vld [vmem:[%s1157 + $0x1c8] sm:$0xff]
                  %1274 = vst [vmem:[%s1158 + $0x1c8] sm:$0xff] %v1273
                  %v1275 = vld [vmem:[%s1157 + $0x1d0] sm:$0xff]
                  %1276 = vst [vmem:[%s1158 + $0x1d0] sm:$0xff] %v1275
                  %v1277 = vld [vmem:[%s1157 + $0x1d8] sm:$0xff]
                  %1278 = vst [vmem:[%s1158 + $0x1d8] sm:$0xff] %v1277
                  %v1279 = vld [vmem:[%s1157 + $0x1e0] sm:$0xff]
                  %1280 = vst [vmem:[%s1158 + $0x1e0] sm:$0xff] %v1279
                  %v1281 = vld [vmem:[%s1157 + $0x1e8] sm:$0xff]
                  %1282 = vst [vmem:[%s1158 + $0x1e8] sm:$0xff] %v1281
                  %v1283 = vld [vmem:[%s1157 + $0x1f0] sm:$0xff]
                  %1284 = vst [vmem:[%s1158 + $0x1f0] sm:$0xff] %v1283
                  %v1285 = vld [vmem:[%s1157 + $0x1f8] sm:$0xff]
                  %1286 = vst [vmem:[%s1158 + $0x1f8] sm:$0xff] %v1285
                  %s1287 = sadd.s32 1, %s1156
                  %p1288 = scmp.ge.s32.totalorder %s1287, %s1147
                  %s1289 = scalar_select %p1288, 0, %s1287
                  %s1290 = smul.u32 %s1289, 512
                  %s1291 = smul.u32 %s1289, 512
                  %s1292 = scalar_lea.vmem %s1107, %s1290 [#allocation6]
                  %s1293 = scalar_lea.vmem %s1118, %s1291
                $region80: #{_attn_gated_call.1} parent=74 // loop_footer
                  %s1153 = sadd.s32 %s1151, 1
                $region81: #{_attn_gated_call.1} parent=74 // loop_footer_branch
                  %1150 = sbr.rel target = $region77
                $region82: #{_attn_gated_call.1} parent=74 // loop_exit
                  _
                %s1294 = sshrl.u32 %s1146, 6
                %s1295 = sand.u32 %s1146, 63
                %s1296 = smul.u32 %s1294, 64
                %s1297 = smul.u32 128, %s1296
                %s1298 = sshra.s32 %s1297, 4
                %s1299 = scalar_lea.vmem %s1107, %s1298 [#allocation6]
                %s1300 = smul.u32 128, %s1296
                %s1301 = sshra.s32 %s1300, 4
                %s1302 = scalar_lea.vmem %s1118, %s1301
                // While loop
                $region83: #{_attn_gated_call.1} parent=74 // loop_pre_header
                  _
                $region84: #{_attn_gated_call.1} parent=74 // loop_header
                  %s1306 = sphi 0, %s1308
                  %p1307 = scmp.ge.s32.totalorder %s1306, %s1295
                  %s1311 = sphi 0, %s1318
                  %s1312 = sphi %s1299, %s1321
                  %s1313 = sphi %s1302, %s1322
                $region85: #{_attn_gated_call.1} parent=74 // loop_header_branch
                  %1310 = sbr.rel (%p1307) target = $region89
                $region86: #{_attn_gated_call.1} parent=74 // loop_body
                  %v1314 = vld [vmem:[%s1312] sm:$0xff]
                  %1315 = vst [vmem:[%s1313] sm:$0xff] %v1314
                  %s1316 = sadd.s32 1, %s1311
                  %p1317 = scmp.ge.s32.totalorder %s1316, %s1295
                  %s1318 = scalar_select %p1317, 0, %s1316
                  %s1319 = smul.u32 %s1318, 8
                  %s1320 = smul.u32 %s1318, 8
                  %s1321 = scalar_lea.vmem %s1299, %s1319 [#allocation6]
                  %s1322 = scalar_lea.vmem %s1302, %s1320
                $region87: #{_attn_gated_call.1} parent=74 // loop_footer
                  %s1308 = sadd.s32 %s1306, 1
                $region88: #{_attn_gated_call.1} parent=74 // loop_footer_branch
                  %1305 = sbr.rel target = $region84
                $region89: #{_attn_gated_call.1} parent=74 // loop_exit
                  _
              $region75: #{_attn_gated_call.1} parent=59 // pred_fallthru
                _
              %p1323 = pneg %p1142
              // Predicated region
              $region90: #{_attn_gated_call.1} parent=59 // pred_check
                _
              $region91: #{_attn_gated_call.1} parent=59 // pred_check_branch
                %1325 = sbr.rel (%p1142) target = $region93
              $region92: #{_attn_gated_call.1} parent=59 // pred_region
                %s1326 = sand.u32 %s1119, 7
                %s1327 = ssub.s32 %s1119, %s1326
                %s1328 = scalar_lea.vmem %s1107, %s1327 [#allocation6]
                %s1329 = ssub.s32 %s1119, %s1326
                %s1330 = scalar_lea.vmem %s1118, %s1329
                %s1331 = sshrl.u32 %s1119, 3
                %s1332 = sshrl.u32 %s1331, 6
                // While loop
                $region94: #{_attn_gated_call.1} parent=92 // loop_pre_header
                  _
                $region95: #{_attn_gated_call.1} parent=92 // loop_header
                  %s1336 = sphi 0, %s1338
                  %p1337 = scmp.ge.s32.totalorder %s1336, %s1332
                  %s1341 = sphi 0, %s1474
                  %s1342 = sphi %s1107, %s1477
                  %s1343 = sphi %s1118, %s1478
                $region96: #{_attn_gated_call.1} parent=92 // loop_header_branch
                  %1340 = sbr.rel (%p1337) target = $region100
                $region97: #{_attn_gated_call.1} parent=92 // loop_body
                  %v1344 = vld [vmem:[%s1342] sm:$0xff]
                  %1345 = vst [vmem:[%s1343] sm:$0xff] %v1344
                  %v1346 = vld [vmem:[%s1342 + $0x8] sm:$0xff]
                  %1347 = vst [vmem:[%s1343 + $0x8] sm:$0xff] %v1346
                  %v1348 = vld [vmem:[%s1342 + $0x10] sm:$0xff]
                  %1349 = vst [vmem:[%s1343 + $0x10] sm:$0xff] %v1348
                  %v1350 = vld [vmem:[%s1342 + $0x18] sm:$0xff]
                  %1351 = vst [vmem:[%s1343 + $0x18] sm:$0xff] %v1350
                  %v1352 = vld [vmem:[%s1342 + $0x20] sm:$0xff]
                  %1353 = vst [vmem:[%s1343 + $0x20] sm:$0xff] %v1352
                  %v1354 = vld [vmem:[%s1342 + $0x28] sm:$0xff]
                  %1355 = vst [vmem:[%s1343 + $0x28] sm:$0xff] %v1354
                  %v1356 = vld [vmem:[%s1342 + $0x30] sm:$0xff]
                  %1357 = vst [vmem:[%s1343 + $0x30] sm:$0xff] %v1356
                  %v1358 = vld [vmem:[%s1342 + $0x38] sm:$0xff]
                  %1359 = vst [vmem:[%s1343 + $0x38] sm:$0xff] %v1358
                  %v1360 = vld [vmem:[%s1342 + $0x40] sm:$0xff]
                  %1361 = vst [vmem:[%s1343 + $0x40] sm:$0xff] %v1360
                  %v1362 = vld [vmem:[%s1342 + $0x48] sm:$0xff]
                  %1363 = vst [vmem:[%s1343 + $0x48] sm:$0xff] %v1362
                  %v1364 = vld [vmem:[%s1342 + $0x50] sm:$0xff]
                  %1365 = vst [vmem:[%s1343 + $0x50] sm:$0xff] %v1364
                  %v1366 = vld [vmem:[%s1342 + $0x58] sm:$0xff]
                  %1367 = vst [vmem:[%s1343 + $0x58] sm:$0xff] %v1366
                  %v1368 = vld [vmem:[%s1342 + $0x60] sm:$0xff]
                  %1369 = vst [vmem:[%s1343 + $0x60] sm:$0xff] %v1368
                  %v1370 = vld [vmem:[%s1342 + $0x68] sm:$0xff]
                  %1371 = vst [vmem:[%s1343 + $0x68] sm:$0xff] %v1370
                  %v1372 = vld [vmem:[%s1342 + $0x70] sm:$0xff]
                  %1373 = vst [vmem:[%s1343 + $0x70] sm:$0xff] %v1372
                  %v1374 = vld [vmem:[%s1342 + $0x78] sm:$0xff]
                  %1375 = vst [vmem:[%s1343 + $0x78] sm:$0xff] %v1374
                  %v1376 = vld [vmem:[%s1342 + $0x80] sm:$0xff]
                  %1377 = vst [vmem:[%s1343 + $0x80] sm:$0xff] %v1376
                  %v1378 = vld [vmem:[%s1342 + $0x88] sm:$0xff]
                  %1379 = vst [vmem:[%s1343 + $0x88] sm:$0xff] %v1378
                  %v1380 = vld [vmem:[%s1342 + $0x90] sm:$0xff]
                  %1381 = vst [vmem:[%s1343 + $0x90] sm:$0xff] %v1380
                  %v1382 = vld [vmem:[%s1342 + $0x98] sm:$0xff]
                  %1383 = vst [vmem:[%s1343 + $0x98] sm:$0xff] %v1382
                  %v1384 = vld [vmem:[%s1342 + $0xa0] sm:$0xff]
                  %1385 = vst [vmem:[%s1343 + $0xa0] sm:$0xff] %v1384
                  %v1386 = vld [vmem:[%s1342 + $0xa8] sm:$0xff]
                  %1387 = vst [vmem:[%s1343 + $0xa8] sm:$0xff] %v1386
                  %v1388 = vld [vmem:[%s1342 + $0xb0] sm:$0xff]
                  %1389 = vst [vmem:[%s1343 + $0xb0] sm:$0xff] %v1388
                  %v1390 = vld [vmem:[%s1342 + $0xb8] sm:$0xff]
                  %1391 = vst [vmem:[%s1343 + $0xb8] sm:$0xff] %v1390
                  %v1392 = vld [vmem:[%s1342 + $0xc0] sm:$0xff]
                  %1393 = vst [vmem:[%s1343 + $0xc0] sm:$0xff] %v1392
                  %v1394 = vld [vmem:[%s1342 + $0xc8] sm:$0xff]
                  %1395 = vst [vmem:[%s1343 + $0xc8] sm:$0xff] %v1394
                  %v1396 = vld [vmem:[%s1342 + $0xd0] sm:$0xff]
                  %1397 = vst [vmem:[%s1343 + $0xd0] sm:$0xff] %v1396
                  %v1398 = vld [vmem:[%s1342 + $0xd8] sm:$0xff]
                  %1399 = vst [vmem:[%s1343 + $0xd8] sm:$0xff] %v1398
                  %v1400 = vld [vmem:[%s1342 + $0xe0] sm:$0xff]
                  %1401 = vst [vmem:[%s1343 + $0xe0] sm:$0xff] %v1400
                  %v1402 = vld [vmem:[%s1342 + $0xe8] sm:$0xff]
                  %1403 = vst [vmem:[%s1343 + $0xe8] sm:$0xff] %v1402
                  %v1404 = vld [vmem:[%s1342 + $0xf0] sm:$0xff]
                  %1405 = vst [vmem:[%s1343 + $0xf0] sm:$0xff] %v1404
                  %v1406 = vld [vmem:[%s1342 + $0xf8] sm:$0xff]
                  %1407 = vst [vmem:[%s1343 + $0xf8] sm:$0xff] %v1406
                  %v1408 = vld [vmem:[%s1342 + $0x100] sm:$0xff]
                  %1409 = vst [vmem:[%s1343 + $0x100] sm:$0xff] %v1408
                  %v1410 = vld [vmem:[%s1342 + $0x108] sm:$0xff]
                  %1411 = vst [vmem:[%s1343 + $0x108] sm:$0xff] %v1410
                  %v1412 = vld [vmem:[%s1342 + $0x110] sm:$0xff]
                  %1413 = vst [vmem:[%s1343 + $0x110] sm:$0xff] %v1412
                  %v1414 = vld [vmem:[%s1342 + $0x118] sm:$0xff]
                  %1415 = vst [vmem:[%s1343 + $0x118] sm:$0xff] %v1414
                  %v1416 = vld [vmem:[%s1342 + $0x120] sm:$0xff]
                  %1417 = vst [vmem:[%s1343 + $0x120] sm:$0xff] %v1416
                  %v1418 = vld [vmem:[%s1342 + $0x128] sm:$0xff]
                  %1419 = vst [vmem:[%s1343 + $0x128] sm:$0xff] %v1418
                  %v1420 = vld [vmem:[%s1342 + $0x130] sm:$0xff]
                  %1421 = vst [vmem:[%s1343 + $0x130] sm:$0xff] %v1420
                  %v1422 = vld [vmem:[%s1342 + $0x138] sm:$0xff]
                  %1423 = vst [vmem:[%s1343 + $0x138] sm:$0xff] %v1422
                  %v1424 = vld [vmem:[%s1342 + $0x140] sm:$0xff]
                  %1425 = vst [vmem:[%s1343 + $0x140] sm:$0xff] %v1424
                  %v1426 = vld [vmem:[%s1342 + $0x148] sm:$0xff]
                  %1427 = vst [vmem:[%s1343 + $0x148] sm:$0xff] %v1426
                  %v1428 = vld [vmem:[%s1342 + $0x150] sm:$0xff]
                  %1429 = vst [vmem:[%s1343 + $0x150] sm:$0xff] %v1428
                  %v1430 = vld [vmem:[%s1342 + $0x158] sm:$0xff]
                  %1431 = vst [vmem:[%s1343 + $0x158] sm:$0xff] %v1430
                  %v1432 = vld [vmem:[%s1342 + $0x160] sm:$0xff]
                  %1433 = vst [vmem:[%s1343 + $0x160] sm:$0xff] %v1432
                  %v1434 = vld [vmem:[%s1342 + $0x168] sm:$0xff]
                  %1435 = vst [vmem:[%s1343 + $0x168] sm:$0xff] %v1434
                  %v1436 = vld [vmem:[%s1342 + $0x170] sm:$0xff]
                  %1437 = vst [vmem:[%s1343 + $0x170] sm:$0xff] %v1436
                  %v1438 = vld [vmem:[%s1342 + $0x178] sm:$0xff]
                  %1439 = vst [vmem:[%s1343 + $0x178] sm:$0xff] %v1438
                  %v1440 = vld [vmem:[%s1342 + $0x180] sm:$0xff]
                  %1441 = vst [vmem:[%s1343 + $0x180] sm:$0xff] %v1440
                  %v1442 = vld [vmem:[%s1342 + $0x188] sm:$0xff]
                  %1443 = vst [vmem:[%s1343 + $0x188] sm:$0xff] %v1442
                  %v1444 = vld [vmem:[%s1342 + $0x190] sm:$0xff]
                  %1445 = vst [vmem:[%s1343 + $0x190] sm:$0xff] %v1444
                  %v1446 = vld [vmem:[%s1342 + $0x198] sm:$0xff]
                  %1447 = vst [vmem:[%s1343 + $0x198] sm:$0xff] %v1446
                  %v1448 = vld [vmem:[%s1342 + $0x1a0] sm:$0xff]
                  %1449 = vst [vmem:[%s1343 + $0x1a0] sm:$0xff] %v1448
                  %v1450 = vld [vmem:[%s1342 + $0x1a8] sm:$0xff]
                  %1451 = vst [vmem:[%s1343 + $0x1a8] sm:$0xff] %v1450
                  %v1452 = vld [vmem:[%s1342 + $0x1b0] sm:$0xff]
                  %1453 = vst [vmem:[%s1343 + $0x1b0] sm:$0xff] %v1452
                  %v1454 = vld [vmem:[%s1342 + $0x1b8] sm:$0xff]
                  %1455 = vst [vmem:[%s1343 + $0x1b8] sm:$0xff] %v1454
                  %v1456 = vld [vmem:[%s1342 + $0x1c0] sm:$0xff]
                  %1457 = vst [vmem:[%s1343 + $0x1c0] sm:$0xff] %v1456
                  %v1458 = vld [vmem:[%s1342 + $0x1c8] sm:$0xff]
                  %1459 = vst [vmem:[%s1343 + $0x1c8] sm:$0xff] %v1458
                  %v1460 = vld [vmem:[%s1342 + $0x1d0] sm:$0xff]
                  %1461 = vst [vmem:[%s1343 + $0x1d0] sm:$0xff] %v1460
                  %v1462 = vld [vmem:[%s1342 + $0x1d8] sm:$0xff]
                  %1463 = vst [vmem:[%s1343 + $0x1d8] sm:$0xff] %v1462
                  %v1464 = vld [vmem:[%s1342 + $0x1e0] sm:$0xff]
                  %1465 = vst [vmem:[%s1343 + $0x1e0] sm:$0xff] %v1464
                  %v1466 = vld [vmem:[%s1342 + $0x1e8] sm:$0xff]
                  %1467 = vst [vmem:[%s1343 + $0x1e8] sm:$0xff] %v1466
                  %v1468 = vld [vmem:[%s1342 + $0x1f0] sm:$0xff]
                  %1469 = vst [vmem:[%s1343 + $0x1f0] sm:$0xff] %v1468
                  %v1470 = vld [vmem:[%s1342 + $0x1f8] sm:$0xff]
                  %1471 = vst [vmem:[%s1343 + $0x1f8] sm:$0xff] %v1470
                  %s1472 = sadd.s32 1, %s1341
                  %p1473 = scmp.ge.s32.totalorder %s1472, %s1332
                  %s1474 = scalar_select %p1473, 0, %s1472
                  %s1475 = smul.u32 %s1474, 512
                  %s1476 = smul.u32 %s1474, 512
                  %s1477 = scalar_lea.vmem %s1107, %s1475 [#allocation6]
                  %s1478 = scalar_lea.vmem %s1118, %s1476
                $region98: #{_attn_gated_call.1} parent=92 // loop_footer
                  %s1338 = sadd.s32 %s1336, 1
                $region99: #{_attn_gated_call.1} parent=92 // loop_footer_branch
                  %1335 = sbr.rel target = $region95
                $region100: #{_attn_gated_call.1} parent=92 // loop_exit
                  _
                %s1479 = sshrl.u32 %s1331, 6
                %s1480 = sand.u32 %s1331, 63
                %s1481 = smul.u32 %s1479, 64
                %s1482 = smul.u32 128, %s1481
                %s1483 = sshra.s32 %s1482, 4
                %s1484 = scalar_lea.vmem %s1107, %s1483 [#allocation6]
                %s1485 = smul.u32 128, %s1481
                %s1486 = sshra.s32 %s1485, 4
                %s1487 = scalar_lea.vmem %s1118, %s1486
                // While loop
                $region101: #{_attn_gated_call.1} parent=92 // loop_pre_header
                  _
                $region102: #{_attn_gated_call.1} parent=92 // loop_header
                  %s1491 = sphi 0, %s1493
                  %p1492 = scmp.ge.s32.totalorder %s1491, %s1480
                  %s1496 = sphi 0, %s1503
                  %s1497 = sphi %s1484, %s1506
                  %s1498 = sphi %s1487, %s1507
                $region103: #{_attn_gated_call.1} parent=92 // loop_header_branch
                  %1495 = sbr.rel (%p1492) target = $region107
                $region104: #{_attn_gated_call.1} parent=92 // loop_body
                  %v1499 = vld [vmem:[%s1497] sm:$0xff]
                  %1500 = vst [vmem:[%s1498] sm:$0xff] %v1499
                  %s1501 = sadd.s32 1, %s1496
                  %p1502 = scmp.ge.s32.totalorder %s1501, %s1480
                  %s1503 = scalar_select %p1502, 0, %s1501
                  %s1504 = smul.u32 %s1503, 8
                  %s1505 = smul.u32 %s1503, 8
                  %s1506 = scalar_lea.vmem %s1484, %s1504 [#allocation6]
                  %s1507 = scalar_lea.vmem %s1487, %s1505
                $region105: #{_attn_gated_call.1} parent=92 // loop_footer
                  %s1493 = sadd.s32 %s1491, 1
                $region106: #{_attn_gated_call.1} parent=92 // loop_footer_branch
                  %1490 = sbr.rel target = $region102
                $region107: #{_attn_gated_call.1} parent=92 // loop_exit
                  _
                %s1508 = sshllo.u32 0, %s1326
                loop: start=0, step=1, limit=1
                $region108: #{_attn_gated_call.1} parent=92 // loop_pre_header
                  _
                $region109: #{_attn_gated_call.1} parent=92 // loop_header
                  %s1510 = sphi 0, %s1514
                  %p1511 = scmp.ge.s32.totalorder %s1510, 1
                  %s1515 = sphi %s1328, %s1328
                  %s1516 = sphi %s1330, %s1330
                $region110: #{_attn_gated_call.1} parent=92 // loop_header_branch
                  %1513 = sbr.rel (%p1511) target = $region114
                $region111: #{_attn_gated_call.1} parent=92 // loop_body
                  %v1517 = vld [vmem:[%s1515] sm:%s1508]
                  %1518 = vst [vmem:[%s1516] sm:%s1508] %v1517
                $region112: #{_attn_gated_call.1} parent=92 // loop_footer
                  %s1514 = sadd.s32 1, %s1510
                $region113: #{_attn_gated_call.1} parent=92 // loop_footer_branch
                  %1509 = sbr.rel target = $region109
                $region114: #{_attn_gated_call.1} parent=92 // loop_exit
                  _
              $region93: #{_attn_gated_call.1} parent=59 // pred_fallthru
                _
            $region60: #{_attn_gated_call.1} parent=55 // pred_fallthru
              _
            // Predicated region
            $region61: #{_attn_gated_call.1} parent=55 // pred_check
              %p1127 = pneg %p1123
            $region62: #{_attn_gated_call.1} parent=55 // pred_check_branch
              %1129 = sbr.rel (%p1127) target = $region64
            $region63: #{_attn_gated_call.1} parent=55 // pred_region
              %s1130 = sshllo.u32 0, %s1119
              loop: start=0, step=1, limit=1
              $region65: #{_attn_gated_call.1} parent=63 // loop_pre_header
                _
              $region66: #{_attn_gated_call.1} parent=63 // loop_header
                %s1132 = sphi 0, %s1136
                %p1133 = scmp.ge.s32.totalorder %s1132, 1
                %s1137 = sphi %s1107, %s1107
                %s1138 = sphi %s1118, %s1118
              $region67: #{_attn_gated_call.1} parent=63 // loop_header_branch
                %1135 = sbr.rel (%p1133) target = $region71
              $region68: #{_attn_gated_call.1} parent=63 // loop_body
                %v1139 = vld [vmem:[%s1137] sm:%s1130]
                %1140 = vst [vmem:[%s1138] sm:%s1130] %v1139
              $region69: #{_attn_gated_call.1} parent=63 // loop_footer
                %s1136 = sadd.s32 1, %s1132
              $region70: #{_attn_gated_call.1} parent=63 // loop_footer_branch
                %1131 = sbr.rel target = $region66
              $region71: #{_attn_gated_call.1} parent=63 // loop_exit
                _
            $region64: #{_attn_gated_call.1} parent=55 // pred_fallthru
              _
          $region56: #{_attn_gated_call.1} parent=51 // pred_fallthru
            _
          %1519 = vnop
        $region52: #{_attn_gated_call.1} parent=39 // pred_fallthru
          _
      $region40: #{_attn_gated_call.1} parent=5 // pred_fallthru
        _
      %p1520 = scmp.le.s32.totalorder 2, %s15
      // Predicated region
      $region115: #{_attn_gated_call.1} parent=5 // pred_check
        %p1521 = pneg %p1520
      $region116: #{_attn_gated_call.1} parent=5 // pred_check_branch
        %1523 = sbr.rel (%p1521) target = $region118
      $region117: #{_attn_gated_call.1} parent=5 // pred_region
        %s1524 = ssub.s32 %s15, 2
        // Predicated region
        $region119: #{_attn_gated_call.1} parent=117 // pred_check
          %p1525 = pneg %p154
        $region120: #{_attn_gated_call.1} parent=117 // pred_check_branch
          %1527 = sbr.rel (%p1525) target = $region122
        $region121: #{_attn_gated_call.1} parent=117 // pred_region
          %s1528 = sand.u32 %s139, 1
          %s1529 = sand.u32 %s139, 1
          %s1530 = smul.addr %s1529, 16
          %s1531 = scalar_lea.vmem [#allocation6], %s1530
        $region122: #{_attn_gated_call.1} parent=117 // pred_fallthru
          _
      $region118: #{_attn_gated_call.1} parent=5 // pred_fallthru
        _
    $region6: #{_attn_gated_call.1} parent=1 // loop_footer
      %s19 = sadd.s32 1, %s15
    $region7: #{_attn_gated_call.1} parent=1 // loop_footer_branch
      %14 = sbr.rel target = $region3
    $region8: #{_attn_gated_call.1} parent=1 // loop_exit
      _
    %1532 = vsyncpa [#allocation3], 1
    %s1533 = scalar_lea.sflag [#allocation3], 1
    %1534 = vsyncpa %s1533, 1
    %1535 = vsyncpa [#allocation5], 1

// kernel: _attn_gated_call.1
$region0: #{_attn_gated_call.1}
  #allocation0 [shape = 'u32[]', space=smem, size = 0x4, offset = 0x4, fixed_abs, tag = 'smem constant byte address 0x4 - core index']
  #allocation1 [shape = 'u32[144,128]{1,0:T(1,128)}', space=vmem, size = 0x12000, scoped, tag = 'internal scratch']
  %s0 = inlined_call_operand.hbm [shape: f32[300,256], index: 0, kind: input, shape index: {}]
  %s1 = inlined_call_operand.hbm [shape: bf16[256,256], index: 1, kind: input, shape index: {}]
  %s2 = inlined_call_operand.vmem [shape: f32[1,256], index: 2, kind: input, shape index: {}]
  %s3 = inlined_call_operand.vmem [shape: bf16[8,128], index: 3, kind: input, shape index: {}]
  %s4 = inlined_call_operand.vmem [shape: f32[8,1], index: 4, kind: input, shape index: {}]
  %s5 = inlined_call_operand.vmem [shape: f32[8,300], index: 5, kind: output, shape index: {}]
  %s6 = sld [smem:[#allocation0]]
  $region123: #{_attn_gated_call.1} parent=0
    _
  %s8 = ssub.s32 1, %s6
  %s9 = scalar_select 0, %s8, %s6
  $region1: #{_attn_gated_call.1} parent=0
    #allocation2 [shape = 'u8[524288]{0}', space=vmem, size = 0x80000, scoped, tag = 'input window, operand 0']
    #allocation3 [shape = 's32[2]{0}', space=sflag, size = 0x8, scoped, tag = 'scoped memory for _attn_gated_call.1']
    #allocation4 [shape = 'u8[131072]{0}', space=vmem, size = 0x20000, scoped, tag = 'input window, operand 1, single buffered']
    #allocation5 [shape = 's32[1]{0}', space=sflag, size = 0x4, scoped, tag = 'scoped memory for _attn_gated_call.1']
    #allocation6 [shape = 'u8[16384]{0}', space=vmem, size = 0x4000, scoped, tag = 'output window, operand 0']
    %10 = vsyncpa [#allocation3], 0
    %s11 = scalar_lea.sflag [#allocation3], 1
    %12 = vsyncpa %s11, 0
    %13 = vsyncpa [#allocation5], 0
    loop: start=0, step=1, limit=4
    $region2: #{_attn_gated_call.1} parent=1 // loop_pre_header
      _
    $region3: #{_attn_gated_call.1} parent=1 // loop_header
      %s15 = sphi 0, %s19
      %p16 = scmp.ge.s32.totalorder %s15, 4
      %s25 = sphi 0, %s27
      %s28 = sphi 0, %s25
      %s29 = sphi 0, %s28
      %s45 = sphi 0, %s29
      %s49 = sphi 0, %s49
      %s51 = sphi 0, %s49
      %s52 = sphi 0, %s51
      %s66 = sphi 0, %s52
      %s70 = sphi 0, %s70
      %s72 = sphi 0, %s70
      %s73 = sphi 0, %s72
      %s87 = sphi 0, %s73
      %s91 = sphi 0, %s91
      %s93 = sphi 0, %s91
      %s94 = sphi 0, %s93
      %s108 = sphi 0, %s94
      %s112 = sphi 0, %s112
      %s114 = sphi 0, %s112
      %s115 = sphi 0, %s114
      %s129 = sphi 0, %s115
      %s135 = sphi 0, %s137
      %s138 = sphi 0, %s135
      %s139 = sphi 0, %s138
      %s155 = sphi 0, %s139
    $region4: #{_attn_gated_call.1} parent=1 // loop_header_branch
      %18 = sbr.rel (%p16) target = $region8
    $region5: #{_attn_gated_call.1} parent=1 // loop_body
      %s20 = ssub.s32 %s15, 1
      %s21 = ssub.s32 %s15, 2
      %s22 = sadd.s32 %s15, 1
      %s23 = ssub.s32 %s15, %s22
      %p24 = scmp.eq.s32.totalorder %s23, 0
      %s26 = sadd.s32 %s25, 1
      %s27 = scalar_select %p24, %s25, %s26
      %p30 = pneg %p24
      %p31 = scmp.eq.s32.totalorder %s15, 1
      %p32 = por %p30, %p31
      %p33 = scmp.ne.s32.totalorder %s25, %s28
      %p34 = scmp.eq.s32.totalorder %s15, 0
      %p35 = por %p33, %p34
      %p36 = scmp.ne.s32.totalorder %s25, %s28
      %p37 = scmp.eq.s32.totalorder %s20, 1
      %p38 = por %p36, %p37
      %p39 = scmp.ne.s32.totalorder %s28, %s29
      %p40 = scmp.eq.s32.totalorder %s20, 0
      %p41 = por %p39, %p40
      %p42 = scmp.ne.s32.totalorder %s28, %s29
      %p43 = scmp.eq.s32.totalorder %s21, 1
      %p44 = por %p42, %p43
      %p46 = scmp.ne.s32.totalorder %s29, %s45
      %p47 = scmp.eq.s32.totalorder %s21, 0
      %p48 = por %p46, %p47
      %s50 = sadd.s32 %s49, 1
      %p53 = scmp.eq.s32.totalorder %s15, 1
      %p54 = scmp.ne.s32.totalorder %s49, %s51
      %p55 = scmp.eq.s32.totalorder %s15, 0
      %p56 = por %p54, %p55
      %p57 = scmp.ne.s32.totalorder %s49, %s51
      %p58 = scmp.eq.s32.totalorder %s20, 1
      %p59 = por %p57, %p58
      %p60 = scmp.ne.s32.totalorder %s51, %s52
      %p61 = scmp.eq.s32.totalorder %s20, 0
      %p62 = por %p60, %p61
      %p63 = scmp.ne.s32.totalorder %s51, %s52
      %p64 = scmp.eq.s32.totalorder %s21, 1
      %p65 = por %p63, %p64
      %p67 = scmp.ne.s32.totalorder %s52, %s66
      %p68 = scmp.eq.s32.totalorder %s21, 0
      %p69 = por %p67, %p68
      %s71 = sadd.s32 %s70, 1
      %p74 = scmp.eq.s32.totalorder %s15, 1
      %p75 = scmp.ne.s32.totalorder %s70, %s72
      %p76 = scmp.eq.s32.totalorder %s15, 0
      %p77 = por %p75, %p76
      %p78 = scmp.ne.s32.totalorder %s70, %s72
      %p79 = scmp.eq.s32.totalorder %s20, 1
      %p80 = por %p78, %p79
      %p81 = scmp.ne.s32.totalorder %s72, %s73
      %p82 = scmp.eq.s32.totalorder %s20, 0
      %p83 = por %p81, %p82
      %p84 = scmp.ne.s32.totalorder %s72, %s73
      %p85 = scmp.eq.s32.totalorder %s21, 1
      %p86 = por %p84, %p85
      %p88 = scmp.ne.s32.totalorder %s73, %s87
      %p89 = scmp.eq.s32.totalorder %s21, 0
      %p90 = por %p88, %p89
      %s92 = sadd.s32 %s91, 1
      %p95 = scmp.eq.s32.totalorder %s15, 1
      %p96 = scmp.ne.s32.totalorder %s91, %s93
      %p97 = scmp.eq.s32.totalorder %s15, 0
      %p98 = por %p96, %p97
      %p99 = scmp.ne.s32.totalorder %s91, %s93
      %p100 = scmp.eq.s32.totalorder %s20, 1
      %p101 = por %p99, %p100
      %p102 = scmp.ne.s32.totalorder %s93, %s94
      %p103 = scmp.eq.s32.totalorder %s20, 0
      %p104 = por %p102, %p103
      %p105 = scmp.ne.s32.totalorder %s93, %s94
      %p106 = scmp.eq.s32.totalorder %s21, 1
      %p107 = por %p105, %p106
      %p109 = scmp.ne.s32.totalorder %s94, %s108
      %p110 = scmp.eq.s32.totalorder %s21, 0
      %p111 = por %p109, %p110
      %s113 = sadd.s32 %s112, 1
      %p116 = scmp.eq.s32.totalorder %s15, 1
      %p117 = scmp.ne.s32.totalorder %s112, %s114
      %p118 = scmp.eq.s32.totalorder %s15, 0
      %p119 = por %p117, %p118
      %p120 = scmp.ne.s32.totalorder %s112, %s114
      %p121 = scmp.eq.s32.totalorder %s20, 1
      %p122 = por %p120, %p121
      %p123 = scmp.ne.s32.totalorder %s114, %s115
      %p124 = scmp.eq.s32.totalorder %s20, 0
      %p125 = por %p123, %p124
      %p126 = scmp.ne.s32.totalorder %s114, %s115
      %p127 = scmp.eq.s32.totalorder %s21, 1
      %p128 = por %p126, %p127
      %p130 = scmp.ne.s32.totalorder %s115, %s129
      %p131 = scmp.eq.s32.totalorder %s21, 0
      %p132 = por %p130, %p131
      %s133 = ssub.s32 %s15, %s22
      %p134 = scmp.eq.s32.totalorder %s133, 0
      %s136 = sadd.s32 %s135, 1
      %s137 = scalar_select %p134, %s135, %s136
      %p140 = pneg %p134
      %p141 = scmp.eq.s32.totalorder %s15, 1
      %p142 = por %p140, %p141
      %p143 = scmp.ne.s32.totalorder %s135, %s138
      %p144 = scmp.eq.s32.totalorder %s15, 0
      %p145 = por %p143, %p144
      %p146 = scmp.ne.s32.totalorder %s135, %s138
      %p147 = scmp.eq.s32.totalorder %s20, 1
      %p148 = por %p146, %p147
      %p149 = scmp.ne.s32.totalorder %s138, %s139
      %p150 = scmp.eq.s32.totalorder %s20, 0
      %p151 = por %p149, %p150
      %p152 = scmp.ne.s32.totalorder %s138, %s139
      %p153 = scmp.eq.s32.totalorder %s21, 1
      %p154 = por %p152, %p153
      %p156 = scmp.ne.s32.totalorder %s139, %s155
      %p157 = scmp.eq.s32.totalorder %s21, 0
      %p158 = por %p156, %p157
      %p159 = scmp.le.s32.totalorder 1, %s15
      %p160 = scmp.lt.s32.totalorder %s15, 3
      %p161 = pnand %p159, %p160
      %p162 = pneg %p161
      // Predicated region
      $region9: #{_attn_gated_call.1} parent=5 // pred_check
        _
      $region10: #{_attn_gated_call.1} parent=5 // pred_check_branch
        %164 = sbr.rel (%p161) target = $region12
      $region11: #{_attn_gated_call.1} parent=5 // pred_region
        %s165 = ssub.s32 %s15, 1
        // Predicated region
        $region13: #{_attn_gated_call.1} parent=11 // pred_check
          %p166 = pneg %p62
        $region14: #{_attn_gated_call.1} parent=11 // pred_check_branch
          %168 = sbr.rel (%p166) target = $region16
        $region15: #{_attn_gated_call.1} parent=11 // pred_region
          %s170 = ssub.s32 4096, 4096
          %171 = vsyncadd [#allocation5], %s170
          %s172 = sshll.u32 [#allocation4], 4
          %s173 = int_to_ptr.vmem [resolvable:$true] %s172
          %178 = dma.hbm_to_vmem [thread:$0]  %s1, 4096, %s173, [#allocation5], 128, 128, 8
        $region16: #{_attn_gated_call.1} parent=11 // pred_fallthru
          _
        // Predicated region
        $region17: #{_attn_gated_call.1} parent=11 // pred_check
          %p179 = pneg %p83
        $region18: #{_attn_gated_call.1} parent=11 // pred_check_branch
          %181 = sbr.rel (%p179) target = $region20
        $region19: #{_attn_gated_call.1} parent=11 // pred_region
          _
        $region20: #{_attn_gated_call.1} parent=11 // pred_fallthru
          _
        // Predicated region
        $region21: #{_attn_gated_call.1} parent=11 // pred_check
          %p182 = pneg %p104
        $region22: #{_attn_gated_call.1} parent=11 // pred_check_branch
          %184 = sbr.rel (%p182) target = $region24
        $region23: #{_attn_gated_call.1} parent=11 // pred_region
          _
        $region24: #{_attn_gated_call.1} parent=11 // pred_fallthru
          _
        // Predicated region
        $region25: #{_attn_gated_call.1} parent=11 // pred_check
          %p185 = pneg %p125
        $region26: #{_attn_gated_call.1} parent=11 // pred_check_branch
          %187 = sbr.rel (%p185) target = $region28
        $region27: #{_attn_gated_call.1} parent=11 // pred_region
          _
        $region28: #{_attn_gated_call.1} parent=11 // pred_fallthru
          _
      $region12: #{_attn_gated_call.1} parent=5 // pred_fallthru
        _
      %p188 = scmp.lt.s32.totalorder %s15, 2
      // Predicated region
      $region29: #{_attn_gated_call.1} parent=5 // pred_check
        %p189 = pneg %p188
      $region30: #{_attn_gated_call.1} parent=5 // pred_check_branch
        %191 = sbr.rel (%p189) target = $region32
      $region31: #{_attn_gated_call.1} parent=5 // pred_region
        // Predicated region
        $region33: #{_attn_gated_call.1} parent=31 // pred_check
          %p192 = pneg %p35
        $region34: #{_attn_gated_call.1} parent=31 // pred_check_branch
          %194 = sbr.rel (%p192) target = $region36
        $region35: #{_attn_gated_call.1} parent=31 // pred_region
          %s195 = sand.u32 %s25, 1
          %s196 = scalar_lea.sflag [#allocation3], %s195
          %s197 = sand.u32 %s25, 1
          %s198 = smul.addr %s197, 512
          %s199 = scalar_lea.vmem [#allocation2], %s198
          %s200 = smul.u32 32, %s15
          %s201 = ssub.s32 38, %s200
          %p202 = scmp.lt.s32.totalorder %s201, 32
          %s203 = scalar_select %p202, %s201, 32
          %s204 = smul.u32 128, %s203
          %s205 = smul.u32 %s204, 2
          %s207 = ssub.s32 8192, %s205
          %208 = vsyncadd %s196, %s207
          %p209 = scmp.ne.s32.totalorder 0, %s205
          %s210 = smul.addr %s200, 2
          %s211 = smul.addr %s210, 128
          %s212 = scalar_lea.hbm %s0, %s211
          %s213 = smul.u32 16, %s203
          %s214 = sshll.u32 %s199, 4
          %s215 = int_to_ptr.vmem [resolvable:$true] %s214
          %s216 = sshll.u32 %s213, 4
          %220 = dma.hbm_to_vmem [thread:$0]  (%p209), %s212, %s216, %s215, %s196, 256, 256, 16
        $region36: #{_attn_gated_call.1} parent=31 // pred_fallthru
          _
      $region32: #{_attn_gated_call.1} parent=5 // pred_fallthru
        _
      %p221 = scmp.le.s32.totalorder 1, %s15
      %p222 = scmp.lt.s32.totalorder %s15, 3
      %p223 = pnand %p221, %p222
      %p224 = pneg %p223
      // Predicated region
      $region37: #{_attn_gated_call.1} parent=5 // pred_check
        _
      $region38: #{_attn_gated_call.1} parent=5 // pred_check_branch
        %226 = sbr.rel (%p223) target = $region40
      $region39: #{_attn_gated_call.1} parent=5 // pred_region
        %s227 = ssub.s32 %s15, 1
        %s228 = sand.u32 %s28, 1
        %s229 = scalar_lea.sflag [#allocation3], %s228
        %s230 = sand.u32 %s28, 1
        %s231 = smul.addr %s230, 512
        %s232 = scalar_lea.vmem [#allocation2], %s231
        // Predicated region
        $region41: #{_attn_gated_call.1} parent=39 // pred_check
          %p233 = pneg %p41
        $region42: #{_attn_gated_call.1} parent=39 // pred_check_branch
          %235 = sbr.rel (%p233) target = $region44
        $region43: #{_attn_gated_call.1} parent=39 // pred_region
          %236 = dma.done %s229, 8192
        $region44: #{_attn_gated_call.1} parent=39 // pred_fallthru
          _
        // Predicated region
        $region45: #{_attn_gated_call.1} parent=39 // pred_check
          %p237 = pneg %p62
        $region46: #{_attn_gated_call.1} parent=39 // pred_check_branch
          %239 = sbr.rel (%p237) target = $region48
        $region47: #{_attn_gated_call.1} parent=39 // pred_region
          %240 = dma.done [#allocation5], 4096
        $region48: #{_attn_gated_call.1} parent=39 // pred_fallthru
          _
        %s241 = sand.u32 %s28, 1
        %s242 = scalar_lea.sflag [#allocation3], %s241
        %s243 = sand.u32 %s28, 1
        %s244 = smul.addr %s243, 512
        %s245 = scalar_lea.vmem [#allocation2], %s244
        %p246 = pneg %p41
        %p247 = pneg %p38
        %p248 = pneg %p62
        %p249 = pneg %p59
        %p250 = pneg %p83
        %p251 = pneg %p80
        %p252 = pneg %p104
        %p253 = pneg %p101
        %p254 = pneg %p125
        %p255 = pneg %p122
        %p256 = pneg %p151
        %p257 = pneg %p148
        %s258 = sand.u32 %s138, 1
        %s259 = sand.u32 %s138, 1
        %s260 = smul.addr %s259, 16
        %s261 = scalar_lea.vmem [#allocation6], %s260
        %s262 = smul.u32 32, %s20
        %s263 = ssub.s32 38, %s262
        %p264 = scmp.lt.s32.totalorder %s263, 32
        %s265 = scalar_select %p264, %s263, 32
        %s266 = smul.u32 128, %s265
        %s267 = smul.u32 %s266, 2
        %s268 = smul.u32 2, %s20
        %s269 = ssub.s32 3, %s268
        %p270 = scmp.lt.s32.totalorder %s269, 2
        %s271 = scalar_select %p270, %s269, 2
        %s272 = smul.u32 128, %s271
        %v274 = vld [vmem:[%s232] sm:$0xff]
        %v275 = vld [vmem:[%s232 + $0x8] sm:$0xff]
        %v276 = vld [vmem:[%s232 + $0x10] sm:$0xff]
        %v277 = vld [vmem:[%s232 + $0x18] sm:$0xff]
        %v278 = vld [vmem:[%s232 + $0x20] sm:$0xff]
        %v279 = vld [vmem:[%s232 + $0x28] sm:$0xff]
        %v280 = vld [vmem:[%s232 + $0x30] sm:$0xff]
        %v281 = vld [vmem:[%s232 + $0x38] sm:$0xff]
        %v282 = vld [vmem:[%s232 + $0x40] sm:$0xff]
        %v283 = vld [vmem:[%s232 + $0x48] sm:$0xff]
        %v284 = vld [vmem:[%s232 + $0x50] sm:$0xff]
        %v285 = vld [vmem:[%s232 + $0x58] sm:$0xff]
        %v286 = vld [vmem:[%s232 + $0x60] sm:$0xff]
        %v287 = vld [vmem:[%s232 + $0x68] sm:$0xff]
        %v288 = vld [vmem:[%s232 + $0x70] sm:$0xff]
        %v289 = vld [vmem:[%s232 + $0x78] sm:$0xff]
        %v290 = vld [vmem:[%s232 + $0x80] sm:$0xff]
        %v291 = vld [vmem:[%s232 + $0x88] sm:$0xff]
        %v292 = vld [vmem:[%s232 + $0x90] sm:$0xff]
        %v293 = vld [vmem:[%s232 + $0x98] sm:$0xff]
        %v294 = vld [vmem:[%s232 + $0xa0] sm:$0xff]
        %v295 = vld [vmem:[%s232 + $0xa8] sm:$0xff]
        %v296 = vld [vmem:[%s232 + $0xb0] sm:$0xff]
        %v297 = vld [vmem:[%s232 + $0xb8] sm:$0xff]
        %v298 = vld [vmem:[%s232 + $0xc0] sm:$0xff]
        %v299 = vld [vmem:[%s232 + $0xc8] sm:$0xff]
        %v300 = vld [vmem:[%s232 + $0xd0] sm:$0xff]
        %v301 = vld [vmem:[%s232 + $0xd8] sm:$0xff]
        %v302 = vld [vmem:[%s232 + $0xe0] sm:$0xff]
        %v303 = vld [vmem:[%s232 + $0xe8] sm:$0xff]
        %v304 = vld [vmem:[%s232 + $0xf0] sm:$0xff]
        %v305 = vld [vmem:[%s232 + $0xf8] sm:$0xff]
        %v306 = vld [vmem:[%s232 + $0x100] sm:$0xff]
        %v307 = vld [vmem:[%s232 + $0x108] sm:$0xff]
        %v308 = vld [vmem:[%s232 + $0x110] sm:$0xff]
        %v309 = vld [vmem:[%s232 + $0x118] sm:$0xff]
        %v310 = vld [vmem:[%s232 + $0x120] sm:$0xff]
        %v311 = vld [vmem:[%s232 + $0x128] sm:$0xff]
        %v312 = vld [vmem:[%s232 + $0x130] sm:$0xff]
        %v313 = vld [vmem:[%s232 + $0x138] sm:$0xff]
        %v314 = vld [vmem:[%s232 + $0x140] sm:$0xff]
        %v315 = vld [vmem:[%s232 + $0x148] sm:$0xff]
        %v316 = vld [vmem:[%s232 + $0x150] sm:$0xff]
        %v317 = vld [vmem:[%s232 + $0x158] sm:$0xff]
        %v318 = vld [vmem:[%s232 + $0x160] sm:$0xff]
        %v319 = vld [vmem:[%s232 + $0x168] sm:$0xff]
        %v320 = vld [vmem:[%s232 + $0x170] sm:$0xff]
        %v321 = vld [vmem:[%s232 + $0x178] sm:$0xff]
        %v322 = vld [vmem:[%s232 + $0x180] sm:$0xff]
        %v323 = vld [vmem:[%s232 + $0x188] sm:$0xff]
        %v324 = vld [vmem:[%s232 + $0x190] sm:$0xff]
        %v325 = vld [vmem:[%s232 + $0x198] sm:$0xff]
        %v326 = vld [vmem:[%s232 + $0x1a0] sm:$0xff]
        %v327 = vld [vmem:[%s232 + $0x1a8] sm:$0xff]
        %v328 = vld [vmem:[%s232 + $0x1b0] sm:$0xff]
        %v329 = vld [vmem:[%s232 + $0x1b8] sm:$0xff]
        %v330 = vld [vmem:[%s232 + $0x1c0] sm:$0xff]
        %v331 = vld [vmem:[%s232 + $0x1c8] sm:$0xff]
        %v332 = vld [vmem:[%s232 + $0x1d0] sm:$0xff]
        %v333 = vld [vmem:[%s232 + $0x1d8] sm:$0xff]
        %v334 = vld [vmem:[%s232 + $0x1e0] sm:$0xff]
        %v335 = vld [vmem:[%s232 + $0x1e8] sm:$0xff]
        %v336 = vld [vmem:[%s232 + $0x1f0] sm:$0xff]
        %v337 = vld [vmem:[%s232 + $0x1f8] sm:$0xff]
        %v338 = vpack.c.bf16 %v276, %v274
        %v339 = vpack.c.bf16 %v277, %v275
        %v340 = vpack.c.bf16 %v280, %v278
        %v341 = vpack.c.bf16 %v281, %v279
        %v342 = vpack.c.bf16 %v284, %v282
        %v343 = vpack.c.bf16 %v285, %v283
        %v344 = vpack.c.bf16 %v288, %v286
        %v345 = vpack.c.bf16 %v289, %v287
        %v346 = vpack.c.bf16 %v292, %v290
        %v347 = vpack.c.bf16 %v293, %v291
        %v348 = vpack.c.bf16 %v296, %v294
        %v349 = vpack.c.bf16 %v297, %v295
        %v350 = vpack.c.bf16 %v300, %v298
        %v351 = vpack.c.bf16 %v301, %v299
        %v352 = vpack.c.bf16 %v304, %v302
        %v353 = vpack.c.bf16 %v305, %v303
        %v354 = vpack.c.bf16 %v308, %v306
        %v355 = vpack.c.bf16 %v309, %v307
        %v356 = vpack.c.bf16 %v312, %v310
        %v357 = vpack.c.bf16 %v313, %v311
        %v358 = vpack.c.bf16 %v316, %v314
        %v359 = vpack.c.bf16 %v317, %v315
        %v360 = vpack.c.bf16 %v320, %v318
        %v361 = vpack.c.bf16 %v321, %v319
        %v362 = vpack.c.bf16 %v324, %v322
        %v363 = vpack.c.bf16 %v325, %v323
        %v364 = vpack.c.bf16 %v328, %v326
        %v365 = vpack.c.bf16 %v329, %v327
        %v366 = vpack.c.bf16 %v332, %v330
        %v367 = vpack.c.bf16 %v333, %v331
        %v368 = vpack.c.bf16 %v336, %v334
        %v369 = vpack.c.bf16 %v337, %v335
        %v370 = vld [vmem:[#allocation4] sm:$0xff]
        %v371 = vld [vmem:[#allocation4 + $0x8] sm:$0xff]
        %v372 = vld [vmem:[#allocation4 + $0x10] sm:$0xff]
        %v373 = vld [vmem:[#allocation4 + $0x18] sm:$0xff]
        %v374 = vld [vmem:[#allocation4 + $0x20] sm:$0xff]
        %v375 = vld [vmem:[#allocation4 + $0x28] sm:$0xff]
        %v376 = vld [vmem:[#allocation4 + $0x30] sm:$0xff]
        %v377 = vld [vmem:[#allocation4 + $0x38] sm:$0xff]
        %v378 = vld [vmem:[#allocation4 + $0x40] sm:$0xff]
        %v379 = vld [vmem:[#allocation4 + $0x48] sm:$0xff]
        %v380 = vld [vmem:[#allocation4 + $0x50] sm:$0xff]
        %v381 = vld [vmem:[#allocation4 + $0x58] sm:$0xff]
        %v382 = vld [vmem:[#allocation4 + $0x60] sm:$0xff]
        %v383 = vld [vmem:[#allocation4 + $0x68] sm:$0xff]
        %v384 = vld [vmem:[#allocation4 + $0x70] sm:$0xff]
        %v385 = vld [vmem:[#allocation4 + $0x78] sm:$0xff]
        %v386 = vld [vmem:[#allocation4 + $0x80] sm:$0xff]
        %v387 = vld [vmem:[#allocation4 + $0x88] sm:$0xff]
        %v388 = vld [vmem:[#allocation4 + $0x90] sm:$0xff]
        %v389 = vld [vmem:[#allocation4 + $0x98] sm:$0xff]
        %v390 = vld [vmem:[#allocation4 + $0xa0] sm:$0xff]
        %v391 = vld [vmem:[#allocation4 + $0xa8] sm:$0xff]
        %v392 = vld [vmem:[#allocation4 + $0xb0] sm:$0xff]
        %v393 = vld [vmem:[#allocation4 + $0xb8] sm:$0xff]
        %v394 = vld [vmem:[#allocation4 + $0xc0] sm:$0xff]
        %v395 = vld [vmem:[#allocation4 + $0xc8] sm:$0xff]
        %v396 = vld [vmem:[#allocation4 + $0xd0] sm:$0xff]
        %v397 = vld [vmem:[#allocation4 + $0xd8] sm:$0xff]
        %v398 = vld [vmem:[#allocation4 + $0xe0] sm:$0xff]
        %v399 = vld [vmem:[#allocation4 + $0xe8] sm:$0xff]
        %v400 = vld [vmem:[#allocation4 + $0xf0] sm:$0xff]
        %v401 = vld [vmem:[#allocation4 + $0xf8] sm:$0xff]
        %v402 = vld [vmem:[%s2] sm:$0x3]
        %v404 = vlaneseq
        %v405 = vshrl.u32 %v404, 7
        %v406 = vsub.s32 0, %v405
        %v407 = vrot.slane %v402, %v406
        %v408 = vlaneseq
        %v409 = vshrl.u32 %v408, 7
        %v410 = vsub.s32 1, %v409
        %v411 = vrot.slane %v402, %v410
        %v446 = vunpack.c.l.b16 %v370
        %v447 = vunpack.c.h.b16 %v370
        %v448 = vunpack.c.l.b16 %v371
        %v449 = vunpack.c.h.b16 %v371
        %v450 = vunpack.c.l.b16 %v372
        %v451 = vunpack.c.h.b16 %v372
        %v452 = vunpack.c.l.b16 %v373
        %v453 = vunpack.c.h.b16 %v373
        %v454 = vunpack.c.l.b16 %v374
        %v455 = vunpack.c.h.b16 %v374
        %v456 = vunpack.c.l.b16 %v375
        %v457 = vunpack.c.h.b16 %v375
        %v458 = vunpack.c.l.b16 %v376
        %v459 = vunpack.c.h.b16 %v376
        %v460 = vunpack.c.l.b16 %v377
        %v461 = vunpack.c.h.b16 %v377
        %v462 = vunpack.c.l.b16 %v378
        %v463 = vunpack.c.h.b16 %v378
        %v464 = vunpack.c.l.b16 %v379
        %v465 = vunpack.c.h.b16 %v379
        %v466 = vunpack.c.l.b16 %v380
        %v467 = vunpack.c.h.b16 %v380
        %v468 = vunpack.c.l.b16 %v381
        %v469 = vunpack.c.h.b16 %v381
        %v470 = vunpack.c.l.b16 %v382
        %v471 = vunpack.c.h.b16 %v382
        %v472 = vunpack.c.l.b16 %v383
        %v473 = vunpack.c.h.b16 %v383
        %v474 = vunpack.c.l.b16 %v384
        %v475 = vunpack.c.h.b16 %v384
        %v476 = vunpack.c.l.b16 %v385
        %v477 = vunpack.c.h.b16 %v385
        %v478 = vunpack.c.l.b16 %v386
        %v479 = vunpack.c.h.b16 %v386
        %v480 = vunpack.c.l.b16 %v387
        %v481 = vunpack.c.h.b16 %v387
        %v482 = vunpack.c.l.b16 %v388
        %v483 = vunpack.c.h.b16 %v388
        %v484 = vunpack.c.l.b16 %v389
        %v485 = vunpack.c.h.b16 %v389
        %v486 = vunpack.c.l.b16 %v390
        %v487 = vunpack.c.h.b16 %v390
        %v488 = vunpack.c.l.b16 %v391
        %v489 = vunpack.c.h.b16 %v391
        %v490 = vunpack.c.l.b16 %v392
        %v491 = vunpack.c.h.b16 %v392
        %v492 = vunpack.c.l.b16 %v393
        %v493 = vunpack.c.h.b16 %v393
        %v494 = vunpack.c.l.b16 %v394
        %v495 = vunpack.c.h.b16 %v394
        %v496 = vunpack.c.l.b16 %v395
        %v497 = vunpack.c.h.b16 %v395
        %v498 = vunpack.c.l.b16 %v396
        %v499 = vunpack.c.h.b16 %v396
        %v500 = vunpack.c.l.b16 %v397
        %v501 = vunpack.c.h.b16 %v397
        %v502 = vunpack.c.l.b16 %v398
        %v503 = vunpack.c.h.b16 %v398
        %v504 = vunpack.c.l.b16 %v399
        %v505 = vunpack.c.h.b16 %v399
        %v506 = vunpack.c.l.b16 %v400
        %v507 = vunpack.c.h.b16 %v400
        %v508 = vunpack.c.l.b16 %v401
        %v509 = vunpack.c.h.b16 %v401
        %v510 = vpack.c.b16 %v448, %v446
        %v511 = vpack.c.b16 %v449, %v447
        %v512 = vpack.c.b16 %v452, %v450
        %v513 = vpack.c.b16 %v453, %v451
        %v514 = vpack.c.b16 %v456, %v454
        %v515 = vpack.c.b16 %v457, %v455
        %v516 = vpack.c.b16 %v460, %v458
        %v517 = vpack.c.b16 %v461, %v459
        %v518 = vpack.c.b16 %v464, %v462
        %v519 = vpack.c.b16 %v465, %v463
        %v520 = vpack.c.b16 %v468, %v466
        %v521 = vpack.c.b16 %v469, %v467
        %v522 = vpack.c.b16 %v472, %v470
        %v523 = vpack.c.b16 %v473, %v471
        %v524 = vpack.c.b16 %v476, %v474
        %v525 = vpack.c.b16 %v477, %v475
        %v526 = vpack.c.b16 %v480, %v478
        %v527 = vpack.c.b16 %v481, %v479
        %v528 = vpack.c.b16 %v484, %v482
        %v529 = vpack.c.b16 %v485, %v483
        %v530 = vpack.c.b16 %v488, %v486
        %v531 = vpack.c.b16 %v489, %v487
        %v532 = vpack.c.b16 %v492, %v490
        %v533 = vpack.c.b16 %v493, %v491
        %v534 = vpack.c.b16 %v496, %v494
        %v535 = vpack.c.b16 %v497, %v495
        %v536 = vpack.c.b16 %v500, %v498
        %v537 = vpack.c.b16 %v501, %v499
        %v538 = vpack.c.b16 %v504, %v502
        %v539 = vpack.c.b16 %v505, %v503
        %v540 = vpack.c.b16 %v508, %v506
        %v541 = vpack.c.b16 %v509, %v507
        %574 = vmatprep.subr.bf16.mxu0 %v511
        %575 = vmatpush1.bf16.msra.mxu0 %v510
        %576 = vmatprep.subr.bf16.mxu0 %v513
        %577 = vmatpush1.bf16.msra.mxu0 %v512
        %578 = vmatprep.subr.bf16.mxu0 %v515
        %579 = vmatpush1.bf16.msra.mxu0 %v514
        %580 = vmatprep.subr.bf16.mxu0 %v517
        %581 = vmatpush1.bf16.msra.mxu0 %v516
        %582 = vmatprep.subr.bf16.mxu0 %v519
        %583 = vmatpush1.bf16.msra.mxu0 %v518
        %584 = vmatprep.subr.bf16.mxu0 %v521
        %585 = vmatpush1.bf16.msra.mxu0 %v520
        %586 = vmatprep.subr.bf16.mxu0 %v523
        %587 = vmatpush1.bf16.msra.mxu0 %v522
        %588 = vmatprep.subr.bf16.mxu0 %v525
        %589 = vmatpush1.bf16.msra.mxu0 %v524
        %590 = vmatprep.subr.bf16.mxu0 %v527
        %591 = vmatpush1.bf16.msra.mxu0 %v526
        %592 = vmatprep.subr.bf16.mxu0 %v529
        %593 = vmatpush1.bf16.msra.mxu0 %v528
        %594 = vmatprep.subr.bf16.mxu0 %v531
        %595 = vmatpush1.bf16.msra.mxu0 %v530
        %596 = vmatprep.subr.bf16.mxu0 %v533
        %597 = vmatpush1.bf16.msra.mxu0 %v532
        %598 = vmatprep.subr.bf16.mxu0 %v535
        %599 = vmatpush1.bf16.msra.mxu0 %v534
        %600 = vmatprep.subr.bf16.mxu0 %v537
        %601 = vmatpush1.bf16.msra.mxu0 %v536
        %602 = vmatprep.subr.bf16.mxu0 %v539
        %603 = vmatpush1.bf16.msra.mxu0 %v538
        %604 = vmatprep.subr.bf16.mxu0 %v541
        %605 = vmatpush1.bf16.msra.mxu0 %v540
        %606 = vmatprep.mubr.bf16.mxu0 %v339
        %607 = vmatmul.mubr.bf16.gmra.mrb[0].mxu0 %v338
        %v608 = vpop.f32.mrb[0].mxu0
        %v609 = vadd.f32 %v407, %v608
        %v610 = vpop.f32.mrb[0].mxu0
        %v611 = vadd.f32 %v411, %v610
        %v612 = vpop.f32.mrb[0].mxu0
        %v613 = vadd.f32 %v407, %v612
        %v614 = vpop.f32.mrb[0].mxu0
        %v615 = vadd.f32 %v411, %v614
        %616 = vmatprep.mubr.bf16.mxu0 %v341
        %617 = vmatmul.mubr.bf16.gmra.mrb[0].mxu0 %v340
        %v618 = vpop.f32.mrb[0].mxu0
        %v619 = vadd.f32 %v407, %v618
        %v620 = vpop.f32.mrb[0].mxu0
        %v621 = vadd.f32 %v411, %v620
        %v622 = vpop.f32.mrb[0].mxu0
        %v623 = vadd.f32 %v407, %v622
        %v624 = vpop.f32.mrb[0].mxu0
        %v625 = vadd.f32 %v411, %v624
        %626 = vmatprep.mubr.bf16.mxu0 %v343
        %627 = vmatmul.mubr.bf16.gmra.mrb[0].mxu0 %v342
        %v628 = vpop.f32.mrb[0].mxu0
        %v629 = vadd.f32 %v407, %v628
        %v630 = vpop.f32.mrb[0].mxu0
        %v631 = vadd.f32 %v411, %v630
        %v632 = vpop.f32.mrb[0].mxu0
        %v633 = vadd.f32 %v407, %v632
        %v634 = vpop.f32.mrb[0].mxu0
        %v635 = vadd.f32 %v411, %v634
        %636 = vmatprep.mubr.bf16.mxu0 %v345
        %637 = vmatmul.mubr.bf16.gmra.mrb[0].mxu0 %v344
        %v638 = vpop.f32.mrb[0].mxu0
        %v639 = vadd.f32 %v407, %v638
        %v640 = vpop.f32.mrb[0].mxu0
        %v641 = vadd.f32 %v411, %v640
        %v642 = vpop.f32.mrb[0].mxu0
        %v643 = vadd.f32 %v407, %v642
        %v644 = vpop.f32.mrb[0].mxu0
        %v645 = vadd.f32 %v411, %v644
        %646 = vmatprep.mubr.bf16.mxu0 %v347
        %647 = vmatmul.mubr.bf16.gmra.mrb[0].mxu0 %v346
        %v648 = vpop.f32.mrb[0].mxu0
        %v649 = vadd.f32 %v407, %v648
        %v650 = vpop.f32.mrb[0].mxu0
        %v651 = vadd.f32 %v411, %v650
        %v652 = vpop.f32.mrb[0].mxu0
        %v653 = vadd.f32 %v407, %v652
        %v654 = vpop.f32.mrb[0].mxu0
        %v655 = vadd.f32 %v411, %v654
        %656 = vmatprep.mubr.bf16.mxu0 %v349
        %657 = vmatmul.mubr.bf16.gmra.mrb[0].mxu0 %v348
        %v658 = vpop.f32.mrb[0].mxu0
        %v659 = vadd.f32 %v407, %v658
        %v660 = vpop.f32.mrb[0].mxu0
        %v661 = vadd.f32 %v411, %v660
        %v662 = vpop.f32.mrb[0].mxu0
        %v663 = vadd.f32 %v407, %v662
        %v664 = vpop.f32.mrb[0].mxu0
        %v665 = vadd.f32 %v411, %v664
        %666 = vmatprep.mubr.bf16.mxu0 %v351
        %667 = vmatmul.mubr.bf16.gmra.mrb[0].mxu0 %v350
        %v668 = vpop.f32.mrb[0].mxu0
        %v669 = vadd.f32 %v407, %v668
        %v670 = vpop.f32.mrb[0].mxu0
        %v671 = vadd.f32 %v411, %v670
        %v672 = vpop.f32.mrb[0].mxu0
        %v673 = vadd.f32 %v407, %v672
        %v674 = vpop.f32.mrb[0].mxu0
        %v675 = vadd.f32 %v411, %v674
        %676 = vmatprep.mubr.bf16.mxu0 %v353
        %677 = vmatmul.mubr.bf16.gmra.mrb[0].mxu0 %v352
        %v678 = vpop.f32.mrb[0].mxu0
        %v679 = vadd.f32 %v407, %v678
        %v680 = vpop.f32.mrb[0].mxu0
        %v681 = vadd.f32 %v411, %v680
        %v682 = vpop.f32.mrb[0].mxu0
        %v683 = vadd.f32 %v407, %v682
        %v684 = vpop.f32.mrb[0].mxu0
        %v685 = vadd.f32 %v411, %v684
        %686 = vmatprep.mubr.bf16.mxu0 %v355
        %687 = vmatmul.mubr.bf16.gmra.mrb[0].mxu0 %v354
        %v688 = vpop.f32.mrb[0].mxu0
        %v689 = vadd.f32 %v407, %v688
        %v690 = vpop.f32.mrb[0].mxu0
        %v691 = vadd.f32 %v411, %v690
        %v692 = vpop.f32.mrb[0].mxu0
        %v693 = vadd.f32 %v407, %v692
        %v694 = vpop.f32.mrb[0].mxu0
        %v695 = vadd.f32 %v411, %v694
        %696 = vmatprep.mubr.bf16.mxu0 %v357
        %697 = vmatmul.mubr.bf16.gmra.mrb[0].mxu0 %v356
        %v698 = vpop.f32.mrb[0].mxu0
        %v699 = vadd.f32 %v407, %v698
        %v700 = vpop.f32.mrb[0].mxu0
        %v701 = vadd.f32 %v411, %v700
        %v702 = vpop.f32.mrb[0].mxu0
        %v703 = vadd.f32 %v407, %v702
        %v704 = vpop.f32.mrb[0].mxu0
        %v705 = vadd.f32 %v411, %v704
        %706 = vmatprep.mubr.bf16.mxu0 %v359
        %707 = vmatmul.mubr.bf16.gmra.mrb[0].mxu0 %v358
        %v708 = vpop.f32.mrb[0].mxu0
        %v709 = vadd.f32 %v407, %v708
        %v710 = vpop.f32.mrb[0].mxu0
        %v711 = vadd.f32 %v411, %v710
        %v712 = vpop.f32.mrb[0].mxu0
        %v713 = vadd.f32 %v407, %v712
        %v714 = vpop.f32.mrb[0].mxu0
        %v715 = vadd.f32 %v411, %v714
        %716 = vmatprep.mubr.bf16.mxu0 %v361
        %717 = vmatmul.mubr.bf16.gmra.mrb[0].mxu0 %v360
        %v718 = vpop.f32.mrb[0].mxu0
        %v719 = vadd.f32 %v407, %v718
        %v720 = vpop.f32.mrb[0].mxu0
        %v721 = vadd.f32 %v411, %v720
        %v722 = vpop.f32.mrb[0].mxu0
        %v723 = vadd.f32 %v407, %v722
        %v724 = vpop.f32.mrb[0].mxu0
        %v725 = vadd.f32 %v411, %v724
        %726 = vmatprep.mubr.bf16.mxu0 %v363
        %727 = vmatmul.mubr.bf16.gmra.mrb[0].mxu0 %v362
        %v728 = vpop.f32.mrb[0].mxu0
        %v729 = vadd.f32 %v407, %v728
        %v730 = vpop.f32.mrb[0].mxu0
        %v731 = vadd.f32 %v411, %v730
        %v732 = vpop.f32.mrb[0].mxu0
        %v733 = vadd.f32 %v407, %v732
        %v734 = vpop.f32.mrb[0].mxu0
        %v735 = vadd.f32 %v411, %v734
        %736 = vmatprep.mubr.bf16.mxu0 %v365
        %737 = vmatmul.mubr.bf16.gmra.mrb[0].mxu0 %v364
        %v738 = vpop.f32.mrb[0].mxu0
        %v739 = vadd.f32 %v407, %v738
        %v740 = vpop.f32.mrb[0].mxu0
        %v741 = vadd.f32 %v411, %v740
        %v742 = vpop.f32.mrb[0].mxu0
        %v743 = vadd.f32 %v407, %v742
        %v744 = vpop.f32.mrb[0].mxu0
        %v745 = vadd.f32 %v411, %v744
        %746 = vmatprep.mubr.bf16.mxu0 %v367
        %747 = vmatmul.mubr.bf16.gmra.mrb[0].mxu0 %v366
        %v748 = vpop.f32.mrb[0].mxu0
        %v749 = vadd.f32 %v407, %v748
        %v750 = vpop.f32.mrb[0].mxu0
        %v751 = vadd.f32 %v411, %v750
        %v752 = vpop.f32.mrb[0].mxu0
        %v753 = vadd.f32 %v407, %v752
        %v754 = vpop.f32.mrb[0].mxu0
        %v755 = vadd.f32 %v411, %v754
        %756 = vmatprep.mubr.bf16.mxu0 %v369
        %757 = vmatmul.mubr.bf16.gmra.mrb[0].mxu0 %v368
        %v758 = vpop.f32.mrb[0].mxu0
        %v759 = vadd.f32 %v407, %v758
        %v760 = vpop.f32.mrb[0].mxu0
        %v761 = vadd.f32 %v411, %v760
        %v762 = vpop.f32.mrb[0].mxu0
        %v763 = vadd.f32 %v407, %v762
        %v764 = vpop.f32.mrb[0].mxu0
        %v765 = vadd.f32 %v411, %v764
        %766 = vdwg.mxu0
        %v767 = vtanh.pop %v609
        %v768 = vtanh.pop %v613
        %v769 = vtanh.pop %v619
        %v770 = vtanh.pop %v623
        %v771 = vtanh.pop %v629
        %v772 = vtanh.pop %v633
        %v773 = vtanh.pop %v639
        %v774 = vtanh.pop %v643
        %v775 = vtanh.pop %v649
        %v776 = vtanh.pop %v653
        %v777 = vtanh.pop %v659
        %v778 = vtanh.pop %v663
        %v779 = vtanh.pop %v669
        %v780 = vtanh.pop %v673
        %v781 = vtanh.pop %v679
        %v782 = vtanh.pop %v683
        %v783 = vtanh.pop %v689
        %v784 = vtanh.pop %v693
        %v785 = vtanh.pop %v699
        %v786 = vtanh.pop %v703
        %v787 = vtanh.pop %v709
        %v788 = vtanh.pop %v713
        %v789 = vtanh.pop %v719
        %v790 = vtanh.pop %v723
        %v791 = vtanh.pop %v729
        %v792 = vtanh.pop %v733
        %v793 = vtanh.pop %v739
        %v794 = vtanh.pop %v743
        %v795 = vtanh.pop %v749
        %v796 = vtanh.pop %v753
        %v797 = vtanh.pop %v759
        %v798 = vtanh.pop %v763
        %v799 = vxor.u32 %v611, 2147483648
        %v800 = vxor.u32 %v615, 2147483648
        %v801 = vxor.u32 %v621, 2147483648
        %v802 = vxor.u32 %v625, 2147483648
        %v803 = vxor.u32 %v631, 2147483648
        %v804 = vxor.u32 %v635, 2147483648
        %v805 = vxor.u32 %v641, 2147483648
        %v806 = vxor.u32 %v645, 2147483648
        %v807 = vxor.u32 %v651, 2147483648
        %v808 = vxor.u32 %v655, 2147483648
        %v809 = vxor.u32 %v661, 2147483648
        %v810 = vxor.u32 %v665, 2147483648
        %v811 = vxor.u32 %v671, 2147483648
        %v812 = vxor.u32 %v675, 2147483648
        %v813 = vxor.u32 %v681, 2147483648
        %v814 = vxor.u32 %v685, 2147483648
        %v815 = vxor.u32 %v691, 2147483648
        %v816 = vxor.u32 %v695, 2147483648
        %v817 = vxor.u32 %v701, 2147483648
        %v818 = vxor.u32 %v705, 2147483648
        %v819 = vxor.u32 %v711, 2147483648
        %v820 = vxor.u32 %v715, 2147483648
        %v821 = vxor.u32 %v721, 2147483648
        %v822 = vxor.u32 %v725, 2147483648
        %v823 = vxor.u32 %v731, 2147483648
        %v824 = vxor.u32 %v735, 2147483648
        %v825 = vxor.u32 %v741, 2147483648
        %v826 = vxor.u32 %v745, 2147483648
        %v827 = vxor.u32 %v751, 2147483648
        %v828 = vxor.u32 %v755, 2147483648
        %v829 = vxor.u32 %v761, 2147483648
        %v830 = vxor.u32 %v765, 2147483648
        %v831 = vmul.f32 %v799, 1.442695
        %v832 = vpow.pop %v831
        %v833 = vmul.f32 %v800, 1.442695
        %v834 = vpow.pop %v833
        %v835 = vmul.f32 %v801, 1.442695
        %v836 = vpow.pop %v835
        %v837 = vmul.f32 %v802, 1.442695
        %v838 = vpow.pop %v837
        %v839 = vmul.f32 %v803, 1.442695
        %v840 = vpow.pop %v839
        %v841 = vmul.f32 %v804, 1.442695
        %v842 = vpow.pop %v841
        %v843 = vmul.f32 %v805, 1.442695
        %v844 = vpow.pop %v843
        %v845 = vmul.f32 %v806, 1.442695
        %v846 = vpow.pop %v845
        %v847 = vmul.f32 %v807, 1.442695
        %v848 = vpow.pop %v847
        %v849 = vmul.f32 %v808, 1.442695
        %v850 = vpow.pop %v849
        %v851 = vmul.f32 %v809, 1.442695
        %v852 = vpow.pop %v851
        %v853 = vmul.f32 %v810, 1.442695
        %v854 = vpow.pop %v853
        %v855 = vmul.f32 %v811, 1.442695
        %v856 = vpow.pop %v855
        %v857 = vmul.f32 %v812, 1.442695
        %v858 = vpow.pop %v857
        %v859 = vmul.f32 %v813, 1.442695
        %v860 = vpow.pop %v859
        %v861 = vmul.f32 %v814, 1.442695
        %v862 = vpow.pop %v861
        %v863 = vmul.f32 %v815, 1.442695
        %v864 = vpow.pop %v863
        %v865 = vmul.f32 %v816, 1.442695
        %v866 = vpow.pop %v865
        %v867 = vmul.f32 %v817, 1.442695
        %v868 = vpow.pop %v867
        %v869 = vmul.f32 %v818, 1.442695
        %v870 = vpow.pop %v869
        %v871 = vmul.f32 %v819, 1.442695
        %v872 = vpow.pop %v871
        %v873 = vmul.f32 %v820, 1.442695
        %v874 = vpow.pop %v873
        %v875 = vmul.f32 %v821, 1.442695
        %v876 = vpow.pop %v875
        %v877 = vmul.f32 %v822, 1.442695
        %v878 = vpow.pop %v877
        %v879 = vmul.f32 %v823, 1.442695
        %v880 = vpow.pop %v879
        %v881 = vmul.f32 %v824, 1.442695
        %v882 = vpow.pop %v881
        %v883 = vmul.f32 %v825, 1.442695
        %v884 = vpow.pop %v883
        %v885 = vmul.f32 %v826, 1.442695
        %v886 = vpow.pop %v885
        %v887 = vmul.f32 %v827, 1.442695
        %v888 = vpow.pop %v887
        %v889 = vmul.f32 %v828, 1.442695
        %v890 = vpow.pop %v889
        %v891 = vmul.f32 %v829, 1.442695
        %v892 = vpow.pop %v891
        %v893 = vmul.f32 %v830, 1.442695
        %v894 = vpow.pop %v893
        %v895 = vadd.f32 %v832, 1.0
        %v896 = vadd.f32 %v834, 1.0
        %v897 = vadd.f32 %v836, 1.0
        %v898 = vadd.f32 %v838, 1.0
        %v899 = vadd.f32 %v840, 1.0
        %v900 = vadd.f32 %v842, 1.0
        %v901 = vadd.f32 %v844, 1.0
        %v902 = vadd.f32 %v846, 1.0
        %v903 = vadd.f32 %v848, 1.0
        %v904 = vadd.f32 %v850, 1.0
        %v905 = vadd.f32 %v852, 1.0
        %v906 = vadd.f32 %v854, 1.0
        %v907 = vadd.f32 %v856, 1.0
        %v908 = vadd.f32 %v858, 1.0
        %v909 = vadd.f32 %v860, 1.0
        %v910 = vadd.f32 %v862, 1.0
        %v911 = vadd.f32 %v864, 1.0
        %v912 = vadd.f32 %v866, 1.0
        %v913 = vadd.f32 %v868, 1.0
        %v914 = vadd.f32 %v870, 1.0
        %v915 = vadd.f32 %v872, 1.0
        %v916 = vadd.f32 %v874, 1.0
        %v917 = vadd.f32 %v876, 1.0
        %v918 = vadd.f32 %v878, 1.0
        %v919 = vadd.f32 %v880, 1.0
        %v920 = vadd.f32 %v882, 1.0
        %v921 = vadd.f32 %v884, 1.0
        %v922 = vadd.f32 %v886, 1.0
        %v923 = vadd.f32 %v888, 1.0
        %v924 = vadd.f32 %v890, 1.0
        %v925 = vadd.f32 %v892, 1.0
        %v926 = vadd.f32 %v894, 1.0
        %v927 = vrcp.pop %v895
        %v928 = vmul.f32 1.0, %v927
        %v929 = vrcp.pop %v896
        %v930 = vmul.f32 1.0, %v929
        %v931 = vrcp.pop %v897
        %v932 = vmul.f32 1.0, %v931
        %v933 = vrcp.pop %v898
        %v934 = vmul.f32 1.0, %v933
        %v935 = vrcp.pop %v899
        %v936 = vmul.f32 1.0, %v935
        %v937 = vrcp.pop %v900
        %v938 = vmul.f32 1.0, %v937
        %v939 = vrcp.pop %v901
        %v940 = vmul.f32 1.0, %v939
        %v941 = vrcp.pop %v902
        %v942 = vmul.f32 1.0, %v941
        %v943 = vrcp.pop %v903
        %v944 = vmul.f32 1.0, %v943
        %v945 = vrcp.pop %v904
        %v946 = vmul.f32 1.0, %v945
        %v947 = vrcp.pop %v905
        %v948 = vmul.f32 1.0, %v947
        %v949 = vrcp.pop %v906
        %v950 = vmul.f32 1.0, %v949
        %v951 = vrcp.pop %v907
        %v952 = vmul.f32 1.0, %v951
        %v953 = vrcp.pop %v908
        %v954 = vmul.f32 1.0, %v953
        %v955 = vrcp.pop %v909
        %v956 = vmul.f32 1.0, %v955
        %v957 = vrcp.pop %v910
        %v958 = vmul.f32 1.0, %v957
        %v959 = vrcp.pop %v911
        %v960 = vmul.f32 1.0, %v959
        %v961 = vrcp.pop %v912
        %v962 = vmul.f32 1.0, %v961
        %v963 = vrcp.pop %v913
        %v964 = vmul.f32 1.0, %v963
        %v965 = vrcp.pop %v914
        %v966 = vmul.f32 1.0, %v965
        %v967 = vrcp.pop %v915
        %v968 = vmul.f32 1.0, %v967
        %v969 = vrcp.pop %v916
        %v970 = vmul.f32 1.0, %v969
        %v971 = vrcp.pop %v917
        %v972 = vmul.f32 1.0, %v971
        %v973 = vrcp.pop %v918
        %v974 = vmul.f32 1.0, %v973
        %v975 = vrcp.pop %v919
        %v976 = vmul.f32 1.0, %v975
        %v977 = vrcp.pop %v920
        %v978 = vmul.f32 1.0, %v977
        %v979 = vrcp.pop %v921
        %v980 = vmul.f32 1.0, %v979
        %v981 = vrcp.pop %v922
        %v982 = vmul.f32 1.0, %v981
        %v983 = vrcp.pop %v923
        %v984 = vmul.f32 1.0, %v983
        %v985 = vrcp.pop %v924
        %v986 = vmul.f32 1.0, %v985
        %v987 = vrcp.pop %v925
        %v988 = vmul.f32 1.0, %v987
        %v989 = vrcp.pop %v926
        %v990 = vmul.f32 1.0, %v989
        %v991 = vmul.f32 %v767, %v928
        %v992 = vmul.f32 %v768, %v930
        %v993 = vmul.f32 %v769, %v932
        %v994 = vmul.f32 %v770, %v934
        %v995 = vmul.f32 %v771, %v936
        %v996 = vmul.f32 %v772, %v938
        %v997 = vmul.f32 %v773, %v940
        %v998 = vmul.f32 %v774, %v942
        %v999 = vmul.f32 %v775, %v944
        %v1000 = vmul.f32 %v776, %v946
        %v1001 = vmul.f32 %v777, %v948
        %v1002 = vmul.f32 %v778, %v950
        %v1003 = vmul.f32 %v779, %v952
        %v1004 = vmul.f32 %v780, %v954
        %v1005 = vmul.f32 %v781, %v956
        %v1006 = vmul.f32 %v782, %v958
        %v1007 = vmul.f32 %v783, %v960
        %v1008 = vmul.f32 %v784, %v962
        %v1009 = vmul.f32 %v785, %v964
        %v1010 = vmul.f32 %v786, %v966
        %v1011 = vmul.f32 %v787, %v968
        %v1012 = vmul.f32 %v788, %v970
        %v1013 = vmul.f32 %v789, %v972
        %v1014 = vmul.f32 %v790, %v974
        %v1015 = vmul.f32 %v791, %v976
        %v1016 = vmul.f32 %v792, %v978
        %v1017 = vmul.f32 %v793, %v980
        %v1018 = vmul.f32 %v794, %v982
        %v1019 = vmul.f32 %v795, %v984
        %v1020 = vmul.f32 %v796, %v986
        %v1021 = vmul.f32 %v797, %v988
        %v1022 = vmul.f32 %v798, %v990
        %v1023 = vpack.c.bf16 %v992, %v991
        %v1024 = vpack.c.bf16 %v994, %v993
        %v1025 = vpack.c.bf16 %v996, %v995
        %v1026 = vpack.c.bf16 %v998, %v997
        %v1027 = vpack.c.bf16 %v1000, %v999
        %v1028 = vpack.c.bf16 %v1002, %v1001
        %v1029 = vpack.c.bf16 %v1004, %v1003
        %v1030 = vpack.c.bf16 %v1006, %v1005
        %v1031 = vpack.c.bf16 %v1008, %v1007
        %v1032 = vpack.c.bf16 %v1010, %v1009
        %v1033 = vpack.c.bf16 %v1012, %v1011
        %v1034 = vpack.c.bf16 %v1014, %v1013
        %v1035 = vpack.c.bf16 %v1016, %v1015
        %v1036 = vpack.c.bf16 %v1018, %v1017
        %v1037 = vpack.c.bf16 %v1020, %v1019
        %v1038 = vpack.c.bf16 %v1022, %v1021
        %v1039 = vld [vmem:[%s3] sm:$0xf]
        %v1040 = vld [vmem:[%s4] sm:$0xff]
        %1042 = vset.pattern.permute.xlu0 0
        %1043 = vperm.xlu0 %1042, %v1040
        %v1044 = vpop.permute.xlu0 %1043
        %1046 = vmatprep.subr.bf16.mxu0 0
        %1047 = vmatpush1.bf16.xpose.msra.mxu0 %v1023
        %1048 = vmatprep.subr.bf16.mxu0 0
        %1049 = vmatpush1.bf16.xpose.msra.mxu0 %v1024
        %1050 = vmatprep.subr.bf16.mxu0 0
        %1051 = vmatpush1.bf16.xpose.msra.mxu0 %v1025
        %1052 = vmatprep.subr.bf16.mxu0 0
        %1053 = vmatpush1.bf16.xpose.msra.mxu0 %v1026
        %1054 = vmatprep.subr.bf16.mxu0 0
        %1055 = vmatpush1.bf16.xpose.msra.mxu0 %v1027
        %1056 = vmatprep.subr.bf16.mxu0 0
        %1057 = vmatpush1.bf16.xpose.msra.mxu0 %v1028
        %1058 = vmatprep.subr.bf16.mxu0 0
        %1059 = vmatpush1.bf16.xpose.msra.mxu0 %v1029
        %1060 = vmatprep.subr.bf16.mxu0 0
        %1061 = vmatpush1.bf16.xpose.msra.mxu0 %v1030
        %1062 = vmatprep.subr.bf16.mxu0 0
        %1063 = vmatpush1.bf16.xpose.msra.mxu0 %v1031
        %1064 = vmatprep.subr.bf16.mxu0 0
        %1065 = vmatpush1.bf16.xpose.msra.mxu0 %v1032
        %1066 = vmatprep.subr.bf16.mxu0 0
        %1067 = vmatpush1.bf16.xpose.msra.mxu0 %v1033
        %1068 = vmatprep.subr.bf16.mxu0 0
        %1069 = vmatpush1.bf16.xpose.msra.mxu0 %v1034
        %1070 = vmatprep.subr.bf16.mxu0 0
        %1071 = vmatpush1.bf16.xpose.msra.mxu0 %v1035
        %1072 = vmatprep.subr.bf16.mxu0 0
        %1073 = vmatpush1.bf16.xpose.msra.mxu0 %v1036
        %1074 = vmatprep.subr.bf16.mxu0 0
        %1075 = vmatpush1.bf16.xpose.msra.mxu0 %v1037
        %1076 = vmatprep.subr.bf16.mxu0 0
        %1077 = vmatpush1.bf16.xpose.msra.mxu0 %v1038
        %1078 = vmatprep.mubr.bf16.mxu0 0
        %1079 = vmatmul.mubr.bf16.gmra.mrb[0].mxu0 %v1039
        %v1080 = vpop.f32.mrb[0].mxu0
        %v1081 = vadd.f32 %v1044, %v1080
        %v1082 = vpop.f32.mrb[0].mxu0
        %v1083 = vadd.f32 %v1044, %v1082
        %v1084 = vpop.f32.mrb[0].mxu0
        %v1085 = vpop.f32.mrb[0].mxu0
        %1086 = vdwg.mxu0
        %v1087 = vlaneseq
        %v1088 = vand.u32 %v1087, 127
        %v1089 = vadd.s32 %v1088, 128
        %s1090 = smul.u32 %s20, 256
        %v1091 = vstv %s1090
        %v1092 = vadd.s32 %v1088, %v1091
        %v1093 = vadd.s32 %v1089, %v1091
        %vm1094 = vcmp.lt.s32.totalorder %v1092, 300
        %vm1095 = vcmp.lt.s32.totalorder %v1093, 300
        %v1096 = vsel %vm1094, 1, 0
        %v1097 = vsel %vm1095, 1, 0
        %vm1098 = vcmp.eq.s32.totalorder %v1096, 1
        %vm1099 = vcmp.eq.s32.totalorder %v1097, 1
        %v1100 = vsel %vm1098, %v1081, 0.0
        %v1101 = vsel %vm1099, %v1083, 0.0
        %1102 = vst [vmem:[%s261] sm:$0xff] %v1100
        %1103 = vst [vmem:[%s261 + $0x8] sm:$0xff] %v1101
        %s1104 = sand.u32 %s138, 1
        %s1105 = sand.u32 %s138, 1
        %s1106 = smul.addr %s1105, 16
        %s1107 = scalar_lea.vmem [#allocation6], %s1106
        // Predicated region
        $region49: #{_attn_gated_call.1} parent=39 // pred_check
          %p1108 = pneg %p148
        $region50: #{_attn_gated_call.1} parent=39 // pred_check_branch
          %1110 = sbr.rel (%p1108) target = $region52
        $region51: #{_attn_gated_call.1} parent=39 // pred_region
          %s1111 = smul.u32 2, %s20
          %s1112 = ssub.s32 3, %s1111
          %p1113 = scmp.lt.s32.totalorder %s1112, 2
          %s1114 = scalar_select %p1113, %s1112, 2
          %s1115 = smul.u32 128, %s1114
          %p1116 = scmp.ne.s32.totalorder 0, %s1115
          %s1117 = smul.addr %s1111, 8
          %s1118 = scalar_lea.vmem %s5, %s1117
          %s1119 = smul.u32 %s1114, 8
          // Predicated region
          $region53: #{_attn_gated_call.1} parent=51 // pred_check
            %p1120 = pneg %p1116
          $region54: #{_attn_gated_call.1} parent=51 // pred_check_branch
            %1122 = sbr.rel (%p1120) target = $region56
          $region55: #{_attn_gated_call.1} parent=51 // pred_region
            %p1123 = scmp.lt.u32.totalorder %s1119, 8
            %p1124 = pneg %p1123
            // Predicated region
            $region57: #{_attn_gated_call.1} parent=55 // pred_check
              _
            $region58: #{_attn_gated_call.1} parent=55 // pred_check_branch
              %1126 = sbr.rel (%p1123) target = $region60
            $region59: #{_attn_gated_call.1} parent=55 // pred_region
              %s1141 = sand.u32 %s1119, 7
              %p1142 = scmp.eq.s32.totalorder %s1141, 0
              // Predicated region
              $region72: #{_attn_gated_call.1} parent=59 // pred_check
                %p1143 = pneg %p1142
              $region73: #{_attn_gated_call.1} parent=59 // pred_check_branch
                %1145 = sbr.rel (%p1143) target = $region75
              $region74: #{_attn_gated_call.1} parent=59 // pred_region
                %s1146 = sshrl.u32 %s1119, 3
                %s1147 = sshrl.u32 %s1146, 6
                // While loop
                $region76: #{_attn_gated_call.1} parent=74 // loop_pre_header
                  _
                $region77: #{_attn_gated_call.1} parent=74 // loop_header
                  %s1151 = sphi 0, %s1153
                  %p1152 = scmp.ge.s32.totalorder %s1151, %s1147
                  %s1156 = sphi 0, %s1289
                  %s1157 = sphi %s1107, %s1292
                  %s1158 = sphi %s1118, %s1293
                $region78: #{_attn_gated_call.1} parent=74 // loop_header_branch
                  %1155 = sbr.rel (%p1152) target = $region82
                $region79: #{_attn_gated_call.1} parent=74 // loop_body
                  %v1159 = vld [vmem:[%s1157] sm:$0xff]
                  %1160 = vst [vmem:[%s1158] sm:$0xff] %v1159
                  %v1161 = vld [vmem:[%s1157 + $0x8] sm:$0xff]
                  %1162 = vst [vmem:[%s1158 + $0x8] sm:$0xff] %v1161
                  %v1163 = vld [vmem:[%s1157 + $0x10] sm:$0xff]
                  %1164 = vst [vmem:[%s1158 + $0x10] sm:$0xff] %v1163
                  %v1165 = vld [vmem:[%s1157 + $0x18] sm:$0xff]
                  %1166 = vst [vmem:[%s1158 + $0x18] sm:$0xff] %v1165
                  %v1167 = vld [vmem:[%s1157 + $0x20] sm:$0xff]
                  %1168 = vst [vmem:[%s1158 + $0x20] sm:$0xff] %v1167
                  %v1169 = vld [vmem:[%s1157 + $0x28] sm:$0xff]
                  %1170 = vst [vmem:[%s1158 + $0x28] sm:$0xff] %v1169
                  %v1171 = vld [vmem:[%s1157 + $0x30] sm:$0xff]
                  %1172 = vst [vmem:[%s1158 + $0x30] sm:$0xff] %v1171
                  %v1173 = vld [vmem:[%s1157 + $0x38] sm:$0xff]
                  %1174 = vst [vmem:[%s1158 + $0x38] sm:$0xff] %v1173
                  %v1175 = vld [vmem:[%s1157 + $0x40] sm:$0xff]
                  %1176 = vst [vmem:[%s1158 + $0x40] sm:$0xff] %v1175
                  %v1177 = vld [vmem:[%s1157 + $0x48] sm:$0xff]
                  %1178 = vst [vmem:[%s1158 + $0x48] sm:$0xff] %v1177
                  %v1179 = vld [vmem:[%s1157 + $0x50] sm:$0xff]
                  %1180 = vst [vmem:[%s1158 + $0x50] sm:$0xff] %v1179
                  %v1181 = vld [vmem:[%s1157 + $0x58] sm:$0xff]
                  %1182 = vst [vmem:[%s1158 + $0x58] sm:$0xff] %v1181
                  %v1183 = vld [vmem:[%s1157 + $0x60] sm:$0xff]
                  %1184 = vst [vmem:[%s1158 + $0x60] sm:$0xff] %v1183
                  %v1185 = vld [vmem:[%s1157 + $0x68] sm:$0xff]
                  %1186 = vst [vmem:[%s1158 + $0x68] sm:$0xff] %v1185
                  %v1187 = vld [vmem:[%s1157 + $0x70] sm:$0xff]
                  %1188 = vst [vmem:[%s1158 + $0x70] sm:$0xff] %v1187
                  %v1189 = vld [vmem:[%s1157 + $0x78] sm:$0xff]
                  %1190 = vst [vmem:[%s1158 + $0x78] sm:$0xff] %v1189
                  %v1191 = vld [vmem:[%s1157 + $0x80] sm:$0xff]
                  %1192 = vst [vmem:[%s1158 + $0x80] sm:$0xff] %v1191
                  %v1193 = vld [vmem:[%s1157 + $0x88] sm:$0xff]
                  %1194 = vst [vmem:[%s1158 + $0x88] sm:$0xff] %v1193
                  %v1195 = vld [vmem:[%s1157 + $0x90] sm:$0xff]
                  %1196 = vst [vmem:[%s1158 + $0x90] sm:$0xff] %v1195
                  %v1197 = vld [vmem:[%s1157 + $0x98] sm:$0xff]
                  %1198 = vst [vmem:[%s1158 + $0x98] sm:$0xff] %v1197
                  %v1199 = vld [vmem:[%s1157 + $0xa0] sm:$0xff]
                  %1200 = vst [vmem:[%s1158 + $0xa0] sm:$0xff] %v1199
                  %v1201 = vld [vmem:[%s1157 + $0xa8] sm:$0xff]
                  %1202 = vst [vmem:[%s1158 + $0xa8] sm:$0xff] %v1201
                  %v1203 = vld [vmem:[%s1157 + $0xb0] sm:$0xff]
                  %1204 = vst [vmem:[%s1158 + $0xb0] sm:$0xff] %v1203
                  %v1205 = vld [vmem:[%s1157 + $0xb8] sm:$0xff]
                  %1206 = vst [vmem:[%s1158 + $0xb8] sm:$0xff] %v1205
                  %v1207 = vld [vmem:[%s1157 + $0xc0] sm:$0xff]
                  %1208 = vst [vmem:[%s1158 + $0xc0] sm:$0xff] %v1207
                  %v1209 = vld [vmem:[%s1157 + $0xc8] sm:$0xff]
                  %1210 = vst [vmem:[%s1158 + $0xc8] sm:$0xff] %v1209
                  %v1211 = vld [vmem:[%s1157 + $0xd0] sm:$0xff]
                  %1212 = vst [vmem:[%s1158 + $0xd0] sm:$0xff] %v1211
                  %v1213 = vld [vmem:[%s1157 + $0xd8] sm:$0xff]
                  %1214 = vst [vmem:[%s1158 + $0xd8] sm:$0xff] %v1213
                  %v1215 = vld [vmem:[%s1157 + $0xe0] sm:$0xff]
                  %1216 = vst [vmem:[%s1158 + $0xe0] sm:$0xff] %v1215
                  %v1217 = vld [vmem:[%s1157 + $0xe8] sm:$0xff]
                  %1218 = vst [vmem:[%s1158 + $0xe8] sm:$0xff] %v1217
                  %v1219 = vld [vmem:[%s1157 + $0xf0] sm:$0xff]
                  %1220 = vst [vmem:[%s1158 + $0xf0] sm:$0xff] %v1219
                  %v1221 = vld [vmem:[%s1157 + $0xf8] sm:$0xff]
                  %1222 = vst [vmem:[%s1158 + $0xf8] sm:$0xff] %v1221
                  %v1223 = vld [vmem:[%s1157 + $0x100] sm:$0xff]
                  %1224 = vst [vmem:[%s1158 + $0x100] sm:$0xff] %v1223
                  %v1225 = vld [vmem:[%s1157 + $0x108] sm:$0xff]
                  %1226 = vst [vmem:[%s1158 + $0x108] sm:$0xff] %v1225
                  %v1227 = vld [vmem:[%s1157 + $0x110] sm:$0xff]
                  %1228 = vst [vmem:[%s1158 + $0x110] sm:$0xff] %v1227
                  %v1229 = vld [vmem:[%s1157 + $0x118] sm:$0xff]
                  %1230 = vst [vmem:[%s1158 + $0x118] sm:$0xff] %v1229
                  %v1231 = vld [vmem:[%s1157 + $0x120] sm:$0xff]
                  %1232 = vst [vmem:[%s1158 + $0x120] sm:$0xff] %v1231
                  %v1233 = vld [vmem:[%s1157 + $0x128] sm:$0xff]
                  %1234 = vst [vmem:[%s1158 + $0x128] sm:$0xff] %v1233
                  %v1235 = vld [vmem:[%s1157 + $0x130] sm:$0xff]
                  %1236 = vst [vmem:[%s1158 + $0x130] sm:$0xff] %v1235
                  %v1237 = vld [vmem:[%s1157 + $0x138] sm:$0xff]
                  %1238 = vst [vmem:[%s1158 + $0x138] sm:$0xff] %v1237
                  %v1239 = vld [vmem:[%s1157 + $0x140] sm:$0xff]
                  %1240 = vst [vmem:[%s1158 + $0x140] sm:$0xff] %v1239
                  %v1241 = vld [vmem:[%s1157 + $0x148] sm:$0xff]
                  %1242 = vst [vmem:[%s1158 + $0x148] sm:$0xff] %v1241
                  %v1243 = vld [vmem:[%s1157 + $0x150] sm:$0xff]
                  %1244 = vst [vmem:[%s1158 + $0x150] sm:$0xff] %v1243
                  %v1245 = vld [vmem:[%s1157 + $0x158] sm:$0xff]
                  %1246 = vst [vmem:[%s1158 + $0x158] sm:$0xff] %v1245
                  %v1247 = vld [vmem:[%s1157 + $0x160] sm:$0xff]
                  %1248 = vst [vmem:[%s1158 + $0x160] sm:$0xff] %v1247
                  %v1249 = vld [vmem:[%s1157 + $0x168] sm:$0xff]
                  %1250 = vst [vmem:[%s1158 + $0x168] sm:$0xff] %v1249
                  %v1251 = vld [vmem:[%s1157 + $0x170] sm:$0xff]
                  %1252 = vst [vmem:[%s1158 + $0x170] sm:$0xff] %v1251
                  %v1253 = vld [vmem:[%s1157 + $0x178] sm:$0xff]
                  %1254 = vst [vmem:[%s1158 + $0x178] sm:$0xff] %v1253
                  %v1255 = vld [vmem:[%s1157 + $0x180] sm:$0xff]
                  %1256 = vst [vmem:[%s1158 + $0x180] sm:$0xff] %v1255
                  %v1257 = vld [vmem:[%s1157 + $0x188] sm:$0xff]
                  %1258 = vst [vmem:[%s1158 + $0x188] sm:$0xff] %v1257
                  %v1259 = vld [vmem:[%s1157 + $0x190] sm:$0xff]
                  %1260 = vst [vmem:[%s1158 + $0x190] sm:$0xff] %v1259
                  %v1261 = vld [vmem:[%s1157 + $0x198] sm:$0xff]
                  %1262 = vst [vmem:[%s1158 + $0x198] sm:$0xff] %v1261
                  %v1263 = vld [vmem:[%s1157 + $0x1a0] sm:$0xff]
                  %1264 = vst [vmem:[%s1158 + $0x1a0] sm:$0xff] %v1263
                  %v1265 = vld [vmem:[%s1157 + $0x1a8] sm:$0xff]
                  %1266 = vst [vmem:[%s1158 + $0x1a8] sm:$0xff] %v1265
                  %v1267 = vld [vmem:[%s1157 + $0x1b0] sm:$0xff]
                  %1268 = vst [vmem:[%s1158 + $0x1b0] sm:$0xff] %v1267
                  %v1269 = vld [vmem:[%s1157 + $0x1b8] sm:$0xff]
                  %1270 = vst [vmem:[%s1158 + $0x1b8] sm:$0xff] %v1269
                  %v1271 = vld [vmem:[%s1157 + $0x1c0] sm:$0xff]
                  %1272 = vst [vmem:[%s1158 + $0x1c0] sm:$0xff] %v1271
                  %v1273 = vld [vmem:[%s1157 + $0x1c8] sm:$0xff]
                  %1274 = vst [vmem:[%s1158 + $0x1c8] sm:$0xff] %v1273
                  %v1275 = vld [vmem:[%s1157 + $0x1d0] sm:$0xff]
                  %1276 = vst [vmem:[%s1158 + $0x1d0] sm:$0xff] %v1275
                  %v1277 = vld [vmem:[%s1157 + $0x1d8] sm:$0xff]
                  %1278 = vst [vmem:[%s1158 + $0x1d8] sm:$0xff] %v1277
                  %v1279 = vld [vmem:[%s1157 + $0x1e0] sm:$0xff]
                  %1280 = vst [vmem:[%s1158 + $0x1e0] sm:$0xff] %v1279
                  %v1281 = vld [vmem:[%s1157 + $0x1e8] sm:$0xff]
                  %1282 = vst [vmem:[%s1158 + $0x1e8] sm:$0xff] %v1281
                  %v1283 = vld [vmem:[%s1157 + $0x1f0] sm:$0xff]
                  %1284 = vst [vmem:[%s1158 + $0x1f0] sm:$0xff] %v1283
                  %v1285 = vld [vmem:[%s1157 + $0x1f8] sm:$0xff]
                  %1286 = vst [vmem:[%s1158 + $0x1f8] sm:$0xff] %v1285
                  %s1287 = sadd.s32 1, %s1156
                  %p1288 = scmp.ge.s32.totalorder %s1287, %s1147
                  %s1289 = scalar_select %p1288, 0, %s1287
                  %s1290 = smul.u32 %s1289, 512
                  %s1291 = smul.u32 %s1289, 512
                  %s1292 = scalar_lea.vmem %s1107, %s1290 [#allocation6]
                  %s1293 = scalar_lea.vmem %s1118, %s1291
                $region80: #{_attn_gated_call.1} parent=74 // loop_footer
                  %s1153 = sadd.s32 %s1151, 1
                $region81: #{_attn_gated_call.1} parent=74 // loop_footer_branch
                  %1150 = sbr.rel target = $region77
                $region82: #{_attn_gated_call.1} parent=74 // loop_exit
                  _
                %s1294 = sshrl.u32 %s1146, 6
                %s1295 = sand.u32 %s1146, 63
                %s1296 = smul.u32 %s1294, 64
                %s1297 = smul.u32 128, %s1296
                %s1298 = sshra.s32 %s1297, 4
                %s1299 = scalar_lea.vmem %s1107, %s1298 [#allocation6]
                %s1300 = smul.u32 128, %s1296
                %s1301 = sshra.s32 %s1300, 4
                %s1302 = scalar_lea.vmem %s1118, %s1301
                // While loop
                $region83: #{_attn_gated_call.1} parent=74 // loop_pre_header
                  _
                $region84: #{_attn_gated_call.1} parent=74 // loop_header
                  %s1306 = sphi 0, %s1308
                  %p1307 = scmp.ge.s32.totalorder %s1306, %s1295
                  %s1311 = sphi 0, %s1318
                  %s1312 = sphi %s1299, %s1321
                  %s1313 = sphi %s1302, %s1322
                $region85: #{_attn_gated_call.1} parent=74 // loop_header_branch
                  %1310 = sbr.rel (%p1307) target = $region89
                $region86: #{_attn_gated_call.1} parent=74 // loop_body
                  %v1314 = vld [vmem:[%s1312] sm:$0xff]
                  %1315 = vst [vmem:[%s1313] sm:$0xff] %v1314
                  %s1316 = sadd.s32 1, %s1311
                  %p1317 = scmp.ge.s32.totalorder %s1316, %s1295
                  %s1318 = scalar_select %p1317, 0, %s1316
                  %s1319 = smul.u32 %s1318, 8
                  %s1320 = smul.u32 %s1318, 8
                  %s1321 = scalar_lea.vmem %s1299, %s1319 [#allocation6]
                  %s1322 = scalar_lea.vmem %s1302, %s1320
                $region87: #{_attn_gated_call.1} parent=74 // loop_footer
                  %s1308 = sadd.s32 %s1306, 1
                $region88: #{_attn_gated_call.1} parent=74 // loop_footer_branch
                  %1305 = sbr.rel target = $region84
                $region89: #{_attn_gated_call.1} parent=74 // loop_exit
                  _
              $region75: #{_attn_gated_call.1} parent=59 // pred_fallthru
                _
              %p1323 = pneg %p1142
              // Predicated region
              $region90: #{_attn_gated_call.1} parent=59 // pred_check
                _
              $region91: #{_attn_gated_call.1} parent=59 // pred_check_branch
                %1325 = sbr.rel (%p1142) target = $region93
              $region92: #{_attn_gated_call.1} parent=59 // pred_region
                %s1326 = sand.u32 %s1119, 7
                %s1327 = ssub.s32 %s1119, %s1326
                %s1328 = scalar_lea.vmem %s1107, %s1327 [#allocation6]
                %s1329 = ssub.s32 %s1119, %s1326
                %s1330 = scalar_lea.vmem %s1118, %s1329
                %s1331 = sshrl.u32 %s1119, 3
                %s1332 = sshrl.u32 %s1331, 6
                // While loop
                $region94: #{_attn_gated_call.1} parent=92 // loop_pre_header
                  _
                $region95: #{_attn_gated_call.1} parent=92 // loop_header
                  %s1336 = sphi 0, %s1338
                  %p1337 = scmp.ge.s32.totalorder %s1336, %s1332
                  %s1341 = sphi 0, %s1474
                  %s1342 = sphi %s1107, %s1477
                  %s1343 = sphi %s1118, %s1478
                $region96: #{_attn_gated_call.1} parent=92 // loop_header_branch
                  %1340 = sbr.rel (%p1337) target = $region100
                $region97: #{_attn_gated_call.1} parent=92 // loop_body
                  %v1344 = vld [vmem:[%s1342] sm:$0xff]
                  %1345 = vst [vmem:[%s1343] sm:$0xff] %v1344
                  %v1346 = vld [vmem:[%s1342 + $0x8] sm:$0xff]
                  %1347 = vst [vmem:[%s1343 + $0x8] sm:$0xff] %v1346
                  %v1348 = vld [vmem:[%s1342 + $0x10] sm:$0xff]
                  %1349 = vst [vmem:[%s1343 + $0x10] sm:$0xff] %v1348
                  %v1350 = vld [vmem:[%s1342 + $0x18] sm:$0xff]
                  %1351 = vst [vmem:[%s1343 + $0x18] sm:$0xff] %v1350
                  %v1352 = vld [vmem:[%s1342 + $0x20] sm:$0xff]
                  %1353 = vst [vmem:[%s1343 + $0x20] sm:$0xff] %v1352
                  %v1354 = vld [vmem:[%s1342 + $0x28] sm:$0xff]
                  %1355 = vst [vmem:[%s1343 + $0x28] sm:$0xff] %v1354
                  %v1356 = vld [vmem:[%s1342 + $0x30] sm:$0xff]
                  %1357 = vst [vmem:[%s1343 + $0x30] sm:$0xff] %v1356
                  %v1358 = vld [vmem:[%s1342 + $0x38] sm:$0xff]
                  %1359 = vst [vmem:[%s1343 + $0x38] sm:$0xff] %v1358
                  %v1360 = vld [vmem:[%s1342 + $0x40] sm:$0xff]
                  %1361 = vst [vmem:[%s1343 + $0x40] sm:$0xff] %v1360
                  %v1362 = vld [vmem:[%s1342 + $0x48] sm:$0xff]
                  %1363 = vst [vmem:[%s1343 + $0x48] sm:$0xff] %v1362
                  %v1364 = vld [vmem:[%s1342 + $0x50] sm:$0xff]
                  %1365 = vst [vmem:[%s1343 + $0x50] sm:$0xff] %v1364
                  %v1366 = vld [vmem:[%s1342 + $0x58] sm:$0xff]
                  %1367 = vst [vmem:[%s1343 + $0x58] sm:$0xff] %v1366
                  %v1368 = vld [vmem:[%s1342 + $0x60] sm:$0xff]
                  %1369 = vst [vmem:[%s1343 + $0x60] sm:$0xff] %v1368
                  %v1370 = vld [vmem:[%s1342 + $0x68] sm:$0xff]
                  %1371 = vst [vmem:[%s1343 + $0x68] sm:$0xff] %v1370
                  %v1372 = vld [vmem:[%s1342 + $0x70] sm:$0xff]
                  %1373 = vst [vmem:[%s1343 + $0x70] sm:$0xff] %v1372
                  %v1374 = vld [vmem:[%s1342 + $0x78] sm:$0xff]
                  %1375 = vst [vmem:[%s1343 + $0x78] sm:$0xff] %v1374
                  %v1376 = vld [vmem:[%s1342 + $0x80] sm:$0xff]
                  %1377 = vst [vmem:[%s1343 + $0x80] sm:$0xff] %v1376
                  %v1378 = vld [vmem:[%s1342 + $0x88] sm:$0xff]
                  %1379 = vst [vmem:[%s1343 + $0x88] sm:$0xff] %v1378
                  %v1380 = vld [vmem:[%s1342 + $0x90] sm:$0xff]
                  %1381 = vst [vmem:[%s1343 + $0x90] sm:$0xff] %v1380
                  %v1382 = vld [vmem:[%s1342 + $0x98] sm:$0xff]
                  %1383 = vst [vmem:[%s1343 + $0x98] sm:$0xff] %v1382
                  %v1384 = vld [vmem:[%s1342 + $0xa0] sm:$0xff]
                  %1385 = vst [vmem:[%s1343 + $0xa0] sm:$0xff] %v1384
                  %v1386 = vld [vmem:[%s1342 + $0xa8] sm:$0xff]
                  %1387 = vst [vmem:[%s1343 + $0xa8] sm:$0xff] %v1386
                  %v1388 = vld [vmem:[%s1342 + $0xb0] sm:$0xff]
                  %1389 = vst [vmem:[%s1343 + $0xb0] sm:$0xff] %v1388
                  %v1390 = vld [vmem:[%s1342 + $0xb8] sm:$0xff]
                  %1391 = vst [vmem:[%s1343 + $0xb8] sm:$0xff] %v1390
                  %v1392 = vld [vmem:[%s1342 + $0xc0] sm:$0xff]
                  %1393 = vst [vmem:[%s1343 + $0xc0] sm:$0xff] %v1392
                  %v1394 = vld [vmem:[%s1342 + $0xc8] sm:$0xff]
                  %1395 = vst [vmem:[%s1343 + $0xc8] sm:$0xff] %v1394
                  %v1396 = vld [vmem:[%s1342 + $0xd0] sm:$0xff]
                  %1397 = vst [vmem:[%s1343 + $0xd0] sm:$0xff] %v1396
                  %v1398 = vld [vmem:[%s1342 + $0xd8] sm:$0xff]
                  %1399 = vst [vmem:[%s1343 + $0xd8] sm:$0xff] %v1398
                  %v1400 = vld [vmem:[%s1342 + $0xe0] sm:$0xff]
                  %1401 = vst [vmem:[%s1343 + $0xe0] sm:$0xff] %v1400
                  %v1402 = vld [vmem:[%s1342 + $0xe8] sm:$0xff]
                  %1403 = vst [vmem:[%s1343 + $0xe8] sm:$0xff] %v1402
                  %v1404 = vld [vmem:[%s1342 + $0xf0] sm:$0xff]
                  %1405 = vst [vmem:[%s1343 + $0xf0] sm:$0xff] %v1404
                  %v1406 = vld [vmem:[%s1342 + $0xf8] sm:$0xff]
                  %1407 = vst [vmem:[%s1343 + $0xf8] sm:$0xff] %v1406
                  %v1408 = vld [vmem:[%s1342 + $0x100] sm:$0xff]
                  %1409 = vst [vmem:[%s1343 + $0x100] sm:$0xff] %v1408
                  %v1410 = vld [vmem:[%s1342 + $0x108] sm:$0xff]
                  %1411 = vst [vmem:[%s1343 + $0x108] sm:$0xff] %v1410
                  %v1412 = vld [vmem:[%s1342 + $0x110] sm:$0xff]
                  %1413 = vst [vmem:[%s1343 + $0x110] sm:$0xff] %v1412
                  %v1414 = vld [vmem:[%s1342 + $0x118] sm:$0xff]
                  %1415 = vst [vmem:[%s1343 + $0x118] sm:$0xff] %v1414
                  %v1416 = vld [vmem:[%s1342 + $0x120] sm:$0xff]
                  %1417 = vst [vmem:[%s1343 + $0x120] sm:$0xff] %v1416
                  %v1418 = vld [vmem:[%s1342 + $0x128] sm:$0xff]
                  %1419 = vst [vmem:[%s1343 + $0x128] sm:$0xff] %v1418
                  %v1420 = vld [vmem:[%s1342 + $0x130] sm:$0xff]
                  %1421 = vst [vmem:[%s1343 + $0x130] sm:$0xff] %v1420
                  %v1422 = vld [vmem:[%s1342 + $0x138] sm:$0xff]
                  %1423 = vst [vmem:[%s1343 + $0x138] sm:$0xff] %v1422
                  %v1424 = vld [vmem:[%s1342 + $0x140] sm:$0xff]
                  %1425 = vst [vmem:[%s1343 + $0x140] sm:$0xff] %v1424
                  %v1426 = vld [vmem:[%s1342 + $0x148] sm:$0xff]
                  %1427 = vst [vmem:[%s1343 + $0x148] sm:$0xff] %v1426
                  %v1428 = vld [vmem:[%s1342 + $0x150] sm:$0xff]
                  %1429 = vst [vmem:[%s1343 + $0x150] sm:$0xff] %v1428
                  %v1430 = vld [vmem:[%s1342 + $0x158] sm:$0xff]
                  %1431 = vst [vmem:[%s1343 + $0x158] sm:$0xff] %v1430
                  %v1432 = vld [vmem:[%s1342 + $0x160] sm:$0xff]
                  %1433 = vst [vmem:[%s1343 + $0x160] sm:$0xff] %v1432
                  %v1434 = vld [vmem:[%s1342 + $0x168] sm:$0xff]
                  %1435 = vst [vmem:[%s1343 + $0x168] sm:$0xff] %v1434
                  %v1436 = vld [vmem:[%s1342 + $0x170] sm:$0xff]
                  %1437 = vst [vmem:[%s1343 + $0x170] sm:$0xff] %v1436
                  %v1438 = vld [vmem:[%s1342 + $0x178] sm:$0xff]
                  %1439 = vst [vmem:[%s1343 + $0x178] sm:$0xff] %v1438
                  %v1440 = vld [vmem:[%s1342 + $0x180] sm:$0xff]
                  %1441 = vst [vmem:[%s1343 + $0x180] sm:$0xff] %v1440
                  %v1442 = vld [vmem:[%s1342 + $0x188] sm:$0xff]
                  %1443 = vst [vmem:[%s1343 + $0x188] sm:$0xff] %v1442
                  %v1444 = vld [vmem:[%s1342 + $0x190] sm:$0xff]
                  %1445 = vst [vmem:[%s1343 + $0x190] sm:$0xff] %v1444
                  %v1446 = vld [vmem:[%s1342 + $0x198] sm:$0xff]
                  %1447 = vst [vmem:[%s1343 + $0x198] sm:$0xff] %v1446
                  %v1448 = vld [vmem:[%s1342 + $0x1a0] sm:$0xff]
                  %1449 = vst [vmem:[%s1343 + $0x1a0] sm:$0xff] %v1448
                  %v1450 = vld [vmem:[%s1342 + $0x1a8] sm:$0xff]
                  %1451 = vst [vmem:[%s1343 + $0x1a8] sm:$0xff] %v1450
                  %v1452 = vld [vmem:[%s1342 + $0x1b0] sm:$0xff]
                  %1453 = vst [vmem:[%s1343 + $0x1b0] sm:$0xff] %v1452
                  %v1454 = vld [vmem:[%s1342 + $0x1b8] sm:$0xff]
                  %1455 = vst [vmem:[%s1343 + $0x1b8] sm:$0xff] %v1454
                  %v1456 = vld [vmem:[%s1342 + $0x1c0] sm:$0xff]
                  %1457 = vst [vmem:[%s1343 + $0x1c0] sm:$0xff] %v1456
                  %v1458 = vld [vmem:[%s1342 + $0x1c8] sm:$0xff]
                  %1459 = vst [vmem:[%s1343 + $0x1c8] sm:$0xff] %v1458
                  %v1460 = vld [vmem:[%s1342 + $0x1d0] sm:$0xff]
                  %1461 = vst [vmem:[%s1343 + $0x1d0] sm:$0xff] %v1460
                  %v1462 = vld [vmem:[%s1342 + $0x1d8] sm:$0xff]
                  %1463 = vst [vmem:[%s1343 + $0x1d8] sm:$0xff] %v1462
                  %v1464 = vld [vmem:[%s1342 + $0x1e0] sm:$0xff]
                  %1465 = vst [vmem:[%s1343 + $0x1e0] sm:$0xff] %v1464
                  %v1466 = vld [vmem:[%s1342 + $0x1e8] sm:$0xff]
                  %1467 = vst [vmem:[%s1343 + $0x1e8] sm:$0xff] %v1466
                  %v1468 = vld [vmem:[%s1342 + $0x1f0] sm:$0xff]
                  %1469 = vst [vmem:[%s1343 + $0x1f0] sm:$0xff] %v1468
                  %v1470 = vld [vmem:[%s1342 + $0x1f8] sm:$0xff]
                  %1471 = vst [vmem:[%s1343 + $0x1f8] sm:$0xff] %v1470
                  %s1472 = sadd.s32 1, %s1341
                  %p1473 = scmp.ge.s32.totalorder %s1472, %s1332
                  %s1474 = scalar_select %p1473, 0, %s1472
                  %s1475 = smul.u32 %s1474, 512
                  %s1476 = smul.u32 %s1474, 512
                  %s1477 = scalar_lea.vmem %s1107, %s1475 [#allocation6]
                  %s1478 = scalar_lea.vmem %s1118, %s1476
                $region98: #{_attn_gated_call.1} parent=92 // loop_footer
                  %s1338 = sadd.s32 %s1336, 1
                $region99: #{_attn_gated_call.1} parent=92 // loop_footer_branch
                  %1335 = sbr.rel target = $region95
                $region100: #{_attn_gated_call.1} parent=92 // loop_exit
                  _
                %s1479 = sshrl.u32 %s1331, 6
                %s1480 = sand.u32 %s1331, 63
                %s1481 = smul.u32 %s1479, 64
                %s1482 = smul.u32 128, %s1481
                %s1483 = sshra.s32 %s1482, 4
                %s1484 = scalar_lea.vmem %s1107, %s1483 [#allocation6]
                %s1485 = smul.u32 128, %s1481
                %s1486 = sshra.s32 %s1485, 4
                %s1487 = scalar_lea.vmem %s1118, %s1486
                // While loop
                $region101: #{_attn_gated_call.1} parent=92 // loop_pre_header
                  _
                $region102: #{_attn_gated_call.1} parent=92 // loop_header
                  %s1491 = sphi 0, %s1493
                  %p1492 = scmp.ge.s32.totalorder %s1491, %s1480
                  %s1496 = sphi 0, %s1503
                  %s1497 = sphi %s1484, %s1506
                  %s1498 = sphi %s1487, %s1507
                $region103: #{_attn_gated_call.1} parent=92 // loop_header_branch
                  %1495 = sbr.rel (%p1492) target = $region107
                $region104: #{_attn_gated_call.1} parent=92 // loop_body
                  %v1499 = vld [vmem:[%s1497] sm:$0xff]
                  %1500 = vst [vmem:[%s1498] sm:$0xff] %v1499
                  %s1501 = sadd.s32 1, %s1496
                  %p1502 = scmp.ge.s32.totalorder %s1501, %s1480
                  %s1503 = scalar_select %p1502, 0, %s1501
                  %s1504 = smul.u32 %s1503, 8
                  %s1505 = smul.u32 %s1503, 8
                  %s1506 = scalar_lea.vmem %s1484, %s1504 [#allocation6]
                  %s1507 = scalar_lea.vmem %s1487, %s1505
                $region105: #{_attn_gated_call.1} parent=92 // loop_footer
                  %s1493 = sadd.s32 %s1491, 1
                $region106: #{_attn_gated_call.1} parent=92 // loop_footer_branch
                  %1490 = sbr.rel target = $region102
                $region107: #{_attn_gated_call.1} parent=92 // loop_exit
                  _
                %s1508 = sshllo.u32 0, %s1326
                loop: start=0, step=1, limit=1
                $region108: #{_attn_gated_call.1} parent=92 // loop_pre_header
                  _
                $region109: #{_attn_gated_call.1} parent=92 // loop_header
                  %s1510 = sphi 0, %s1514
                  %p1511 = scmp.ge.s32.totalorder %s1510, 1
                  %s1515 = sphi %s1328, %s1328
                  %s1516 = sphi %s1330, %s1330
                $region110: #{_attn_gated_call.1} parent=92 // loop_header_branch
                  %1513 = sbr.rel (%p1511) target = $region114
                $region111: #{_attn_gated_call.1} parent=92 // loop_body
                  %v1517 = vld [vmem:[%s1515] sm:%s1508]
                  %1518 = vst [vmem:[%s1516] sm:%s1508] %v1517
                $region112: #{_attn_gated_call.1} parent=92 // loop_footer
                  %s1514 = sadd.s32 1, %s1510
                $region113: #{_attn_gated_call.1} parent=92 // loop_footer_branch
                  %1509 = sbr.rel target = $region109
                $region114: #{_attn_gated_call.1} parent=92 // loop_exit
                  _
              $region93: #{_attn_gated_call.1} parent=59 // pred_fallthru
                _
            $region60: #{_attn_gated_call.1} parent=55 // pred_fallthru
              _
            // Predicated region
            $region61: #{_attn_gated_call.1} parent=55 // pred_check
              %p1127 = pneg %p1123
            $region62: #{_attn_gated_call.1} parent=55 // pred_check_branch
              %1129 = sbr.rel (%p1127) target = $region64
            $region63: #{_attn_gated_call.1} parent=55 // pred_region
              %s1130 = sshllo.u32 0, %s1119
              loop: start=0, step=1, limit=1
              $region65: #{_attn_gated_call.1} parent=63 // loop_pre_header
                _
              $region66: #{_attn_gated_call.1} parent=63 // loop_header
                %s1132 = sphi 0, %s1136
                %p1133 = scmp.ge.s32.totalorder %s1132, 1
                %s1137 = sphi %s1107, %s1107
                %s1138 = sphi %s1118, %s1118
              $region67: #{_attn_gated_call.1} parent=63 // loop_header_branch
                %1135 = sbr.rel (%p1133) target = $region71
              $region68: #{_attn_gated_call.1} parent=63 // loop_body
                %v1139 = vld [vmem:[%s1137] sm:%s1130]
                %1140 = vst [vmem:[%s1138] sm:%s1130] %v1139
              $region69: #{_attn_gated_call.1} parent=63 // loop_footer
                %s1136 = sadd.s32 1, %s1132
              $region70: #{_attn_gated_call.1} parent=63 // loop_footer_branch
                %1131 = sbr.rel target = $region66
              $region71: #{_attn_gated_call.1} parent=63 // loop_exit
                _
            $region64: #{_attn_gated_call.1} parent=55 // pred_fallthru
              _
          $region56: #{_attn_gated_call.1} parent=51 // pred_fallthru
            _
          %1519 = vnop
        $region52: #{_attn_gated_call.1} parent=39 // pred_fallthru
          _
      $region40: #{_attn_gated_call.1} parent=5 // pred_fallthru
        _
      %p1520 = scmp.le.s32.totalorder 2, %s15
      // Predicated region
      $region115: #{_attn_gated_call.1} parent=5 // pred_check
        %p1521 = pneg %p1520
      $region116: #{_attn_gated_call.1} parent=5 // pred_check_branch
        %1523 = sbr.rel (%p1521) target = $region118
      $region117: #{_attn_gated_call.1} parent=5 // pred_region
        %s1524 = ssub.s32 %s15, 2
        // Predicated region
        $region119: #{_attn_gated_call.1} parent=117 // pred_check
          %p1525 = pneg %p154
        $region120: #{_attn_gated_call.1} parent=117 // pred_check_branch
          %1527 = sbr.rel (%p1525) target = $region122
        $region121: #{_attn_gated_call.1} parent=117 // pred_region
          %s1528 = sand.u32 %s139, 1
          %s1529 = sand.u32 %s139, 1
          %s1530 = smul.addr %s1529, 16
          %s1531 = scalar_lea.vmem [#allocation6], %s1530
        $region122: #{_attn_gated_call.1} parent=117 // pred_fallthru
          _
      $region118: #{_attn_gated_call.1} parent=5 // pred_fallthru
        _
    $region6: #{_attn_gated_call.1} parent=1 // loop_footer
      %s19 = sadd.s32 1, %s15
    $region7: #{_attn_gated_call.1} parent=1 // loop_footer_branch
      %14 = sbr.rel target = $region3
    $region8: #{_attn_gated_call.1} parent=1 // loop_exit
      _
    %1532 = vsyncpa [#allocation3], 1
    %s1533 = scalar_lea.sflag [#allocation3], 1
    %1534 = vsyncpa %s1533, 1
    %1535 = vsyncpa [#allocation5], 1

</llo_original>
